<compile_context>
chip_gen: v6e
topology: v6e:2x2x1
jax: 0.10.0
libtpu: 0.0.40
codegen_flags: <defaults>
</compile_context>

<pallas_src>
import jax
import jax.numpy as jnp
from jax import lax
from jax.experimental import pallas as pl
from jax.experimental.pallas import tpu as pltpu


def _round_up(x, m):
    return (x + m - 1) // m * m


# Conv batch-tile cap: ~(4*B*P*K + B*P*128)*2 bytes per step stays << VMEM on
# every generation (v7x included) at B=32, and keeps >=2 grid steps per call
# for megacore once the batch is non-trivial.
_CONV_TILE_B = 32


# ----------------------------- Pallas kernels ------------------------------

def _conv_relu_pool_kernel(p_ref, w_ref, b_ref, o_ref):
    """Conv as 4 matmuls (one per 2x2 pool offset) + max + bias + ReLU.

    p_ref : (4, R, K)  bf16   R = B*P rows ordered (n, ph, pw); group g=(dy,dx)
    w_ref : (K, Cp)    bf16   Cp multiple of 128 (lane-dense)
    b_ref : (1, Cp)    f32
    o_ref : (R, Cp)    bf16   pooled NHWC rows
    """
    w = w_ref[...]
    a0 = jnp.dot(p_ref[0], w, preferred_element_type=jnp.float32)
    a1 = jnp.dot(p_ref[1], w, preferred_element_type=jnp.float32)
    a2 = jnp.dot(p_ref[2], w, preferred_element_type=jnp.float32)
    a3 = jnp.dot(p_ref[3], w, preferred_element_type=jnp.float32)
    m = jnp.maximum(jnp.maximum(a0, a1), jnp.maximum(a2, a3))
    # bias is per-channel and ReLU is monotonic, so pool-then-(bias,ReLU) is
    # exactly ReLU(conv+bias) followed by max-pool.
    o_ref[...] = jnp.maximum(m + b_ref[...], 0.0).astype(o_ref.dtype)


def _fc_head_kernel(x_ref, w1_ref, b1_ref, w2_ref, b2_ref, o_ref):
    """fc1 (+ReLU) -> fc2 -> log_softmax fused.

    Padded fc2 lanes carry a -1e30 f32 bias, so exp() kills them in the
    softmax; the wrapper slices the 10 real columns afterwards.
    """
    h = jnp.dot(x_ref[...], w1_ref[...], preferred_element_type=jnp.float32)
    h = jnp.maximum(h + b1_ref[...], 0.0)                        # (TM, 512) f32
    logits = jnp.dot(h.astype(w2_ref.dtype), w2_ref[...],
                     preferred_element_type=jnp.float32)
    logits = logits + b2_ref[...]                                # (TM, 128) f32
    m = jnp.max(logits, axis=-1, keepdims=True)
    s = logits - m
    lse = jnp.log(jnp.sum(jnp.exp(s), axis=-1, keepdims=True))
    o_ref[...] = s - lse


# ----------------------------- kernel wrappers ------------------------------

def conv_relu_pool(patches, w_mat, b_row, *, n_images, pool_rows_per_img, tile_b):
    """patches: (4, N*P, K) bf16 -> pooled conv output (N, P, Cp) bf16."""
    _, _, k = patches.shape
    cp = w_mat.shape[1]
    p_rows = pool_rows_per_img
    n_pad = _round_up(n_images, tile_b)
    if n_pad != n_images:
        patches = jnp.pad(patches, ((0, 0), (0, (n_pad - n_images) * p_rows), (0, 0)))
    r = tile_b * p_rows
    out = pl.pallas_call(
        _conv_relu_pool_kernel,
        out_shape=jax.ShapeDtypeStruct((n_pad * p_rows, cp), jnp.bfloat16),
        grid=(n_pad // tile_b,),
        in_specs=[
            pl.BlockSpec((4, r, k), lambda i: (0, i, 0)),
            pl.BlockSpec((k, cp), lambda i: (0, 0)),      # weight stays resident
            pl.BlockSpec((1, cp), lambda i: (0, 0)),      # bias stays resident
        ],
        out_specs=pl.BlockSpec((r, cp), lambda i: (i, 0)),
        compiler_params=pltpu.CompilerParams(dimension_semantics=("parallel",)),
    )(patches, w_mat, b_row)
    return out.reshape(n_pad, p_rows, cp)[:n_images]


def fc_head(x2d, w1, b1, w2, b2, *, max_tile_m=256):
    """x2d: (N, 2048) bf16 -> log_softmax(fc2(relu(fc1(x)))) : (N, 10) f32."""
    n, kf = x2d.shape
    tm = min(max_tile_m, _round_up(n, 16))     # bf16 sublane packing -> multiples of 16
    m_pad = _round_up(n, tm)
    x_p = x2d if m_pad == n else jnp.pad(x2d, ((0, m_pad - n), (0, 0)))
    n1 = w1.shape[1]                           # 512
    n2 = w2.shape[1]                           # 128
    out = pl.pallas_call(
        _fc_head_kernel,
        out_shape=jax.ShapeDtypeStruct((m_pad, n2), jnp.float32),
        grid=(m_pad // tm,),
        in_specs=[
            pl.BlockSpec((tm, kf), lambda i: (i, 0)),
            pl.BlockSpec((kf, n1), lambda i: (0, 0)),
            pl.BlockSpec((1, n1), lambda i: (0, 0)),
            pl.BlockSpec((n1, n2), lambda i: (0, 0)),
            pl.BlockSpec((1, n2), lambda i: (0, 0)),
        ],
        out_specs=pl.BlockSpec((tm, n2), lambda i: (i, 0)),
        compiler_params=pltpu.CompilerParams(dimension_semantics=("parallel",)),
    )(x_p, w1, b1, w2, b2)
    return out[:n, :10]


# ----------------------------- plain-JAX glue ------------------------------

def _im2col_pool_order(x, kh, kw, k_pad):
    """x: (N, H, W, C) NHWC -> bf16 patches (4, N*P, k_pad), pool-grouped.

    Cast to bf16 FIRST so every glue intermediate is half-size.  Rows are
    ordered (dy, dx, n, ph, pw) with conv output position
    (oh, ow) = (2*ph+dy, 2*pw+dx), so the 2x2 max-pool inside the kernel is a
    max over the 4 leading groups.  Features are ordered (ki, kj, c), matching
    the (KH, KW, Cin, Cout)-reshaped weight matrix; the feature axis is padded
    to k_pad here (zero rows in the weight), so no extra HBM pad round trip.
    """
    n, h, w, c = x.shape
    x = x.astype(jnp.bfloat16)
    oh, ow = h - kh + 1, w - kw + 1
    ohp, owp = oh // 2, ow // 2
    k = kh * kw * c
    cols = [x[:, ki:ki + oh, kj:kj + ow, :] for ki in range(kh) for kj in range(kw)]
    p = jnp.stack(cols, axis=3).reshape(n, oh, ow, k)
    if k_pad > k:
        p = jnp.pad(p, ((0, 0), (0, 0), (0, 0), (0, k_pad - k)))
    p = p.reshape(n, ohp, 2, owp, 2, k_pad)                 # (n, ph, dy, pw, dx, K)
    p = p.transpose(2, 4, 0, 1, 3, 5).reshape(4, n * ohp * owp, k_pad)
    return p, ohp, owp


# ----------------------------- model -----------------------------

def init_raw_params(key):
    """PyTorch-layout f32 parameters (default torch uniform init)."""
    ks = jax.random.split(key, 8)

    def uni(k, shape, fan_in):
        bound = 1.0 / jnp.sqrt(jnp.float32(fan_in))
        return jax.random.uniform(k, shape, jnp.float32, -bound, bound)

    return {
        "conv1_w": uni(ks[0], (20, 1, 5, 5), 1 * 5 * 5),
        "conv1_b": uni(ks[1], (20,), 1 * 5 * 5),
        "conv2_w": uni(ks[2], (50, 20, 5, 5), 20 * 5 * 5),
        "conv2_b": uni(ks[3], (50,), 20 * 5 * 5),
        "fc1_w":   uni(ks[4], (500, 4 * 4 * 50), 4 * 4 * 50),
        "fc1_b":   uni(ks[5], (500,), 4 * 4 * 50),
        "fc2_w":   uni(ks[6], (10, 500), 500),
        "fc2_b":   uni(ks[7], (10,), 500),
    }


def preprocess_params(raw):
    """One-time layout work: transpose to matmul layout, permute fc1 rows to the
    PADDED NHWC flatten order (K=2048), pad every K/N to aligned sizes, cast
    MXU operands to bf16 (biases / accumulation stay f32)."""
    cp = 128
    # conv1: (20,1,5,5) -> rows (ki,kj,cin)=25 x cout=20; pad K 25->32, N 20->128
    w1 = raw["conv1_w"].transpose(2, 3, 1, 0).reshape(25, 20)
    w1 = jnp.pad(w1, ((0, 32 - 25), (0, cp - 20))).astype(jnp.bfloat16)
    b1 = jnp.pad(raw["conv1_b"], (0, cp - 20)).reshape(1, cp).astype(jnp.float32)
    # conv2: (50,20,5,5) -> (500,50); pad K 500->512, N 50->128
    w2 = raw["conv2_w"].transpose(2, 3, 1, 0).reshape(500, 50)
    w2 = jnp.pad(w2, ((0, 512 - 500), (0, cp - 50))).astype(jnp.bfloat16)
    b2 = jnp.pad(raw["conv2_b"], (0, cp - 50)).reshape(1, cp).astype(jnp.float32)
    # fc1: torch flatten order is (c,h,w); conv2 kernel output flattens as
    # (h,w,c_pad=128).  Permute + zero-pad rows once -> K = 4*4*128 = 2048, so
    # the padded conv2 output feeds straight in with no XLA slice.
    f1 = raw["fc1_w"].reshape(500, 50, 4, 4).transpose(2, 3, 1, 0)      # (4,4,50,500)
    f1 = jnp.pad(f1, ((0, 0), (0, 0), (0, cp - 50), (0, 512 - 500)))    # (4,4,128,512)
    f1 = f1.reshape(4 * 4 * cp, 512).astype(jnp.bfloat16)
    fb1 = jnp.pad(raw["fc1_b"], (0, 512 - 500)).reshape(1, 512).astype(jnp.float32)
    # fc2: (10,500) -> (500,10); pad K 500->512, N 10->128.  Padded output lanes
    # get a -1e30 bias (kept f32!) so the fused log_softmax ignores them.
    f2 = jnp.pad(raw["fc2_w"].T, ((0, 512 - 500), (0, cp - 10))).astype(jnp.bfloat16)
    fb2 = jnp.concatenate(
        [raw["fc2_b"], jnp.full((cp - 10,), -1e30, jnp.float32)]).reshape(1, cp)
    return {"conv1_w": w1, "conv1_b": b1, "conv2_w": w2, "conv2_b": b2,
            "fc1_w": f1, "fc1_b": fb1, "fc2_w": f2, "fc2_b": fb2}


def net_forward(params, x_nchw):
    # x_nchw: (N, 1, 28, 28) f32, same external layout as the PyTorch module.
    n = x_nchw.shape[0]
    tile_b = min(_CONV_TILE_B, n)
    x = x_nchw.transpose(0, 2, 3, 1)                               # NCHW -> NHWC once
    # conv1 + ReLU + 2x2 max-pool (fused, batched kernel)
    p1, ohp1, owp1 = _im2col_pool_order(x, 5, 5, k_pad=32)         # (4, n*144, 32)
    y1 = conv_relu_pool(p1, params["conv1_w"], params["conv1_b"],
                        n_images=n, pool_rows_per_img=ohp1 * owp1,
                        tile_b=tile_b)                             # (n, 144, 128) bf16
    y1 = y1.reshape(n, ohp1, owp1, -1)[..., :20]                   # NHWC (n,12,12,20)
    # conv2 + ReLU + 2x2 max-pool (fused, batched kernel)
    p2, ohp2, owp2 = _im2col_pool_order(y1, 5, 5, k_pad=512)       # (4, n*16, 512)
    y2 = conv_relu_pool(p2, params["conv2_w"], params["conv2_b"],
                        n_images=n, pool_rows_per_img=ohp2 * owp2,
                        tile_b=tile_b)                             # (n, 16, 128) bf16
    # Padded channels feed fc1 directly (fc1 rows pre-permuted/zero-padded).
    y2 = y2.reshape(n, ohp2 * owp2 * 128)                          # (n, 2048) bf16
    # fc1 + ReLU + fc2 + log_softmax (fused kernel)
    return fc_head(y2, params["fc1_w"], params["fc1_b"],
                   params["fc2_w"], params["fc2_b"])               # (n, 10) log-probs


# ----------------------------- reference (plain XLA, f32) -----------------------------

def reference_forward(raw, x):
    y = lax.conv_general_dilated(x, raw["conv1_w"], (1, 1), "VALID",
                                 dimension_numbers=("NCHW", "OIHW", "NCHW"))
    y = jax.nn.relu(y + raw["conv1_b"].reshape(1, -1, 1, 1))
    y = lax.reduce_window(y, -jnp.inf, lax.max, (1, 1, 2, 2), (1, 1, 2, 2), "VALID")
    y = lax.conv_general_dilated(y, raw["conv2_w"], (1, 1), "VALID",
                                 dimension_numbers=("NCHW", "OIHW", "NCHW"))
    y = jax.nn.relu(y + raw["conv2_b"].reshape(1, -1, 1, 1))
    y = lax.reduce_window(y, -jnp.inf, lax.max, (1, 1, 2, 2), (1, 1, 2, 2), "VALID")
    y = y.reshape(y.shape[0], -1)
    y = jax.nn.relu(y @ raw["fc1_w"].T + raw["fc1_b"])
    y = y @ raw["fc2_w"].T + raw["fc2_b"]
    return jax.nn.log_softmax(y, axis=-1)


if __name__ == "__main__":
    key = jax.random.PRNGKey(0)
    pkey, xkey = jax.random.split(key)
    raw = init_raw_params(pkey)
    params = preprocess_params(raw)
    # Spatial size must be 28x28 so the flatten is 4*4*50 = 800; batch kept small.
    x = jax.random.normal(xkey, (2, 1, 28, 28), dtype=jnp.float32)

    out = jax.block_until_ready(jax.jit(net_forward)(params, x))

    assert out.shape == (2, 10)
    # log_softmax rows must exponentiate-sum to ~1
    assert bool(jnp.all(jnp.abs(jnp.sum(jnp.exp(out), axis=1) - 1.0) < 1e-3))
    # matches the f32 XLA reference (bf16 MXU operands / intermediates -> loose tolerance)
    ref = reference_forward(raw, x)
    assert bool(jnp.max(jnp.abs(out - ref)) < 5e-2)
    print("KERNEL_OK")
</pallas_src>

<mosaic_0001>
module attributes {stable_mosaic.version = 11 : i64} {
  func.func @_conv_relu_pool_kernel(%arg0: i32, %arg1: memref<4x288x32xbf16, #tpu.memory_space<vmem>>, %arg2: memref<32x128xbf16, #tpu.memory_space<vmem>>, %arg3: memref<1x128xf32, #tpu.memory_space<vmem>>, %arg4: memref<288x128xbf16, #tpu.memory_space<vmem>>) attributes {dimension_semantics = [#tpu.dimension_semantics<parallel>], iteration_bounds = array<i64: 1>, scalar_prefetch = 0 : i64, scratch_operands = 0 : i64, tpu.core_type = #tpu.core_type<tc>, window_params = [{transform_indices = @transform_0, window_bounds = array<i64: 4, 288, 32>}, {pipeline_mode = #tpu.pipeline_mode<synchronous>, transform_indices = @transform_1, window_bounds = array<i64: 32, 128>}, {pipeline_mode = #tpu.pipeline_mode<synchronous>, transform_indices = @transform_2, window_bounds = array<i64: 1, 128>}, {transform_indices = @transform_3, window_bounds = array<i64: 288, 128>}]} {
    %c0 = arith.constant 0 : index
    %c0_0 = arith.constant 0 : index
    %0 = vector.load %arg2[%c0, %c0_0] : memref<32x128xbf16, #tpu.memory_space<vmem>>, vector<32x128xbf16>
    %c0_1 = arith.constant 0 : index
    %c0_2 = arith.constant 0 : index
    %c0_3 = arith.constant 0 : index
    %1 = vector.load %arg1[%c0_1, %c0_2, %c0_3] : memref<4x288x32xbf16, #tpu.memory_space<vmem>>, vector<1x288x32xbf16>
    %2 = vector.shape_cast %1 : vector<1x288x32xbf16> to vector<288x32xbf16>
    %cst = arith.constant dense<0.000000e+00> : vector<288x128xf32>
    %3 = tpu.matmul %2, %0, %cst {dimension_numbers = #tpu.dot_dimension_numbers<[1], [0], [0], [1], [0, 0, 1, 1], [], []>} : vector<288x32xbf16>, vector<32x128xbf16>, vector<288x128xf32> -> vector<288x128xf32>
    %c1 = arith.constant 1 : index
    %c0_4 = arith.constant 0 : index
    %c0_5 = arith.constant 0 : index
    %4 = vector.load %arg1[%c1, %c0_4, %c0_5] : memref<4x288x32xbf16, #tpu.memory_space<vmem>>, vector<1x288x32xbf16>
    %5 = vector.shape_cast %4 : vector<1x288x32xbf16> to vector<288x32xbf16>
    %cst_6 = arith.constant dense<0.000000e+00> : vector<288x128xf32>
    %6 = tpu.matmul %5, %0, %cst_6 {dimension_numbers = #tpu.dot_dimension_numbers<[1], [0], [0], [1], [0, 0, 1, 1], [], []>} : vector<288x32xbf16>, vector<32x128xbf16>, vector<288x128xf32> -> vector<288x128xf32>
    %c2 = arith.constant 2 : index
    %c0_7 = arith.constant 0 : index
    %c0_8 = arith.constant 0 : index
    %7 = vector.load %arg1[%c2, %c0_7, %c0_8] : memref<4x288x32xbf16, #tpu.memory_space<vmem>>, vector<1x288x32xbf16>
    %8 = vector.shape_cast %7 : vector<1x288x32xbf16> to vector<288x32xbf16>
    %cst_9 = arith.constant dense<0.000000e+00> : vector<288x128xf32>
    %9 = tpu.matmul %8, %0, %cst_9 {dimension_numbers = #tpu.dot_dimension_numbers<[1], [0], [0], [1], [0, 0, 1, 1], [], []>} : vector<288x32xbf16>, vector<32x128xbf16>, vector<288x128xf32> -> vector<288x128xf32>
    %c3 = arith.constant 3 : index
    %c0_10 = arith.constant 0 : index
    %c0_11 = arith.constant 0 : index
    %10 = vector.load %arg1[%c3, %c0_10, %c0_11] : memref<4x288x32xbf16, #tpu.memory_space<vmem>>, vector<1x288x32xbf16>
    %11 = vector.shape_cast %10 : vector<1x288x32xbf16> to vector<288x32xbf16>
    %cst_12 = arith.constant dense<0.000000e+00> : vector<288x128xf32>
    %12 = tpu.matmul %11, %0, %cst_12 {dimension_numbers = #tpu.dot_dimension_numbers<[1], [0], [0], [1], [0, 0, 1, 1], [], []>} : vector<288x32xbf16>, vector<32x128xbf16>, vector<288x128xf32> -> vector<288x128xf32>
    %13 = arith.maximumf %3, %6 : vector<288x128xf32>
    %14 = arith.maximumf %9, %12 : vector<288x128xf32>
    %15 = arith.maximumf %13, %14 : vector<288x128xf32>
    %c0_13 = arith.constant 0 : index
    %c0_14 = arith.constant 0 : index
    %16 = vector.load %arg3[%c0_13, %c0_14] : memref<1x128xf32, #tpu.memory_space<vmem>>, vector<1x128xf32>
    %17 = vector.broadcast %16 : vector<1x128xf32> to vector<288x128xf32>
    %18 = arith.addf %15, %17 : vector<288x128xf32>
    %cst_15 = arith.constant 0.000000e+00 : f32
    %19 = vector.broadcast %cst_15 : f32 to vector<288x128xf32>
    %20 = arith.maximumf %18, %19 : vector<288x128xf32>
    %21 = arith.truncf %20 : vector<288x128xf32> to vector<288x128xbf16>
    %c0_16 = arith.constant 0 : index
    %c0_17 = arith.constant 0 : index
    %22 = vector.load %arg4[%c0_16, %c0_17] : memref<288x128xbf16, #tpu.memory_space<vmem>>, vector<288x128xbf16>
    tpu.vector_store %arg4[%c0_16, %c0_17], %21 {strides = array<i32>} : memref<288x128xbf16, #tpu.memory_space<vmem>>, vector<288x128xbf16>,
    return
  }
  func.func @transform_0(%arg0: i32) -> (i32, i32, i32) {
    %c0_i32 = arith.constant 0 : i32
    %c0_i32_0 = arith.constant 0 : i32
    %c0_i32_1 = arith.constant 0 : i32
    return %c0_i32, %arg0, %c0_i32_0 : i32, i32, i32
  }
  func.func @transform_1(%arg0: i32) -> (i32, i32) {
    %c0_i32 = arith.constant 0 : i32
    %c0_i32_0 = arith.constant 0 : i32
    %c0_i32_1 = arith.constant 0 : i32
    return %c0_i32, %c0_i32_0 : i32, i32
  }
  func.func @transform_2(%arg0: i32) -> (i32, i32) {
    %c0_i32 = arith.constant 0 : i32
    %c0_i32_0 = arith.constant 0 : i32
    %c0_i32_1 = arith.constant 0 : i32
    return %c0_i32, %c0_i32_0 : i32, i32
  }
  func.func @transform_3(%arg0: i32) -> (i32, i32) {
    %c0_i32 = arith.constant 0 : i32
    %c0_i32_0 = arith.constant 0 : i32
    return %arg0, %c0_i32 : i32, i32
  }
}

module attributes {stable_mosaic.version = 11 : i64} {
  func.func @_conv_relu_pool_kernel(%arg0: i32, %arg1: memref<4x32x512xbf16, #tpu.memory_space<vmem>>, %arg2: memref<512x128xbf16, #tpu.memory_space<vmem>>, %arg3: memref<1x128xf32, #tpu.memory_space<vmem>>, %arg4: memref<32x128xbf16, #tpu.memory_space<vmem>>) attributes {dimension_semantics = [#tpu.dimension_semantics<parallel>], iteration_bounds = array<i64: 1>, scalar_prefetch = 0 : i64, scratch_operands = 0 : i64, tpu.core_type = #tpu.core_type<tc>, window_params = [{transform_indices = @transform_0, window_bounds = array<i64: 4, 32, 512>}, {pipeline_mode = #tpu.pipeline_mode<synchronous>, transform_indices = @transform_1, window_bounds = array<i64: 512, 128>}, {pipeline_mode = #tpu.pipeline_mode<synchronous>, transform_indices = @transform_2, window_bounds = array<i64: 1, 128>}, {transform_indices = @transform_3, window_bounds = array<i64: 32, 128>}]} {
    %c0 = arith.constant 0 : index
    %c0_0 = arith.constant 0 : index
    %0 = vector.load %arg2[%c0, %c0_0] : memref<512x128xbf16, #tpu.memory_space<vmem>>, vector<512x128xbf16>
    %c0_1 = arith.constant 0 : index
    %c0_2 = arith.constant 0 : index
    %c0_3 = arith.constant 0 : index
    %1 = vector.load %arg1[%c0_1, %c0_2, %c0_3] : memref<4x32x512xbf16, #tpu.memory_space<vmem>>, vector<1x32x512xbf16>
    %2 = vector.shape_cast %1 : vector<1x32x512xbf16> to vector<32x512xbf16>
    %cst = arith.constant dense<0.000000e+00> : vector<32x128xf32>
    %3 = tpu.matmul %2, %0, %cst {dimension_numbers = #tpu.dot_dimension_numbers<[1], [0], [0], [1], [0, 0, 1, 1], [], []>} : vector<32x512xbf16>, vector<512x128xbf16>, vector<32x128xf32> -> vector<32x128xf32>
    %c1 = arith.constant 1 : index
    %c0_4 = arith.constant 0 : index
    %c0_5 = arith.constant 0 : index
    %4 = vector.load %arg1[%c1, %c0_4, %c0_5] : memref<4x32x512xbf16, #tpu.memory_space<vmem>>, vector<1x32x512xbf16>
    %5 = vector.shape_cast %4 : vector<1x32x512xbf16> to vector<32x512xbf16>
    %cst_6 = arith.constant dense<0.000000e+00> : vector<32x128xf32>
    %6 = tpu.matmul %5, %0, %cst_6 {dimension_numbers = #tpu.dot_dimension_numbers<[1], [0], [0], [1], [0, 0, 1, 1], [], []>} : vector<32x512xbf16>, vector<512x128xbf16>, vector<32x128xf32> -> vector<32x128xf32>
    %c2 = arith.constant 2 : index
    %c0_7 = arith.constant 0 : index
    %c0_8 = arith.constant 0 : index
    %7 = vector.load %arg1[%c2, %c0_7, %c0_8] : memref<4x32x512xbf16, #tpu.memory_space<vmem>>, vector<1x32x512xbf16>
    %8 = vector.shape_cast %7 : vector<1x32x512xbf16> to vector<32x512xbf16>
    %cst_9 = arith.constant dense<0.000000e+00> : vector<32x128xf32>
    %9 = tpu.matmul %8, %0, %cst_9 {dimension_numbers = #tpu.dot_dimension_numbers<[1], [0], [0], [1], [0, 0, 1, 1], [], []>} : vector<32x512xbf16>, vector<512x128xbf16>, vector<32x128xf32> -> vector<32x128xf32>
    %c3 = arith.constant 3 : index
    %c0_10 = arith.constant 0 : index
    %c0_11 = arith.constant 0 : index
    %10 = vector.load %arg1[%c3, %c0_10, %c0_11] : memref<4x32x512xbf16, #tpu.memory_space<vmem>>, vector<1x32x512xbf16>
    %11 = vector.shape_cast %10 : vector<1x32x512xbf16> to vector<32x512xbf16>
    %cst_12 = arith.constant dense<0.000000e+00> : vector<32x128xf32>
    %12 = tpu.matmul %11, %0, %cst_12 {dimension_numbers = #tpu.dot_dimension_numbers<[1], [0], [0], [1], [0, 0, 1, 1], [], []>} : vector<32x512xbf16>, vector<512x128xbf16>, vector<32x128xf32> -> vector<32x128xf32>
    %13 = arith.maximumf %3, %6 : vector<32x128xf32>
    %14 = arith.maximumf %9, %12 : vector<32x128xf32>
    %15 = arith.maximumf %13, %14 : vector<32x128xf32>
    %c0_13 = arith.constant 0 : index
    %c0_14 = arith.constant 0 : index
    %16 = vector.load %arg3[%c0_13, %c0_14] : memref<1x128xf32, #tpu.memory_space<vmem>>, vector<1x128xf32>
    %17 = vector.broadcast %16 : vector<1x128xf32> to vector<32x128xf32>
    %18 = arith.addf %15, %17 : vector<32x128xf32>
    %cst_15 = arith.constant 0.000000e+00 : f32
    %19 = vector.broadcast %cst_15 : f32 to vector<32x128xf32>
    %20 = arith.maximumf %18, %19 : vector<32x128xf32>
    %21 = arith.truncf %20 : vector<32x128xf32> to vector<32x128xbf16>
    %c0_16 = arith.constant 0 : index
    %c0_17 = arith.constant 0 : index
    %22 = vector.load %arg4[%c0_16, %c0_17] : memref<32x128xbf16, #tpu.memory_space<vmem>>, vector<32x128xbf16>
    tpu.vector_store %arg4[%c0_16, %c0_17], %21 {strides = array<i32>} : memref<32x128xbf16, #tpu.memory_space<vmem>>, vector<32x128xbf16>,
    return
  }
  func.func @transform_0(%arg0: i32) -> (i32, i32, i32) {
    %c0_i32 = arith.constant 0 : i32
    %c0_i32_0 = arith.constant 0 : i32
    %c0_i32_1 = arith.constant 0 : i32
    return %c0_i32, %arg0, %c0_i32_0 : i32, i32, i32
  }
  func.func @transform_1(%arg0: i32) -> (i32, i32) {
    %c0_i32 = arith.constant 0 : i32
    %c0_i32_0 = arith.constant 0 : i32
    %c0_i32_1 = arith.constant 0 : i32
    return %c0_i32, %c0_i32_0 : i32, i32
  }
  func.func @transform_2(%arg0: i32) -> (i32, i32) {
    %c0_i32 = arith.constant 0 : i32
    %c0_i32_0 = arith.constant 0 : i32
    %c0_i32_1 = arith.constant 0 : i32
    return %c0_i32, %c0_i32_0 : i32, i32
  }
  func.func @transform_3(%arg0: i32) -> (i32, i32) {
    %c0_i32 = arith.constant 0 : i32
    %c0_i32_0 = arith.constant 0 : i32
    return %arg0, %c0_i32 : i32, i32
  }
}

module attributes {stable_mosaic.version = 11 : i64} {
  func.func @_fc_head_kernel(%arg0: i32, %arg1: memref<16x2048xbf16, #tpu.memory_space<vmem>>, %arg2: memref<2048x512xbf16, #tpu.memory_space<vmem>>, %arg3: memref<1x512xf32, #tpu.memory_space<vmem>>, %arg4: memref<512x128xbf16, #tpu.memory_space<vmem>>, %arg5: memref<1x128xf32, #tpu.memory_space<vmem>>, %arg6: memref<16x128xf32, #tpu.memory_space<vmem>>) attributes {dimension_semantics = [#tpu.dimension_semantics<parallel>], iteration_bounds = array<i64: 1>, scalar_prefetch = 0 : i64, scratch_operands = 0 : i64, tpu.core_type = #tpu.core_type<tc>, window_params = [{transform_indices = @transform_0, window_bounds = array<i64: 16, 2048>}, {pipeline_mode = #tpu.pipeline_mode<synchronous>, transform_indices = @transform_1, window_bounds = array<i64: 2048, 512>}, {pipeline_mode = #tpu.pipeline_mode<synchronous>, transform_indices = @transform_2, window_bounds = array<i64: 1, 512>}, {pipeline_mode = #tpu.pipeline_mode<synchronous>, transform_indices = @transform_3, window_bounds = array<i64: 512, 128>}, {pipeline_mode = #tpu.pipeline_mode<synchronous>, transform_indices = @transform_4, window_bounds = array<i64: 1, 128>}, {transform_indices = @transform_5, window_bounds = array<i64: 16, 128>}]} {
    %c0 = arith.constant 0 : index
    %c0_0 = arith.constant 0 : index
    %0 = vector.load %arg1[%c0, %c0_0] : memref<16x2048xbf16, #tpu.memory_space<vmem>>, vector<16x2048xbf16>
    %c0_1 = arith.constant 0 : index
    %c0_2 = arith.constant 0 : index
    %1 = vector.load %arg2[%c0_1, %c0_2] : memref<2048x512xbf16, #tpu.memory_space<vmem>>, vector<2048x512xbf16>
    %cst = arith.constant dense<0.000000e+00> : vector<16x512xf32>
    %2 = tpu.matmul %0, %1, %cst {dimension_numbers = #tpu.dot_dimension_numbers<[1], [0], [0], [1], [0, 0, 1, 1], [], []>} : vector<16x2048xbf16>, vector<2048x512xbf16>, vector<16x512xf32> -> vector<16x512xf32>
    %c0_3 = arith.constant 0 : index
    %c0_4 = arith.constant 0 : index
    %3 = vector.load %arg3[%c0_3, %c0_4] : memref<1x512xf32, #tpu.memory_space<vmem>>, vector<1x512xf32>
    %4 = vector.broadcast %3 : vector<1x512xf32> to vector<16x512xf32>
    %5 = arith.addf %2, %4 : vector<16x512xf32>
    %cst_5 = arith.constant 0.000000e+00 : f32
    %6 = vector.broadcast %cst_5 : f32 to vector<16x512xf32>
    %7 = arith.maximumf %5, %6 : vector<16x512xf32>
    %8 = arith.truncf %7 : vector<16x512xf32> to vector<16x512xbf16>
    %c0_6 = arith.constant 0 : index
    %c0_7 = arith.constant 0 : index
    %9 = vector.load %arg4[%c0_6, %c0_7] : memref<512x128xbf16, #tpu.memory_space<vmem>>, vector<512x128xbf16>
    %cst_8 = arith.constant dense<0.000000e+00> : vector<16x128xf32>
    %10 = tpu.matmul %8, %9, %cst_8 {dimension_numbers = #tpu.dot_dimension_numbers<[1], [0], [0], [1], [0, 0, 1, 1], [], []>} : vector<16x512xbf16>, vector<512x128xbf16>, vector<16x128xf32> -> vector<16x128xf32>
    %c0_9 = arith.constant 0 : index
    %c0_10 = arith.constant 0 : index
    %11 = vector.load %arg5[%c0_9, %c0_10] : memref<1x128xf32, #tpu.memory_space<vmem>>, vector<1x128xf32>
    %12 = vector.broadcast %11 : vector<1x128xf32> to vector<16x128xf32>
    %13 = arith.addf %10, %12 : vector<16x128xf32>
    %cst_11 = arith.constant dense<0xFF800000> : vector<16xf32>
    %14 = vector.multi_reduction <maximumf>, %13, %cst_11 [1] : vector<16x128xf32> to vector<16xf32>
    %15 = vector.shape_cast %14 : vector<16xf32> to vector<16x1xf32>
    %16 = vector.broadcast %15 : vector<16x1xf32> to vector<16x128xf32>
    %17 = arith.subf %13, %16 : vector<16x128xf32>
    %18 = math.exp %17 : vector<16x128xf32>
    %cst_12 = arith.constant dense<0.000000e+00> : vector<16xf32>
    %19 = vector.multi_reduction <add>, %18, %cst_12 [1] : vector<16x128xf32> to vector<16xf32>
    %20 = vector.shape_cast %19 : vector<16xf32> to vector<16x1xf32>
    %21 = math.log %20 : vector<16x1xf32>
    %22 = vector.broadcast %21 : vector<16x1xf32> to vector<16x128xf32>
    %23 = arith.subf %17, %22 : vector<16x128xf32>
    %c0_13 = arith.constant 0 : index
    %c0_14 = arith.constant 0 : index
    %24 = vector.load %arg6[%c0_13, %c0_14] : memref<16x128xf32, #tpu.memory_space<vmem>>, vector<16x128xf32>
    tpu.vector_store %arg6[%c0_13, %c0_14], %23 {strides = array<i32>} : memref<16x128xf32, #tpu.memory_space<vmem>>, vector<16x128xf32>,
    return
  }
  func.func @transform_0(%arg0: i32) -> (i32, i32) {
    %c0_i32 = arith.constant 0 : i32
    %c0_i32_0 = arith.constant 0 : i32
    return %arg0, %c0_i32 : i32, i32
  }
  func.func @transform_1(%arg0: i32) -> (i32, i32) {
    %c0_i32 = arith.constant 0 : i32
    %c0_i32_0 = arith.constant 0 : i32
    %c0_i32_1 = arith.constant 0 : i32
    return %c0_i32, %c0_i32_0 : i32, i32
  }
  func.func @transform_2(%arg0: i32) -> (i32, i32) {
    %c0_i32 = arith.constant 0 : i32
    %c0_i32_0 = arith.constant 0 : i32
    %c0_i32_1 = arith.constant 0 : i32
    return %c0_i32, %c0_i32_0 : i32, i32
  }
  func.func @transform_3(%arg0: i32) -> (i32, i32) {
    %c0_i32 = arith.constant 0 : i32
    %c0_i32_0 = arith.constant 0 : i32
    %c0_i32_1 = arith.constant 0 : i32
    return %c0_i32, %c0_i32_0 : i32, i32
  }
  func.func @transform_4(%arg0: i32) -> (i32, i32) {
    %c0_i32 = arith.constant 0 : i32
    %c0_i32_0 = arith.constant 0 : i32
    %c0_i32_1 = arith.constant 0 : i32
    return %c0_i32, %c0_i32_0 : i32, i32
  }
  func.func @transform_5(%arg0: i32) -> (i32, i32) {
    %c0_i32 = arith.constant 0 : i32
    %c0_i32_0 = arith.constant 0 : i32
    return %arg0, %c0_i32 : i32, i32
  }
}

</mosaic_0001>

<llo_original>
// kernel: net_forward.3
$region0: #{net_forward.3}
  #allocation0 [shape = 'u32[]', space=smem, size = 0x4, offset = 0x4, fixed_abs, tag = 'smem constant byte address 0x4 - core index']
  #allocation1 [shape = 'u32[144,128]{1,0:T(1,128)}', space=vmem, size = 0x12000, scoped, tag = 'internal scratch']
  %s0 = inlined_call_operand.vmem [shape: bf16[4,288,32], index: 0, kind: input, shape index: {}]
  %s1 = inlined_call_operand.vmem [shape: bf16[32,128], index: 1, kind: input, shape index: {}]
  %s2 = inlined_call_operand.vmem [shape: f32[1,128], index: 2, kind: input, shape index: {}]
  %s3 = inlined_call_operand.vmem [shape: bf16[288,128], index: 3, kind: output, shape index: {}]
  %s4 = sld [smem:[#allocation0]]
  $region22: #{net_forward.3} parent=0
    _
  %s6 = ssub.s32 1, %s4
  %s7 = scalar_select 0, %s6, %s4
  // Predicated region
  $region2: #{net_forward.3} parent=0 // pred_check
    _
  $region3: #{net_forward.3} parent=0 // pred_check_branch
    %9 = sbr.rel (0) target = $region5
  $region4: #{net_forward.3} parent=0 // pred_region
    _
  $region5: #{net_forward.3} parent=0 // pred_fallthru
    _
  // Predicated region
  $region6: #{net_forward.3} parent=0 // pred_check
    _
  $region7: #{net_forward.3} parent=0 // pred_check_branch
    %11 = sbr.rel (0) target = $region9
  $region8: #{net_forward.3} parent=0 // pred_region
    _
  $region9: #{net_forward.3} parent=0 // pred_fallthru
    _
  // Predicated region
  $region10: #{net_forward.3} parent=0 // pred_check
    _
  $region11: #{net_forward.3} parent=0 // pred_check_branch
    %13 = sbr.rel (0) target = $region13
  $region12: #{net_forward.3} parent=0 // pred_region
    _
  $region13: #{net_forward.3} parent=0 // pred_fallthru
    _
  %v15 = vld [vmem:[%s1] sm:$0xf]
  %v16 = vld [vmem:[%s1 + $0x4] sm:$0xf]
  %v17 = vld [vmem:[%s1 + $0x8] sm:$0xf]
  %v18 = vld [vmem:[%s1 + $0xc] sm:$0xf]
  %v19 = vld [vmem:[%s0] sm:$0xf]
  %v20 = vld [vmem:[%s0 + $0x4] sm:$0xf]
  %v21 = vld [vmem:[%s0 + $0x8] sm:$0xf]
  %v22 = vld [vmem:[%s0 + $0xc] sm:$0xf]
  %v23 = vld [vmem:[%s0 + $0x10] sm:$0xf]
  %v24 = vld [vmem:[%s0 + $0x14] sm:$0xf]
  %v25 = vld [vmem:[%s0 + $0x18] sm:$0xf]
  %v26 = vld [vmem:[%s0 + $0x1c] sm:$0xf]
  %v27 = vld [vmem:[%s0 + $0x20] sm:$0xf]
  %v28 = vld [vmem:[%s0 + $0x24] sm:$0xf]
  %v29 = vld [vmem:[%s0 + $0x28] sm:$0xf]
  %v30 = vld [vmem:[%s0 + $0x2c] sm:$0xf]
  %v31 = vld [vmem:[%s0 + $0x30] sm:$0xf]
  %v32 = vld [vmem:[%s0 + $0x34] sm:$0xf]
  %v33 = vld [vmem:[%s0 + $0x38] sm:$0xf]
  %v34 = vld [vmem:[%s0 + $0x3c] sm:$0xf]
  %v35 = vld [vmem:[%s0 + $0x40] sm:$0xf]
  %v36 = vld [vmem:[%s0 + $0x44] sm:$0xf]
  %v37 = vld [vmem:[%s0 + $0x48] sm:$0xf]
  %v38 = vld [vmem:[%s0 + $0x4c] sm:$0xf]
  %v39 = vld [vmem:[%s0 + $0x50] sm:$0xf]
  %v40 = vld [vmem:[%s0 + $0x54] sm:$0xf]
  %v41 = vld [vmem:[%s0 + $0x58] sm:$0xf]
  %v42 = vld [vmem:[%s0 + $0x5c] sm:$0xf]
  %v43 = vld [vmem:[%s0 + $0x60] sm:$0xf]
  %v44 = vld [vmem:[%s0 + $0x64] sm:$0xf]
  %v45 = vld [vmem:[%s0 + $0x68] sm:$0xf]
  %v46 = vld [vmem:[%s0 + $0x6c] sm:$0xf]
  %v47 = vld [vmem:[%s0 + $0x70] sm:$0xf]
  %v48 = vld [vmem:[%s0 + $0x74] sm:$0xf]
  %v49 = vld [vmem:[%s0 + $0x78] sm:$0xf]
  %v50 = vld [vmem:[%s0 + $0x7c] sm:$0xf]
  %v51 = vld [vmem:[%s0 + $0x80] sm:$0xf]
  %v52 = vld [vmem:[%s0 + $0x84] sm:$0xf]
  %v53 = vld [vmem:[%s0 + $0x88] sm:$0xf]
  %v54 = vld [vmem:[%s0 + $0x8c] sm:$0xf]
  %v91 = vunpack.c.l.b16 %v19
  %v92 = vunpack.c.l.b16 %v20
  %v93 = vunpack.c.l.b16 %v21
  %v94 = vunpack.c.l.b16 %v22
  %v95 = vunpack.c.l.b16 %v23
  %v96 = vunpack.c.l.b16 %v24
  %v97 = vunpack.c.l.b16 %v25
  %v98 = vunpack.c.l.b16 %v26
  %v99 = vunpack.c.l.b16 %v27
  %v100 = vunpack.c.l.b16 %v28
  %v101 = vunpack.c.l.b16 %v29
  %v102 = vunpack.c.l.b16 %v30
  %v103 = vunpack.c.l.b16 %v31
  %v104 = vunpack.c.l.b16 %v32
  %v105 = vunpack.c.l.b16 %v33
  %v106 = vunpack.c.l.b16 %v34
  %v107 = vunpack.c.l.b16 %v35
  %v108 = vunpack.c.l.b16 %v36
  %v109 = vunpack.c.l.b16 %v37
  %v110 = vunpack.c.l.b16 %v38
  %v111 = vunpack.c.l.b16 %v39
  %v112 = vunpack.c.l.b16 %v40
  %v113 = vunpack.c.l.b16 %v41
  %v114 = vunpack.c.l.b16 %v42
  %v115 = vunpack.c.l.b16 %v43
  %v116 = vunpack.c.l.b16 %v44
  %v117 = vunpack.c.l.b16 %v45
  %v118 = vunpack.c.l.b16 %v46
  %v119 = vunpack.c.l.b16 %v47
  %v120 = vunpack.c.l.b16 %v48
  %v121 = vunpack.c.l.b16 %v49
  %v122 = vunpack.c.l.b16 %v50
  %v123 = vunpack.c.l.b16 %v51
  %v124 = vunpack.c.l.b16 %v52
  %v125 = vunpack.c.l.b16 %v53
  %v126 = vunpack.c.l.b16 %v54
  %v127 = vpack.c.b16 %v92, %v91
  %v128 = vpack.c.b16 %v94, %v93
  %v129 = vpack.c.b16 %v96, %v95
  %v130 = vpack.c.b16 %v98, %v97
  %v131 = vpack.c.b16 %v100, %v99
  %v132 = vpack.c.b16 %v102, %v101
  %v133 = vpack.c.b16 %v104, %v103
  %v134 = vpack.c.b16 %v106, %v105
  %v135 = vpack.c.b16 %v108, %v107
  %v136 = vpack.c.b16 %v110, %v109
  %v137 = vpack.c.b16 %v112, %v111
  %v138 = vpack.c.b16 %v114, %v113
  %v139 = vpack.c.b16 %v116, %v115
  %v140 = vpack.c.b16 %v118, %v117
  %v141 = vpack.c.b16 %v120, %v119
  %v142 = vpack.c.b16 %v122, %v121
  %v143 = vpack.c.b16 %v124, %v123
  %v144 = vpack.c.b16 %v126, %v125
  %v149 = vunpack.c.l.b16 %v15
  %v150 = vunpack.c.l.b16 %v16
  %v151 = vunpack.c.l.b16 %v17
  %v152 = vunpack.c.l.b16 %v18
  %v153 = vpack.c.b16 %v150, %v149
  %v154 = vpack.c.b16 %v152, %v151
  %vm157 = vcmask 261120
  %v159 = vsel %vm157, %v127, 0
  %v162 = vsel %vm157, %v128, 0
  %v165 = vsel %vm157, %v129, 0
  %v168 = vsel %vm157, %v130, 0
  %v171 = vsel %vm157, %v131, 0
  %v174 = vsel %vm157, %v132, 0
  %v177 = vsel %vm157, %v133, 0
  %v180 = vsel %vm157, %v134, 0
  %v183 = vsel %vm157, %v135, 0
  %v186 = vsel %vm157, %v136, 0
  %v189 = vsel %vm157, %v137, 0
  %v192 = vsel %vm157, %v138, 0
  %v195 = vsel %vm157, %v139, 0
  %v198 = vsel %vm157, %v140, 0
  %v201 = vsel %vm157, %v141, 0
  %v204 = vsel %vm157, %v142, 0
  %v207 = vsel %vm157, %v143, 0
  %v210 = vsel %vm157, %v144, 0
  %212 = vmatprep.subr.bf16.mxu0 0
  %213 = vmatpush1.bf16.msra.mxu0 0
  %214 = vmatprep.subr.bf16.mxu0 0
  %215 = vmatpush1.bf16.msra.mxu0 0
  %216 = vmatprep.subr.bf16.mxu0 0
  %217 = vmatpush1.bf16.msra.mxu0 0
  %218 = vmatprep.subr.bf16.mxu0 0
  %219 = vmatpush1.bf16.msra.mxu0 0
  %220 = vmatprep.subr.bf16.mxu0 0
  %221 = vmatpush1.bf16.msra.mxu0 0
  %222 = vmatprep.subr.bf16.mxu0 0
  %223 = vmatpush1.bf16.msra.mxu0 0
  %224 = vmatprep.subr.bf16.mxu0 0
  %225 = vmatpush1.bf16.msra.mxu0 %v154
  %226 = vmatprep.subr.bf16.mxu0 0
  %227 = vmatpush1.bf16.msra.mxu0 %v153
  %228 = vmatprep.subr.bf16.mxu0 0
  %229 = vmatpush2.bf16.msra.mxu0 0
  %230 = vmatprep.subr.bf16.mxu0 0
  %231 = vmatpush2.bf16.msra.mxu0 0
  %232 = vmatprep.subr.bf16.mxu0 0
  %233 = vmatpush2.bf16.msra.mxu0 0
  %234 = vmatprep.subr.bf16.mxu0 0
  %235 = vmatpush2.bf16.msra.mxu0 0
  %236 = vmatprep.subr.bf16.mxu0 0
  %237 = vmatpush2.bf16.msra.mxu0 0
  %238 = vmatprep.subr.bf16.mxu0 0
  %239 = vmatpush2.bf16.msra.mxu0 0
  %240 = vmatprep.subr.bf16.mxu0 0
  %241 = vmatpush2.bf16.msra.mxu0 0
  %242 = vmatprep.subr.bf16.mxu0 0
  %243 = vmatpush2.bf16.msra.mxu0 0
  %244 = vmatprep.mubr.bf16.mxu0 0
  %245 = vmatmul.mubr.bf16.gmra.mxu0 %v159
  %v246 = vpop.f32.mrf.mxu0
  %v247 = vadd.f32 0.0, %v246
  %v248 = vpop.f32.mrf.mxu0
  %v249 = vpop.f32.mrf.mxu0
  %v250 = vadd.f32 0.0, %v249
  %v251 = vpop.f32.mrf.mxu0
  %252 = vmatprep.mubr.bf16.mxu0 0
  %253 = vmatmul.mubr.bf16.gmra.mxu0 %v162
  %v254 = vpop.f32.mrf.mxu0
  %v255 = vadd.f32 0.0, %v254
  %v256 = vpop.f32.mrf.mxu0
  %v257 = vpop.f32.mrf.mxu0
  %v258 = vadd.f32 0.0, %v257
  %v259 = vpop.f32.mrf.mxu0
  %260 = vmatprep.mubr.bf16.mxu0 0
  %261 = vmatmul.mubr.bf16.gmra.mxu0 %v165
  %v262 = vpop.f32.mrf.mxu0
  %v263 = vadd.f32 0.0, %v262
  %v264 = vpop.f32.mrf.mxu0
  %v265 = vpop.f32.mrf.mxu0
  %v266 = vadd.f32 0.0, %v265
  %v267 = vpop.f32.mrf.mxu0
  %268 = vmatprep.mubr.bf16.mxu0 0
  %269 = vmatmul.mubr.bf16.gmra.mxu0 %v168
  %v270 = vpop.f32.mrf.mxu0
  %v271 = vadd.f32 0.0, %v270
  %v272 = vpop.f32.mrf.mxu0
  %v273 = vpop.f32.mrf.mxu0
  %v274 = vadd.f32 0.0, %v273
  %v275 = vpop.f32.mrf.mxu0
  %276 = vmatprep.mubr.bf16.mxu0 0
  %277 = vmatmul.mubr.bf16.gmra.mxu0 %v171
  %v278 = vpop.f32.mrf.mxu0
  %v279 = vadd.f32 0.0, %v278
  %v280 = vpop.f32.mrf.mxu0
  %v281 = vpop.f32.mrf.mxu0
  %v282 = vadd.f32 0.0, %v281
  %v283 = vpop.f32.mrf.mxu0
  %284 = vmatprep.mubr.bf16.mxu0 0
  %285 = vmatmul.mubr.bf16.gmra.mxu0 %v174
  %v286 = vpop.f32.mrf.mxu0
  %v287 = vadd.f32 0.0, %v286
  %v288 = vpop.f32.mrf.mxu0
  %v289 = vpop.f32.mrf.mxu0
  %v290 = vadd.f32 0.0, %v289
  %v291 = vpop.f32.mrf.mxu0
  %292 = vmatprep.mubr.bf16.mxu0 0
  %293 = vmatmul.mubr.bf16.gmra.mxu0 %v177
  %v294 = vpop.f32.mrf.mxu0
  %v295 = vadd.f32 0.0, %v294
  %v296 = vpop.f32.mrf.mxu0
  %v297 = vpop.f32.mrf.mxu0
  %v298 = vadd.f32 0.0, %v297
  %v299 = vpop.f32.mrf.mxu0
  %300 = vmatprep.mubr.bf16.mxu0 0
  %301 = vmatmul.mubr.bf16.gmra.mxu0 %v180
  %v302 = vpop.f32.mrf.mxu0
  %v303 = vadd.f32 0.0, %v302
  %v304 = vpop.f32.mrf.mxu0
  %v305 = vpop.f32.mrf.mxu0
  %v306 = vadd.f32 0.0, %v305
  %v307 = vpop.f32.mrf.mxu0
  %308 = vmatprep.mubr.bf16.mxu0 0
  %309 = vmatmul.mubr.bf16.gmra.mxu0 %v183
  %v310 = vpop.f32.mrf.mxu0
  %v311 = vadd.f32 0.0, %v310
  %v312 = vpop.f32.mrf.mxu0
  %v313 = vpop.f32.mrf.mxu0
  %v314 = vadd.f32 0.0, %v313
  %v315 = vpop.f32.mrf.mxu0
  %316 = vmatprep.mubr.bf16.mxu0 0
  %317 = vmatmul.mubr.bf16.gmra.mxu0 %v186
  %v318 = vpop.f32.mrf.mxu0
  %v319 = vadd.f32 0.0, %v318
  %v320 = vpop.f32.mrf.mxu0
  %v321 = vpop.f32.mrf.mxu0
  %v322 = vadd.f32 0.0, %v321
  %v323 = vpop.f32.mrf.mxu0
  %324 = vmatprep.mubr.bf16.mxu0 0
  %325 = vmatmul.mubr.bf16.gmra.mxu0 %v189
  %v326 = vpop.f32.mrf.mxu0
  %v327 = vadd.f32 0.0, %v326
  %v328 = vpop.f32.mrf.mxu0
  %v329 = vpop.f32.mrf.mxu0
  %v330 = vadd.f32 0.0, %v329
  %v331 = vpop.f32.mrf.mxu0
  %332 = vmatprep.mubr.bf16.mxu0 0
  %333 = vmatmul.mubr.bf16.gmra.mxu0 %v192
  %v334 = vpop.f32.mrf.mxu0
  %v335 = vadd.f32 0.0, %v334
  %v336 = vpop.f32.mrf.mxu0
  %v337 = vpop.f32.mrf.mxu0
  %v338 = vadd.f32 0.0, %v337
  %v339 = vpop.f32.mrf.mxu0
  %340 = vmatprep.mubr.bf16.mxu0 0
  %341 = vmatmul.mubr.bf16.gmra.mxu0 %v195
  %v342 = vpop.f32.mrf.mxu0
  %v343 = vadd.f32 0.0, %v342
  %v344 = vpop.f32.mrf.mxu0
  %v345 = vpop.f32.mrf.mxu0
  %v346 = vadd.f32 0.0, %v345
  %v347 = vpop.f32.mrf.mxu0
  %348 = vmatprep.mubr.bf16.mxu0 0
  %349 = vmatmul.mubr.bf16.gmra.mxu0 %v198
  %v350 = vpop.f32.mrf.mxu0
  %v351 = vadd.f32 0.0, %v350
  %v352 = vpop.f32.mrf.mxu0
  %v353 = vpop.f32.mrf.mxu0
  %v354 = vadd.f32 0.0, %v353
  %v355 = vpop.f32.mrf.mxu0
  %356 = vmatprep.mubr.bf16.mxu0 0
  %357 = vmatmul.mubr.bf16.gmra.mxu0 %v201
  %v358 = vpop.f32.mrf.mxu0
  %v359 = vadd.f32 0.0, %v358
  %v360 = vpop.f32.mrf.mxu0
  %v361 = vpop.f32.mrf.mxu0
  %v362 = vadd.f32 0.0, %v361
  %v363 = vpop.f32.mrf.mxu0
  %364 = vmatprep.mubr.bf16.mxu0 0
  %365 = vmatmul.mubr.bf16.gmra.mxu0 %v204
  %v366 = vpop.f32.mrf.mxu0
  %v367 = vadd.f32 0.0, %v366
  %v368 = vpop.f32.mrf.mxu0
  %v369 = vpop.f32.mrf.mxu0
  %v370 = vadd.f32 0.0, %v369
  %v371 = vpop.f32.mrf.mxu0
  %372 = vmatprep.mubr.bf16.mxu0 0
  %373 = vmatmul.mubr.bf16.gmra.mxu0 %v207
  %v374 = vpop.f32.mrf.mxu0
  %v375 = vadd.f32 0.0, %v374
  %v376 = vpop.f32.mrf.mxu0
  %v377 = vpop.f32.mrf.mxu0
  %v378 = vadd.f32 0.0, %v377
  %v379 = vpop.f32.mrf.mxu0
  %380 = vmatprep.mubr.bf16.mxu0 0
  %381 = vmatmul.mubr.bf16.gmra.mxu0 %v210
  %v382 = vpop.f32.mrf.mxu0
  %v383 = vadd.f32 0.0, %v382
  %v384 = vpop.f32.mrf.mxu0
  %v385 = vpop.f32.mrf.mxu0
  %v386 = vadd.f32 0.0, %v385
  %v387 = vpop.f32.mrf.mxu0
  %388 = vdwg.mxu0
  %s389 = scalar_lea.vmem %s0, 144
  %v390 = vld [vmem:[%s389] sm:$0xf]
  %v391 = vld [vmem:[%s389 + $0x4] sm:$0xf]
  %v392 = vld [vmem:[%s389 + $0x8] sm:$0xf]
  %v393 = vld [vmem:[%s389 + $0xc] sm:$0xf]
  %v394 = vld [vmem:[%s389 + $0x10] sm:$0xf]
  %v395 = vld [vmem:[%s389 + $0x14] sm:$0xf]
  %v396 = vld [vmem:[%s389 + $0x18] sm:$0xf]
  %v397 = vld [vmem:[%s389 + $0x1c] sm:$0xf]
  %v398 = vld [vmem:[%s389 + $0x20] sm:$0xf]
  %v399 = vld [vmem:[%s389 + $0x24] sm:$0xf]
  %v400 = vld [vmem:[%s389 + $0x28] sm:$0xf]
  %v401 = vld [vmem:[%s389 + $0x2c] sm:$0xf]
  %v402 = vld [vmem:[%s389 + $0x30] sm:$0xf]
  %v403 = vld [vmem:[%s389 + $0x34] sm:$0xf]
  %v404 = vld [vmem:[%s389 + $0x38] sm:$0xf]
  %v405 = vld [vmem:[%s389 + $0x3c] sm:$0xf]
  %v406 = vld [vmem:[%s389 + $0x40] sm:$0xf]
  %v407 = vld [vmem:[%s389 + $0x44] sm:$0xf]
  %v408 = vld [vmem:[%s389 + $0x48] sm:$0xf]
  %v409 = vld [vmem:[%s389 + $0x4c] sm:$0xf]
  %v410 = vld [vmem:[%s389 + $0x50] sm:$0xf]
  %v411 = vld [vmem:[%s389 + $0x54] sm:$0xf]
  %v412 = vld [vmem:[%s389 + $0x58] sm:$0xf]
  %v413 = vld [vmem:[%s389 + $0x5c] sm:$0xf]
  %v414 = vld [vmem:[%s389 + $0x60] sm:$0xf]
  %v415 = vld [vmem:[%s389 + $0x64] sm:$0xf]
  %v416 = vld [vmem:[%s389 + $0x68] sm:$0xf]
  %v417 = vld [vmem:[%s389 + $0x6c] sm:$0xf]
  %v418 = vld [vmem:[%s389 + $0x70] sm:$0xf]
  %v419 = vld [vmem:[%s389 + $0x74] sm:$0xf]
  %v420 = vld [vmem:[%s389 + $0x78] sm:$0xf]
  %v421 = vld [vmem:[%s389 + $0x7c] sm:$0xf]
  %v422 = vld [vmem:[%s389 + $0x80] sm:$0xf]
  %v423 = vld [vmem:[%s389 + $0x84] sm:$0xf]
  %v424 = vld [vmem:[%s389 + $0x88] sm:$0xf]
  %v425 = vld [vmem:[%s389 + $0x8c] sm:$0xf]
  %v462 = vunpack.c.l.b16 %v390
  %v463 = vunpack.c.l.b16 %v391
  %v464 = vunpack.c.l.b16 %v392
  %v465 = vunpack.c.l.b16 %v393
  %v466 = vunpack.c.l.b16 %v394
  %v467 = vunpack.c.l.b16 %v395
  %v468 = vunpack.c.l.b16 %v396
  %v469 = vunpack.c.l.b16 %v397
  %v470 = vunpack.c.l.b16 %v398
  %v471 = vunpack.c.l.b16 %v399
  %v472 = vunpack.c.l.b16 %v400
  %v473 = vunpack.c.l.b16 %v401
  %v474 = vunpack.c.l.b16 %v402
  %v475 = vunpack.c.l.b16 %v403
  %v476 = vunpack.c.l.b16 %v404
  %v477 = vunpack.c.l.b16 %v405
  %v478 = vunpack.c.l.b16 %v406
  %v479 = vunpack.c.l.b16 %v407
  %v480 = vunpack.c.l.b16 %v408
  %v481 = vunpack.c.l.b16 %v409
  %v482 = vunpack.c.l.b16 %v410
  %v483 = vunpack.c.l.b16 %v411
  %v484 = vunpack.c.l.b16 %v412
  %v485 = vunpack.c.l.b16 %v413
  %v486 = vunpack.c.l.b16 %v414
  %v487 = vunpack.c.l.b16 %v415
  %v488 = vunpack.c.l.b16 %v416
  %v489 = vunpack.c.l.b16 %v417
  %v490 = vunpack.c.l.b16 %v418
  %v491 = vunpack.c.l.b16 %v419
  %v492 = vunpack.c.l.b16 %v420
  %v493 = vunpack.c.l.b16 %v421
  %v494 = vunpack.c.l.b16 %v422
  %v495 = vunpack.c.l.b16 %v423
  %v496 = vunpack.c.l.b16 %v424
  %v497 = vunpack.c.l.b16 %v425
  %v498 = vpack.c.b16 %v463, %v462
  %v499 = vpack.c.b16 %v465, %v464
  %v500 = vpack.c.b16 %v467, %v466
  %v501 = vpack.c.b16 %v469, %v468
  %v502 = vpack.c.b16 %v471, %v470
  %v503 = vpack.c.b16 %v473, %v472
  %v504 = vpack.c.b16 %v475, %v474
  %v505 = vpack.c.b16 %v477, %v476
  %v506 = vpack.c.b16 %v479, %v478
  %v507 = vpack.c.b16 %v481, %v480
  %v508 = vpack.c.b16 %v483, %v482
  %v509 = vpack.c.b16 %v485, %v484
  %v510 = vpack.c.b16 %v487, %v486
  %v511 = vpack.c.b16 %v489, %v488
  %v512 = vpack.c.b16 %v491, %v490
  %v513 = vpack.c.b16 %v493, %v492
  %v514 = vpack.c.b16 %v495, %v494
  %v515 = vpack.c.b16 %v497, %v496
  %v517 = vsel %vm157, %v498, 0
  %v520 = vsel %vm157, %v499, 0
  %v523 = vsel %vm157, %v500, 0
  %v526 = vsel %vm157, %v501, 0
  %v529 = vsel %vm157, %v502, 0
  %v532 = vsel %vm157, %v503, 0
  %v535 = vsel %vm157, %v504, 0
  %v538 = vsel %vm157, %v505, 0
  %v541 = vsel %vm157, %v506, 0
  %v544 = vsel %vm157, %v507, 0
  %v547 = vsel %vm157, %v508, 0
  %v550 = vsel %vm157, %v509, 0
  %v553 = vsel %vm157, %v510, 0
  %v556 = vsel %vm157, %v511, 0
  %v559 = vsel %vm157, %v512, 0
  %v562 = vsel %vm157, %v513, 0
  %v565 = vsel %vm157, %v514, 0
  %v568 = vsel %vm157, %v515, 0
  %570 = vmatprep.subr.bf16.mxu0 0
  %571 = vmatpush1.bf16.msra.mxu0 0
  %572 = vmatprep.subr.bf16.mxu0 0
  %573 = vmatpush1.bf16.msra.mxu0 0
  %574 = vmatprep.subr.bf16.mxu0 0
  %575 = vmatpush1.bf16.msra.mxu0 0
  %576 = vmatprep.subr.bf16.mxu0 0
  %577 = vmatpush1.bf16.msra.mxu0 0
  %578 = vmatprep.subr.bf16.mxu0 0
  %579 = vmatpush1.bf16.msra.mxu0 0
  %580 = vmatprep.subr.bf16.mxu0 0
  %581 = vmatpush1.bf16.msra.mxu0 0
  %582 = vmatprep.subr.bf16.mxu0 0
  %583 = vmatpush1.bf16.msra.mxu0 %v154
  %584 = vmatprep.subr.bf16.mxu0 0
  %585 = vmatpush1.bf16.msra.mxu0 %v153
  %586 = vmatprep.subr.bf16.mxu0 0
  %587 = vmatpush2.bf16.msra.mxu0 0
  %588 = vmatprep.subr.bf16.mxu0 0
  %589 = vmatpush2.bf16.msra.mxu0 0
  %590 = vmatprep.subr.bf16.mxu0 0
  %591 = vmatpush2.bf16.msra.mxu0 0
  %592 = vmatprep.subr.bf16.mxu0 0
  %593 = vmatpush2.bf16.msra.mxu0 0
  %594 = vmatprep.subr.bf16.mxu0 0
  %595 = vmatpush2.bf16.msra.mxu0 0
  %596 = vmatprep.subr.bf16.mxu0 0
  %597 = vmatpush2.bf16.msra.mxu0 0
  %598 = vmatprep.subr.bf16.mxu0 0
  %599 = vmatpush2.bf16.msra.mxu0 0
  %600 = vmatprep.subr.bf16.mxu0 0
  %601 = vmatpush2.bf16.msra.mxu0 0
  %602 = vmatprep.mubr.bf16.mxu0 0
  %603 = vmatmul.mubr.bf16.gmra.mxu0 %v517
  %v604 = vpop.f32.mrf.mxu0
  %v605 = vadd.f32 0.0, %v604
  %v606 = vpop.f32.mrf.mxu0
  %v607 = vpop.f32.mrf.mxu0
  %v608 = vadd.f32 0.0, %v607
  %v609 = vpop.f32.mrf.mxu0
  %610 = vmatprep.mubr.bf16.mxu0 0
  %611 = vmatmul.mubr.bf16.gmra.mxu0 %v520
  %v612 = vpop.f32.mrf.mxu0
  %v613 = vadd.f32 0.0, %v612
  %v614 = vpop.f32.mrf.mxu0
  %v615 = vpop.f32.mrf.mxu0
  %v616 = vadd.f32 0.0, %v615
  %v617 = vpop.f32.mrf.mxu0
  %618 = vmatprep.mubr.bf16.mxu0 0
  %619 = vmatmul.mubr.bf16.gmra.mxu0 %v523
  %v620 = vpop.f32.mrf.mxu0
  %v621 = vadd.f32 0.0, %v620
  %v622 = vpop.f32.mrf.mxu0
  %v623 = vpop.f32.mrf.mxu0
  %v624 = vadd.f32 0.0, %v623
  %v625 = vpop.f32.mrf.mxu0
  %626 = vmatprep.mubr.bf16.mxu0 0
  %627 = vmatmul.mubr.bf16.gmra.mxu0 %v526
  %v628 = vpop.f32.mrf.mxu0
  %v629 = vadd.f32 0.0, %v628
  %v630 = vpop.f32.mrf.mxu0
  %v631 = vpop.f32.mrf.mxu0
  %v632 = vadd.f32 0.0, %v631
  %v633 = vpop.f32.mrf.mxu0
  %634 = vmatprep.mubr.bf16.mxu0 0
  %635 = vmatmul.mubr.bf16.gmra.mxu0 %v529
  %v636 = vpop.f32.mrf.mxu0
  %v637 = vadd.f32 0.0, %v636
  %v638 = vpop.f32.mrf.mxu0
  %v639 = vpop.f32.mrf.mxu0
  %v640 = vadd.f32 0.0, %v639
  %v641 = vpop.f32.mrf.mxu0
  %642 = vmatprep.mubr.bf16.mxu0 0
  %643 = vmatmul.mubr.bf16.gmra.mxu0 %v532
  %v644 = vpop.f32.mrf.mxu0
  %v645 = vadd.f32 0.0, %v644
  %v646 = vpop.f32.mrf.mxu0
  %v647 = vpop.f32.mrf.mxu0
  %v648 = vadd.f32 0.0, %v647
  %v649 = vpop.f32.mrf.mxu0
  %650 = vmatprep.mubr.bf16.mxu0 0
  %651 = vmatmul.mubr.bf16.gmra.mxu0 %v535
  %v652 = vpop.f32.mrf.mxu0
  %v653 = vadd.f32 0.0, %v652
  %v654 = vpop.f32.mrf.mxu0
  %v655 = vpop.f32.mrf.mxu0
  %v656 = vadd.f32 0.0, %v655
  %v657 = vpop.f32.mrf.mxu0
  %658 = vmatprep.mubr.bf16.mxu0 0
  %659 = vmatmul.mubr.bf16.gmra.mxu0 %v538
  %v660 = vpop.f32.mrf.mxu0
  %v661 = vadd.f32 0.0, %v660
  %v662 = vpop.f32.mrf.mxu0
  %v663 = vpop.f32.mrf.mxu0
  %v664 = vadd.f32 0.0, %v663
  %v665 = vpop.f32.mrf.mxu0
  %666 = vmatprep.mubr.bf16.mxu0 0
  %667 = vmatmul.mubr.bf16.gmra.mxu0 %v541
  %v668 = vpop.f32.mrf.mxu0
  %v669 = vadd.f32 0.0, %v668
  %v670 = vpop.f32.mrf.mxu0
  %v671 = vpop.f32.mrf.mxu0
  %v672 = vadd.f32 0.0, %v671
  %v673 = vpop.f32.mrf.mxu0
  %674 = vmatprep.mubr.bf16.mxu0 0
  %675 = vmatmul.mubr.bf16.gmra.mxu0 %v544
  %v676 = vpop.f32.mrf.mxu0
  %v677 = vadd.f32 0.0, %v676
  %v678 = vpop.f32.mrf.mxu0
  %v679 = vpop.f32.mrf.mxu0
  %v680 = vadd.f32 0.0, %v679
  %v681 = vpop.f32.mrf.mxu0
  %682 = vmatprep.mubr.bf16.mxu0 0
  %683 = vmatmul.mubr.bf16.gmra.mxu0 %v547
  %v684 = vpop.f32.mrf.mxu0
  %v685 = vadd.f32 0.0, %v684
  %v686 = vpop.f32.mrf.mxu0
  %v687 = vpop.f32.mrf.mxu0
  %v688 = vadd.f32 0.0, %v687
  %v689 = vpop.f32.mrf.mxu0
  %690 = vmatprep.mubr.bf16.mxu0 0
  %691 = vmatmul.mubr.bf16.gmra.mxu0 %v550
  %v692 = vpop.f32.mrf.mxu0
  %v693 = vadd.f32 0.0, %v692
  %v694 = vpop.f32.mrf.mxu0
  %v695 = vpop.f32.mrf.mxu0
  %v696 = vadd.f32 0.0, %v695
  %v697 = vpop.f32.mrf.mxu0
  %698 = vmatprep.mubr.bf16.mxu0 0
  %699 = vmatmul.mubr.bf16.gmra.mxu0 %v553
  %v700 = vpop.f32.mrf.mxu0
  %v701 = vadd.f32 0.0, %v700
  %v702 = vpop.f32.mrf.mxu0
  %v703 = vpop.f32.mrf.mxu0
  %v704 = vadd.f32 0.0, %v703
  %v705 = vpop.f32.mrf.mxu0
  %706 = vmatprep.mubr.bf16.mxu0 0
  %707 = vmatmul.mubr.bf16.gmra.mxu0 %v556
  %v708 = vpop.f32.mrf.mxu0
  %v709 = vadd.f32 0.0, %v708
  %v710 = vpop.f32.mrf.mxu0
  %v711 = vpop.f32.mrf.mxu0
  %v712 = vadd.f32 0.0, %v711
  %v713 = vpop.f32.mrf.mxu0
  %714 = vmatprep.mubr.bf16.mxu0 0
  %715 = vmatmul.mubr.bf16.gmra.mxu0 %v559
  %v716 = vpop.f32.mrf.mxu0
  %v717 = vadd.f32 0.0, %v716
  %v718 = vpop.f32.mrf.mxu0
  %v719 = vpop.f32.mrf.mxu0
  %v720 = vadd.f32 0.0, %v719
  %v721 = vpop.f32.mrf.mxu0
  %722 = vmatprep.mubr.bf16.mxu0 0
  %723 = vmatmul.mubr.bf16.gmra.mxu0 %v562
  %v724 = vpop.f32.mrf.mxu0
  %v725 = vadd.f32 0.0, %v724
  %v726 = vpop.f32.mrf.mxu0
  %v727 = vpop.f32.mrf.mxu0
  %v728 = vadd.f32 0.0, %v727
  %v729 = vpop.f32.mrf.mxu0
  %730 = vmatprep.mubr.bf16.mxu0 0
  %731 = vmatmul.mubr.bf16.gmra.mxu0 %v565
  %v732 = vpop.f32.mrf.mxu0
  %v733 = vadd.f32 0.0, %v732
  %v734 = vpop.f32.mrf.mxu0
  %v735 = vpop.f32.mrf.mxu0
  %v736 = vadd.f32 0.0, %v735
  %v737 = vpop.f32.mrf.mxu0
  %738 = vmatprep.mubr.bf16.mxu0 0
  %739 = vmatmul.mubr.bf16.gmra.mxu0 %v568
  %v740 = vpop.f32.mrf.mxu0
  %v741 = vadd.f32 0.0, %v740
  %v742 = vpop.f32.mrf.mxu0
  %v743 = vpop.f32.mrf.mxu0
  %v744 = vadd.f32 0.0, %v743
  %v745 = vpop.f32.mrf.mxu0
  %746 = vdwg.mxu0
  %s747 = scalar_lea.vmem %s0, 288
  %v748 = vld [vmem:[%s747] sm:$0xf]
  %v749 = vld [vmem:[%s747 + $0x4] sm:$0xf]
  %v750 = vld [vmem:[%s747 + $0x8] sm:$0xf]
  %v751 = vld [vmem:[%s747 + $0xc] sm:$0xf]
  %v752 = vld [vmem:[%s747 + $0x10] sm:$0xf]
  %v753 = vld [vmem:[%s747 + $0x14] sm:$0xf]
  %v754 = vld [vmem:[%s747 + $0x18] sm:$0xf]
  %v755 = vld [vmem:[%s747 + $0x1c] sm:$0xf]
  %v756 = vld [vmem:[%s747 + $0x20] sm:$0xf]
  %v757 = vld [vmem:[%s747 + $0x24] sm:$0xf]
  %v758 = vld [vmem:[%s747 + $0x28] sm:$0xf]
  %v759 = vld [vmem:[%s747 + $0x2c] sm:$0xf]
  %v760 = vld [vmem:[%s747 + $0x30] sm:$0xf]
  %v761 = vld [vmem:[%s747 + $0x34] sm:$0xf]
  %v762 = vld [vmem:[%s747 + $0x38] sm:$0xf]
  %v763 = vld [vmem:[%s747 + $0x3c] sm:$0xf]
  %v764 = vld [vmem:[%s747 + $0x40] sm:$0xf]
  %v765 = vld [vmem:[%s747 + $0x44] sm:$0xf]
  %v766 = vld [vmem:[%s747 + $0x48] sm:$0xf]
  %v767 = vld [vmem:[%s747 + $0x4c] sm:$0xf]
  %v768 = vld [vmem:[%s747 + $0x50] sm:$0xf]
  %v769 = vld [vmem:[%s747 + $0x54] sm:$0xf]
  %v770 = vld [vmem:[%s747 + $0x58] sm:$0xf]
  %v771 = vld [vmem:[%s747 + $0x5c] sm:$0xf]
  %v772 = vld [vmem:[%s747 + $0x60] sm:$0xf]
  %v773 = vld [vmem:[%s747 + $0x64] sm:$0xf]
  %v774 = vld [vmem:[%s747 + $0x68] sm:$0xf]
  %v775 = vld [vmem:[%s747 + $0x6c] sm:$0xf]
  %v776 = vld [vmem:[%s747 + $0x70] sm:$0xf]
  %v777 = vld [vmem:[%s747 + $0x74] sm:$0xf]
  %v778 = vld [vmem:[%s747 + $0x78] sm:$0xf]
  %v779 = vld [vmem:[%s747 + $0x7c] sm:$0xf]
  %v780 = vld [vmem:[%s747 + $0x80] sm:$0xf]
  %v781 = vld [vmem:[%s747 + $0x84] sm:$0xf]
  %v782 = vld [vmem:[%s747 + $0x88] sm:$0xf]
  %v783 = vld [vmem:[%s747 + $0x8c] sm:$0xf]
  %v820 = vunpack.c.l.b16 %v748
  %v821 = vunpack.c.l.b16 %v749
  %v822 = vunpack.c.l.b16 %v750
  %v823 = vunpack.c.l.b16 %v751
  %v824 = vunpack.c.l.b16 %v752
  %v825 = vunpack.c.l.b16 %v753
  %v826 = vunpack.c.l.b16 %v754
  %v827 = vunpack.c.l.b16 %v755
  %v828 = vunpack.c.l.b16 %v756
  %v829 = vunpack.c.l.b16 %v757
  %v830 = vunpack.c.l.b16 %v758
  %v831 = vunpack.c.l.b16 %v759
  %v832 = vunpack.c.l.b16 %v760
  %v833 = vunpack.c.l.b16 %v761
  %v834 = vunpack.c.l.b16 %v762
  %v835 = vunpack.c.l.b16 %v763
  %v836 = vunpack.c.l.b16 %v764
  %v837 = vunpack.c.l.b16 %v765
  %v838 = vunpack.c.l.b16 %v766
  %v839 = vunpack.c.l.b16 %v767
  %v840 = vunpack.c.l.b16 %v768
  %v841 = vunpack.c.l.b16 %v769
  %v842 = vunpack.c.l.b16 %v770
  %v843 = vunpack.c.l.b16 %v771
  %v844 = vunpack.c.l.b16 %v772
  %v845 = vunpack.c.l.b16 %v773
  %v846 = vunpack.c.l.b16 %v774
  %v847 = vunpack.c.l.b16 %v775
  %v848 = vunpack.c.l.b16 %v776
  %v849 = vunpack.c.l.b16 %v777
  %v850 = vunpack.c.l.b16 %v778
  %v851 = vunpack.c.l.b16 %v779
  %v852 = vunpack.c.l.b16 %v780
  %v853 = vunpack.c.l.b16 %v781
  %v854 = vunpack.c.l.b16 %v782
  %v855 = vunpack.c.l.b16 %v783
  %v856 = vpack.c.b16 %v821, %v820
  %v857 = vpack.c.b16 %v823, %v822
  %v858 = vpack.c.b16 %v825, %v824
  %v859 = vpack.c.b16 %v827, %v826
  %v860 = vpack.c.b16 %v829, %v828
  %v861 = vpack.c.b16 %v831, %v830
  %v862 = vpack.c.b16 %v833, %v832
  %v863 = vpack.c.b16 %v835, %v834
  %v864 = vpack.c.b16 %v837, %v836
  %v865 = vpack.c.b16 %v839, %v838
  %v866 = vpack.c.b16 %v841, %v840
  %v867 = vpack.c.b16 %v843, %v842
  %v868 = vpack.c.b16 %v845, %v844
  %v869 = vpack.c.b16 %v847, %v846
  %v870 = vpack.c.b16 %v849, %v848
  %v871 = vpack.c.b16 %v851, %v850
  %v872 = vpack.c.b16 %v853, %v852
  %v873 = vpack.c.b16 %v855, %v854
  %v875 = vsel %vm157, %v856, 0
  %v878 = vsel %vm157, %v857, 0
  %v881 = vsel %vm157, %v858, 0
  %v884 = vsel %vm157, %v859, 0
  %v887 = vsel %vm157, %v860, 0
  %v890 = vsel %vm157, %v861, 0
  %v893 = vsel %vm157, %v862, 0
  %v896 = vsel %vm157, %v863, 0
  %v899 = vsel %vm157, %v864, 0
  %v902 = vsel %vm157, %v865, 0
  %v905 = vsel %vm157, %v866, 0
  %v908 = vsel %vm157, %v867, 0
  %v911 = vsel %vm157, %v868, 0
  %v914 = vsel %vm157, %v869, 0
  %v917 = vsel %vm157, %v870, 0
  %v920 = vsel %vm157, %v871, 0
  %v923 = vsel %vm157, %v872, 0
  %v926 = vsel %vm157, %v873, 0
  %928 = vmatprep.subr.bf16.mxu0 0
  %929 = vmatpush1.bf16.msra.mxu0 0
  %930 = vmatprep.subr.bf16.mxu0 0
  %931 = vmatpush1.bf16.msra.mxu0 0
  %932 = vmatprep.subr.bf16.mxu0 0
  %933 = vmatpush1.bf16.msra.mxu0 0
  %934 = vmatprep.subr.bf16.mxu0 0
  %935 = vmatpush1.bf16.msra.mxu0 0
  %936 = vmatprep.subr.bf16.mxu0 0
  %937 = vmatpush1.bf16.msra.mxu0 0
  %938 = vmatprep.subr.bf16.mxu0 0
  %939 = vmatpush1.bf16.msra.mxu0 0
  %940 = vmatprep.subr.bf16.mxu0 0
  %941 = vmatpush1.bf16.msra.mxu0 %v154
  %942 = vmatprep.subr.bf16.mxu0 0
  %943 = vmatpush1.bf16.msra.mxu0 %v153
  %944 = vmatprep.subr.bf16.mxu0 0
  %945 = vmatpush2.bf16.msra.mxu0 0
  %946 = vmatprep.subr.bf16.mxu0 0
  %947 = vmatpush2.bf16.msra.mxu0 0
  %948 = vmatprep.subr.bf16.mxu0 0
  %949 = vmatpush2.bf16.msra.mxu0 0
  %950 = vmatprep.subr.bf16.mxu0 0
  %951 = vmatpush2.bf16.msra.mxu0 0
  %952 = vmatprep.subr.bf16.mxu0 0
  %953 = vmatpush2.bf16.msra.mxu0 0
  %954 = vmatprep.subr.bf16.mxu0 0
  %955 = vmatpush2.bf16.msra.mxu0 0
  %956 = vmatprep.subr.bf16.mxu0 0
  %957 = vmatpush2.bf16.msra.mxu0 0
  %958 = vmatprep.subr.bf16.mxu0 0
  %959 = vmatpush2.bf16.msra.mxu0 0
  %960 = vmatprep.mubr.bf16.mxu0 0
  %961 = vmatmul.mubr.bf16.gmra.mxu0 %v875
  %v962 = vpop.f32.mrf.mxu0
  %v963 = vadd.f32 0.0, %v962
  %v964 = vpop.f32.mrf.mxu0
  %v965 = vpop.f32.mrf.mxu0
  %v966 = vadd.f32 0.0, %v965
  %v967 = vpop.f32.mrf.mxu0
  %968 = vmatprep.mubr.bf16.mxu0 0
  %969 = vmatmul.mubr.bf16.gmra.mxu0 %v878
  %v970 = vpop.f32.mrf.mxu0
  %v971 = vadd.f32 0.0, %v970
  %v972 = vpop.f32.mrf.mxu0
  %v973 = vpop.f32.mrf.mxu0
  %v974 = vadd.f32 0.0, %v973
  %v975 = vpop.f32.mrf.mxu0
  %976 = vmatprep.mubr.bf16.mxu0 0
  %977 = vmatmul.mubr.bf16.gmra.mxu0 %v881
  %v978 = vpop.f32.mrf.mxu0
  %v979 = vadd.f32 0.0, %v978
  %v980 = vpop.f32.mrf.mxu0
  %v981 = vpop.f32.mrf.mxu0
  %v982 = vadd.f32 0.0, %v981
  %v983 = vpop.f32.mrf.mxu0
  %984 = vmatprep.mubr.bf16.mxu0 0
  %985 = vmatmul.mubr.bf16.gmra.mxu0 %v884
  %v986 = vpop.f32.mrf.mxu0
  %v987 = vadd.f32 0.0, %v986
  %v988 = vpop.f32.mrf.mxu0
  %v989 = vpop.f32.mrf.mxu0
  %v990 = vadd.f32 0.0, %v989
  %v991 = vpop.f32.mrf.mxu0
  %992 = vmatprep.mubr.bf16.mxu0 0
  %993 = vmatmul.mubr.bf16.gmra.mxu0 %v887
  %v994 = vpop.f32.mrf.mxu0
  %v995 = vadd.f32 0.0, %v994
  %v996 = vpop.f32.mrf.mxu0
  %v997 = vpop.f32.mrf.mxu0
  %v998 = vadd.f32 0.0, %v997
  %v999 = vpop.f32.mrf.mxu0
  %1000 = vmatprep.mubr.bf16.mxu0 0
  %1001 = vmatmul.mubr.bf16.gmra.mxu0 %v890
  %v1002 = vpop.f32.mrf.mxu0
  %v1003 = vadd.f32 0.0, %v1002
  %v1004 = vpop.f32.mrf.mxu0
  %v1005 = vpop.f32.mrf.mxu0
  %v1006 = vadd.f32 0.0, %v1005
  %v1007 = vpop.f32.mrf.mxu0
  %1008 = vmatprep.mubr.bf16.mxu0 0
  %1009 = vmatmul.mubr.bf16.gmra.mxu0 %v893
  %v1010 = vpop.f32.mrf.mxu0
  %v1011 = vadd.f32 0.0, %v1010
  %v1012 = vpop.f32.mrf.mxu0
  %v1013 = vpop.f32.mrf.mxu0
  %v1014 = vadd.f32 0.0, %v1013
  %v1015 = vpop.f32.mrf.mxu0
  %1016 = vmatprep.mubr.bf16.mxu0 0
  %1017 = vmatmul.mubr.bf16.gmra.mxu0 %v896
  %v1018 = vpop.f32.mrf.mxu0
  %v1019 = vadd.f32 0.0, %v1018
  %v1020 = vpop.f32.mrf.mxu0
  %v1021 = vpop.f32.mrf.mxu0
  %v1022 = vadd.f32 0.0, %v1021
  %v1023 = vpop.f32.mrf.mxu0
  %1024 = vmatprep.mubr.bf16.mxu0 0
  %1025 = vmatmul.mubr.bf16.gmra.mxu0 %v899
  %v1026 = vpop.f32.mrf.mxu0
  %v1027 = vadd.f32 0.0, %v1026
  %v1028 = vpop.f32.mrf.mxu0
  %v1029 = vpop.f32.mrf.mxu0
  %v1030 = vadd.f32 0.0, %v1029
  %v1031 = vpop.f32.mrf.mxu0
  %1032 = vmatprep.mubr.bf16.mxu0 0
  %1033 = vmatmul.mubr.bf16.gmra.mxu0 %v902
  %v1034 = vpop.f32.mrf.mxu0
  %v1035 = vadd.f32 0.0, %v1034
  %v1036 = vpop.f32.mrf.mxu0
  %v1037 = vpop.f32.mrf.mxu0
  %v1038 = vadd.f32 0.0, %v1037
  %v1039 = vpop.f32.mrf.mxu0
  %1040 = vmatprep.mubr.bf16.mxu0 0
  %1041 = vmatmul.mubr.bf16.gmra.mxu0 %v905
  %v1042 = vpop.f32.mrf.mxu0
  %v1043 = vadd.f32 0.0, %v1042
  %v1044 = vpop.f32.mrf.mxu0
  %v1045 = vpop.f32.mrf.mxu0
  %v1046 = vadd.f32 0.0, %v1045
  %v1047 = vpop.f32.mrf.mxu0
  %1048 = vmatprep.mubr.bf16.mxu0 0
  %1049 = vmatmul.mubr.bf16.gmra.mxu0 %v908
  %v1050 = vpop.f32.mrf.mxu0
  %v1051 = vadd.f32 0.0, %v1050
  %v1052 = vpop.f32.mrf.mxu0
  %v1053 = vpop.f32.mrf.mxu0
  %v1054 = vadd.f32 0.0, %v1053
  %v1055 = vpop.f32.mrf.mxu0
  %1056 = vmatprep.mubr.bf16.mxu0 0
  %1057 = vmatmul.mubr.bf16.gmra.mxu0 %v911
  %v1058 = vpop.f32.mrf.mxu0
  %v1059 = vadd.f32 0.0, %v1058
  %v1060 = vpop.f32.mrf.mxu0
  %v1061 = vpop.f32.mrf.mxu0
  %v1062 = vadd.f32 0.0, %v1061
  %v1063 = vpop.f32.mrf.mxu0
  %1064 = vmatprep.mubr.bf16.mxu0 0
  %1065 = vmatmul.mubr.bf16.gmra.mxu0 %v914
  %v1066 = vpop.f32.mrf.mxu0
  %v1067 = vadd.f32 0.0, %v1066
  %v1068 = vpop.f32.mrf.mxu0
  %v1069 = vpop.f32.mrf.mxu0
  %v1070 = vadd.f32 0.0, %v1069
  %v1071 = vpop.f32.mrf.mxu0
  %1072 = vmatprep.mubr.bf16.mxu0 0
  %1073 = vmatmul.mubr.bf16.gmra.mxu0 %v917
  %v1074 = vpop.f32.mrf.mxu0
  %v1075 = vadd.f32 0.0, %v1074
  %v1076 = vpop.f32.mrf.mxu0
  %v1077 = vpop.f32.mrf.mxu0
  %v1078 = vadd.f32 0.0, %v1077
  %v1079 = vpop.f32.mrf.mxu0
  %1080 = vmatprep.mubr.bf16.mxu0 0
  %1081 = vmatmul.mubr.bf16.gmra.mxu0 %v920
  %v1082 = vpop.f32.mrf.mxu0
  %v1083 = vadd.f32 0.0, %v1082
  %v1084 = vpop.f32.mrf.mxu0
  %v1085 = vpop.f32.mrf.mxu0
  %v1086 = vadd.f32 0.0, %v1085
  %v1087 = vpop.f32.mrf.mxu0
  %1088 = vmatprep.mubr.bf16.mxu0 0
  %1089 = vmatmul.mubr.bf16.gmra.mxu0 %v923
  %v1090 = vpop.f32.mrf.mxu0
  %v1091 = vadd.f32 0.0, %v1090
  %v1092 = vpop.f32.mrf.mxu0
  %v1093 = vpop.f32.mrf.mxu0
  %v1094 = vadd.f32 0.0, %v1093
  %v1095 = vpop.f32.mrf.mxu0
  %1096 = vmatprep.mubr.bf16.mxu0 0
  %1097 = vmatmul.mubr.bf16.gmra.mxu0 %v926
  %v1098 = vpop.f32.mrf.mxu0
  %v1099 = vadd.f32 0.0, %v1098
  %v1100 = vpop.f32.mrf.mxu0
  %v1101 = vpop.f32.mrf.mxu0
  %v1102 = vadd.f32 0.0, %v1101
  %v1103 = vpop.f32.mrf.mxu0
  %1104 = vdwg.mxu0
  %s1105 = scalar_lea.vmem %s0, 432
  %v1106 = vld [vmem:[%s1105] sm:$0xf]
  %v1107 = vld [vmem:[%s1105 + $0x4] sm:$0xf]
  %v1108 = vld [vmem:[%s1105 + $0x8] sm:$0xf]
  %v1109 = vld [vmem:[%s1105 + $0xc] sm:$0xf]
  %v1110 = vld [vmem:[%s1105 + $0x10] sm:$0xf]
  %v1111 = vld [vmem:[%s1105 + $0x14] sm:$0xf]
  %v1112 = vld [vmem:[%s1105 + $0x18] sm:$0xf]
  %v1113 = vld [vmem:[%s1105 + $0x1c] sm:$0xf]
  %v1114 = vld [vmem:[%s1105 + $0x20] sm:$0xf]
  %v1115 = vld [vmem:[%s1105 + $0x24] sm:$0xf]
  %v1116 = vld [vmem:[%s1105 + $0x28] sm:$0xf]
  %v1117 = vld [vmem:[%s1105 + $0x2c] sm:$0xf]
  %v1118 = vld [vmem:[%s1105 + $0x30] sm:$0xf]
  %v1119 = vld [vmem:[%s1105 + $0x34] sm:$0xf]
  %v1120 = vld [vmem:[%s1105 + $0x38] sm:$0xf]
  %v1121 = vld [vmem:[%s1105 + $0x3c] sm:$0xf]
  %v1122 = vld [vmem:[%s1105 + $0x40] sm:$0xf]
  %v1123 = vld [vmem:[%s1105 + $0x44] sm:$0xf]
  %v1124 = vld [vmem:[%s1105 + $0x48] sm:$0xf]
  %v1125 = vld [vmem:[%s1105 + $0x4c] sm:$0xf]
  %v1126 = vld [vmem:[%s1105 + $0x50] sm:$0xf]
  %v1127 = vld [vmem:[%s1105 + $0x54] sm:$0xf]
  %v1128 = vld [vmem:[%s1105 + $0x58] sm:$0xf]
  %v1129 = vld [vmem:[%s1105 + $0x5c] sm:$0xf]
  %v1130 = vld [vmem:[%s1105 + $0x60] sm:$0xf]
  %v1131 = vld [vmem:[%s1105 + $0x64] sm:$0xf]
  %v1132 = vld [vmem:[%s1105 + $0x68] sm:$0xf]
  %v1133 = vld [vmem:[%s1105 + $0x6c] sm:$0xf]
  %v1134 = vld [vmem:[%s1105 + $0x70] sm:$0xf]
  %v1135 = vld [vmem:[%s1105 + $0x74] sm:$0xf]
  %v1136 = vld [vmem:[%s1105 + $0x78] sm:$0xf]
  %v1137 = vld [vmem:[%s1105 + $0x7c] sm:$0xf]
  %v1138 = vld [vmem:[%s1105 + $0x80] sm:$0xf]
  %v1139 = vld [vmem:[%s1105 + $0x84] sm:$0xf]
  %v1140 = vld [vmem:[%s1105 + $0x88] sm:$0xf]
  %v1141 = vld [vmem:[%s1105 + $0x8c] sm:$0xf]
  %v1178 = vunpack.c.l.b16 %v1106
  %v1179 = vunpack.c.l.b16 %v1107
  %v1180 = vunpack.c.l.b16 %v1108
  %v1181 = vunpack.c.l.b16 %v1109
  %v1182 = vunpack.c.l.b16 %v1110
  %v1183 = vunpack.c.l.b16 %v1111
  %v1184 = vunpack.c.l.b16 %v1112
  %v1185 = vunpack.c.l.b16 %v1113
  %v1186 = vunpack.c.l.b16 %v1114
  %v1187 = vunpack.c.l.b16 %v1115
  %v1188 = vunpack.c.l.b16 %v1116
  %v1189 = vunpack.c.l.b16 %v1117
  %v1190 = vunpack.c.l.b16 %v1118
  %v1191 = vunpack.c.l.b16 %v1119
  %v1192 = vunpack.c.l.b16 %v1120
  %v1193 = vunpack.c.l.b16 %v1121
  %v1194 = vunpack.c.l.b16 %v1122
  %v1195 = vunpack.c.l.b16 %v1123
  %v1196 = vunpack.c.l.b16 %v1124
  %v1197 = vunpack.c.l.b16 %v1125
  %v1198 = vunpack.c.l.b16 %v1126
  %v1199 = vunpack.c.l.b16 %v1127
  %v1200 = vunpack.c.l.b16 %v1128
  %v1201 = vunpack.c.l.b16 %v1129
  %v1202 = vunpack.c.l.b16 %v1130
  %v1203 = vunpack.c.l.b16 %v1131
  %v1204 = vunpack.c.l.b16 %v1132
  %v1205 = vunpack.c.l.b16 %v1133
  %v1206 = vunpack.c.l.b16 %v1134
  %v1207 = vunpack.c.l.b16 %v1135
  %v1208 = vunpack.c.l.b16 %v1136
  %v1209 = vunpack.c.l.b16 %v1137
  %v1210 = vunpack.c.l.b16 %v1138
  %v1211 = vunpack.c.l.b16 %v1139
  %v1212 = vunpack.c.l.b16 %v1140
  %v1213 = vunpack.c.l.b16 %v1141
  %v1214 = vpack.c.b16 %v1179, %v1178
  %v1215 = vpack.c.b16 %v1181, %v1180
  %v1216 = vpack.c.b16 %v1183, %v1182
  %v1217 = vpack.c.b16 %v1185, %v1184
  %v1218 = vpack.c.b16 %v1187, %v1186
  %v1219 = vpack.c.b16 %v1189, %v1188
  %v1220 = vpack.c.b16 %v1191, %v1190
  %v1221 = vpack.c.b16 %v1193, %v1192
  %v1222 = vpack.c.b16 %v1195, %v1194
  %v1223 = vpack.c.b16 %v1197, %v1196
  %v1224 = vpack.c.b16 %v1199, %v1198
  %v1225 = vpack.c.b16 %v1201, %v1200
  %v1226 = vpack.c.b16 %v1203, %v1202
  %v1227 = vpack.c.b16 %v1205, %v1204
  %v1228 = vpack.c.b16 %v1207, %v1206
  %v1229 = vpack.c.b16 %v1209, %v1208
  %v1230 = vpack.c.b16 %v1211, %v1210
  %v1231 = vpack.c.b16 %v1213, %v1212
  %v1233 = vsel %vm157, %v1214, 0
  %v1236 = vsel %vm157, %v1215, 0
  %v1239 = vsel %vm157, %v1216, 0
  %v1242 = vsel %vm157, %v1217, 0
  %v1245 = vsel %vm157, %v1218, 0
  %v1248 = vsel %vm157, %v1219, 0
  %v1251 = vsel %vm157, %v1220, 0
  %v1254 = vsel %vm157, %v1221, 0
  %v1257 = vsel %vm157, %v1222, 0
  %v1260 = vsel %vm157, %v1223, 0
  %v1263 = vsel %vm157, %v1224, 0
  %v1266 = vsel %vm157, %v1225, 0
  %v1269 = vsel %vm157, %v1226, 0
  %v1272 = vsel %vm157, %v1227, 0
  %v1275 = vsel %vm157, %v1228, 0
  %v1278 = vsel %vm157, %v1229, 0
  %v1281 = vsel %vm157, %v1230, 0
  %v1284 = vsel %vm157, %v1231, 0
  %1286 = vmatprep.subr.bf16.mxu0 0
  %1287 = vmatpush1.bf16.msra.mxu0 0
  %1288 = vmatprep.subr.bf16.mxu0 0
  %1289 = vmatpush1.bf16.msra.mxu0 0
  %1290 = vmatprep.subr.bf16.mxu0 0
  %1291 = vmatpush1.bf16.msra.mxu0 0
  %1292 = vmatprep.subr.bf16.mxu0 0
  %1293 = vmatpush1.bf16.msra.mxu0 0
  %1294 = vmatprep.subr.bf16.mxu0 0
  %1295 = vmatpush1.bf16.msra.mxu0 0
  %1296 = vmatprep.subr.bf16.mxu0 0
  %1297 = vmatpush1.bf16.msra.mxu0 0
  %1298 = vmatprep.subr.bf16.mxu0 0
  %1299 = vmatpush1.bf16.msra.mxu0 %v154
  %1300 = vmatprep.subr.bf16.mxu0 0
  %1301 = vmatpush1.bf16.msra.mxu0 %v153
  %1302 = vmatprep.subr.bf16.mxu0 0
  %1303 = vmatpush2.bf16.msra.mxu0 0
  %1304 = vmatprep.subr.bf16.mxu0 0
  %1305 = vmatpush2.bf16.msra.mxu0 0
  %1306 = vmatprep.subr.bf16.mxu0 0
  %1307 = vmatpush2.bf16.msra.mxu0 0
  %1308 = vmatprep.subr.bf16.mxu0 0
  %1309 = vmatpush2.bf16.msra.mxu0 0
  %1310 = vmatprep.subr.bf16.mxu0 0
  %1311 = vmatpush2.bf16.msra.mxu0 0
  %1312 = vmatprep.subr.bf16.mxu0 0
  %1313 = vmatpush2.bf16.msra.mxu0 0
  %1314 = vmatprep.subr.bf16.mxu0 0
  %1315 = vmatpush2.bf16.msra.mxu0 0
  %1316 = vmatprep.subr.bf16.mxu0 0
  %1317 = vmatpush2.bf16.msra.mxu0 0
  %1318 = vmatprep.mubr.bf16.mxu0 0
  %1319 = vmatmul.mubr.bf16.gmra.mxu0 %v1233
  %v1320 = vpop.f32.mrf.mxu0
  %v1321 = vadd.f32 0.0, %v1320
  %v1322 = vpop.f32.mrf.mxu0
  %v1323 = vpop.f32.mrf.mxu0
  %v1324 = vadd.f32 0.0, %v1323
  %v1325 = vpop.f32.mrf.mxu0
  %1326 = vmatprep.mubr.bf16.mxu0 0
  %1327 = vmatmul.mubr.bf16.gmra.mxu0 %v1236
  %v1328 = vpop.f32.mrf.mxu0
  %v1329 = vadd.f32 0.0, %v1328
  %v1330 = vpop.f32.mrf.mxu0
  %v1331 = vpop.f32.mrf.mxu0
  %v1332 = vadd.f32 0.0, %v1331
  %v1333 = vpop.f32.mrf.mxu0
  %1334 = vmatprep.mubr.bf16.mxu0 0
  %1335 = vmatmul.mubr.bf16.gmra.mxu0 %v1239
  %v1336 = vpop.f32.mrf.mxu0
  %v1337 = vadd.f32 0.0, %v1336
  %v1338 = vpop.f32.mrf.mxu0
  %v1339 = vpop.f32.mrf.mxu0
  %v1340 = vadd.f32 0.0, %v1339
  %v1341 = vpop.f32.mrf.mxu0
  %1342 = vmatprep.mubr.bf16.mxu0 0
  %1343 = vmatmul.mubr.bf16.gmra.mxu0 %v1242
  %v1344 = vpop.f32.mrf.mxu0
  %v1345 = vadd.f32 0.0, %v1344
  %v1346 = vpop.f32.mrf.mxu0
  %v1347 = vpop.f32.mrf.mxu0
  %v1348 = vadd.f32 0.0, %v1347
  %v1349 = vpop.f32.mrf.mxu0
  %1350 = vmatprep.mubr.bf16.mxu0 0
  %1351 = vmatmul.mubr.bf16.gmra.mxu0 %v1245
  %v1352 = vpop.f32.mrf.mxu0
  %v1353 = vadd.f32 0.0, %v1352
  %v1354 = vpop.f32.mrf.mxu0
  %v1355 = vpop.f32.mrf.mxu0
  %v1356 = vadd.f32 0.0, %v1355
  %v1357 = vpop.f32.mrf.mxu0
  %1358 = vmatprep.mubr.bf16.mxu0 0
  %1359 = vmatmul.mubr.bf16.gmra.mxu0 %v1248
  %v1360 = vpop.f32.mrf.mxu0
  %v1361 = vadd.f32 0.0, %v1360
  %v1362 = vpop.f32.mrf.mxu0
  %v1363 = vpop.f32.mrf.mxu0
  %v1364 = vadd.f32 0.0, %v1363
  %v1365 = vpop.f32.mrf.mxu0
  %1366 = vmatprep.mubr.bf16.mxu0 0
  %1367 = vmatmul.mubr.bf16.gmra.mxu0 %v1251
  %v1368 = vpop.f32.mrf.mxu0
  %v1369 = vadd.f32 0.0, %v1368
  %v1370 = vpop.f32.mrf.mxu0
  %v1371 = vpop.f32.mrf.mxu0
  %v1372 = vadd.f32 0.0, %v1371
  %v1373 = vpop.f32.mrf.mxu0
  %1374 = vmatprep.mubr.bf16.mxu0 0
  %1375 = vmatmul.mubr.bf16.gmra.mxu0 %v1254
  %v1376 = vpop.f32.mrf.mxu0
  %v1377 = vadd.f32 0.0, %v1376
  %v1378 = vpop.f32.mrf.mxu0
  %v1379 = vpop.f32.mrf.mxu0
  %v1380 = vadd.f32 0.0, %v1379
  %v1381 = vpop.f32.mrf.mxu0
  %1382 = vmatprep.mubr.bf16.mxu0 0
  %1383 = vmatmul.mubr.bf16.gmra.mxu0 %v1257
  %v1384 = vpop.f32.mrf.mxu0
  %v1385 = vadd.f32 0.0, %v1384
  %v1386 = vpop.f32.mrf.mxu0
  %v1387 = vpop.f32.mrf.mxu0
  %v1388 = vadd.f32 0.0, %v1387
  %v1389 = vpop.f32.mrf.mxu0
  %1390 = vmatprep.mubr.bf16.mxu0 0
  %1391 = vmatmul.mubr.bf16.gmra.mxu0 %v1260
  %v1392 = vpop.f32.mrf.mxu0
  %v1393 = vadd.f32 0.0, %v1392
  %v1394 = vpop.f32.mrf.mxu0
  %v1395 = vpop.f32.mrf.mxu0
  %v1396 = vadd.f32 0.0, %v1395
  %v1397 = vpop.f32.mrf.mxu0
  %1398 = vmatprep.mubr.bf16.mxu0 0
  %1399 = vmatmul.mubr.bf16.gmra.mxu0 %v1263
  %v1400 = vpop.f32.mrf.mxu0
  %v1401 = vadd.f32 0.0, %v1400
  %v1402 = vpop.f32.mrf.mxu0
  %v1403 = vpop.f32.mrf.mxu0
  %v1404 = vadd.f32 0.0, %v1403
  %v1405 = vpop.f32.mrf.mxu0
  %1406 = vmatprep.mubr.bf16.mxu0 0
  %1407 = vmatmul.mubr.bf16.gmra.mxu0 %v1266
  %v1408 = vpop.f32.mrf.mxu0
  %v1409 = vadd.f32 0.0, %v1408
  %v1410 = vpop.f32.mrf.mxu0
  %v1411 = vpop.f32.mrf.mxu0
  %v1412 = vadd.f32 0.0, %v1411
  %v1413 = vpop.f32.mrf.mxu0
  %1414 = vmatprep.mubr.bf16.mxu0 0
  %1415 = vmatmul.mubr.bf16.gmra.mxu0 %v1269
  %v1416 = vpop.f32.mrf.mxu0
  %v1417 = vadd.f32 0.0, %v1416
  %v1418 = vpop.f32.mrf.mxu0
  %v1419 = vpop.f32.mrf.mxu0
  %v1420 = vadd.f32 0.0, %v1419
  %v1421 = vpop.f32.mrf.mxu0
  %1422 = vmatprep.mubr.bf16.mxu0 0
  %1423 = vmatmul.mubr.bf16.gmra.mxu0 %v1272
  %v1424 = vpop.f32.mrf.mxu0
  %v1425 = vadd.f32 0.0, %v1424
  %v1426 = vpop.f32.mrf.mxu0
  %v1427 = vpop.f32.mrf.mxu0
  %v1428 = vadd.f32 0.0, %v1427
  %v1429 = vpop.f32.mrf.mxu0
  %1430 = vmatprep.mubr.bf16.mxu0 0
  %1431 = vmatmul.mubr.bf16.gmra.mxu0 %v1275
  %v1432 = vpop.f32.mrf.mxu0
  %v1433 = vadd.f32 0.0, %v1432
  %v1434 = vpop.f32.mrf.mxu0
  %v1435 = vpop.f32.mrf.mxu0
  %v1436 = vadd.f32 0.0, %v1435
  %v1437 = vpop.f32.mrf.mxu0
  %1438 = vmatprep.mubr.bf16.mxu0 0
  %1439 = vmatmul.mubr.bf16.gmra.mxu0 %v1278
  %v1440 = vpop.f32.mrf.mxu0
  %v1441 = vadd.f32 0.0, %v1440
  %v1442 = vpop.f32.mrf.mxu0
  %v1443 = vpop.f32.mrf.mxu0
  %v1444 = vadd.f32 0.0, %v1443
  %v1445 = vpop.f32.mrf.mxu0
  %1446 = vmatprep.mubr.bf16.mxu0 0
  %1447 = vmatmul.mubr.bf16.gmra.mxu0 %v1281
  %v1448 = vpop.f32.mrf.mxu0
  %v1449 = vadd.f32 0.0, %v1448
  %v1450 = vpop.f32.mrf.mxu0
  %v1451 = vpop.f32.mrf.mxu0
  %v1452 = vadd.f32 0.0, %v1451
  %v1453 = vpop.f32.mrf.mxu0
  %1454 = vmatprep.mubr.bf16.mxu0 0
  %1455 = vmatmul.mubr.bf16.gmra.mxu0 %v1284
  %v1456 = vpop.f32.mrf.mxu0
  %v1457 = vadd.f32 0.0, %v1456
  %v1458 = vpop.f32.mrf.mxu0
  %v1459 = vpop.f32.mrf.mxu0
  %v1460 = vadd.f32 0.0, %v1459
  %v1461 = vpop.f32.mrf.mxu0
  %1462 = vdwg.mxu0
  %v1463 = vmax.f32 %v247, %v605
  %v1464 = vmax.f32 %v250, %v608
  %v1465 = vmax.f32 %v255, %v613
  %v1466 = vmax.f32 %v258, %v616
  %v1467 = vmax.f32 %v263, %v621
  %v1468 = vmax.f32 %v266, %v624
  %v1469 = vmax.f32 %v271, %v629
  %v1470 = vmax.f32 %v274, %v632
  %v1471 = vmax.f32 %v279, %v637
  %v1472 = vmax.f32 %v282, %v640
  %v1473 = vmax.f32 %v287, %v645
  %v1474 = vmax.f32 %v290, %v648
  %v1475 = vmax.f32 %v295, %v653
  %v1476 = vmax.f32 %v298, %v656
  %v1477 = vmax.f32 %v303, %v661
  %v1478 = vmax.f32 %v306, %v664
  %v1479 = vmax.f32 %v311, %v669
  %v1480 = vmax.f32 %v314, %v672
  %v1481 = vmax.f32 %v319, %v677
  %v1482 = vmax.f32 %v322, %v680
  %v1483 = vmax.f32 %v327, %v685
  %v1484 = vmax.f32 %v330, %v688
  %v1485 = vmax.f32 %v335, %v693
  %v1486 = vmax.f32 %v338, %v696
  %v1487 = vmax.f32 %v343, %v701
  %v1488 = vmax.f32 %v346, %v704
  %v1489 = vmax.f32 %v351, %v709
  %v1490 = vmax.f32 %v354, %v712
  %v1491 = vmax.f32 %v359, %v717
  %v1492 = vmax.f32 %v362, %v720
  %v1493 = vmax.f32 %v367, %v725
  %v1494 = vmax.f32 %v370, %v728
  %v1495 = vmax.f32 %v375, %v733
  %v1496 = vmax.f32 %v378, %v736
  %v1497 = vmax.f32 %v383, %v741
  %v1498 = vmax.f32 %v386, %v744
  %v1499 = vmax.f32 %v963, %v1321
  %v1500 = vmax.f32 %v966, %v1324
  %v1501 = vmax.f32 %v971, %v1329
  %v1502 = vmax.f32 %v974, %v1332
  %v1503 = vmax.f32 %v979, %v1337
  %v1504 = vmax.f32 %v982, %v1340
  %v1505 = vmax.f32 %v987, %v1345
  %v1506 = vmax.f32 %v990, %v1348
  %v1507 = vmax.f32 %v995, %v1353
  %v1508 = vmax.f32 %v998, %v1356
  %v1509 = vmax.f32 %v1003, %v1361
  %v1510 = vmax.f32 %v1006, %v1364
  %v1511 = vmax.f32 %v1011, %v1369
  %v1512 = vmax.f32 %v1014, %v1372
  %v1513 = vmax.f32 %v1019, %v1377
  %v1514 = vmax.f32 %v1022, %v1380
  %v1515 = vmax.f32 %v1027, %v1385
  %v1516 = vmax.f32 %v1030, %v1388
  %v1517 = vmax.f32 %v1035, %v1393
  %v1518 = vmax.f32 %v1038, %v1396
  %v1519 = vmax.f32 %v1043, %v1401
  %v1520 = vmax.f32 %v1046, %v1404
  %v1521 = vmax.f32 %v1051, %v1409
  %v1522 = vmax.f32 %v1054, %v1412
  %v1523 = vmax.f32 %v1059, %v1417
  %v1524 = vmax.f32 %v1062, %v1420
  %v1525 = vmax.f32 %v1067, %v1425
  %v1526 = vmax.f32 %v1070, %v1428
  %v1527 = vmax.f32 %v1075, %v1433
  %v1528 = vmax.f32 %v1078, %v1436
  %v1529 = vmax.f32 %v1083, %v1441
  %v1530 = vmax.f32 %v1086, %v1444
  %v1531 = vmax.f32 %v1091, %v1449
  %v1532 = vmax.f32 %v1094, %v1452
  %v1533 = vmax.f32 %v1099, %v1457
  %v1534 = vmax.f32 %v1102, %v1460
  %v1535 = vmax.f32 %v1463, %v1499
  %v1536 = vmax.f32 %v1464, %v1500
  %v1537 = vmax.f32 %v1465, %v1501
  %v1538 = vmax.f32 %v1466, %v1502
  %v1539 = vmax.f32 %v1467, %v1503
  %v1540 = vmax.f32 %v1468, %v1504
  %v1541 = vmax.f32 %v1469, %v1505
  %v1542 = vmax.f32 %v1470, %v1506
  %v1543 = vmax.f32 %v1471, %v1507
  %v1544 = vmax.f32 %v1472, %v1508
  %v1545 = vmax.f32 %v1473, %v1509
  %v1546 = vmax.f32 %v1474, %v1510
  %v1547 = vmax.f32 %v1475, %v1511
  %v1548 = vmax.f32 %v1476, %v1512
  %v1549 = vmax.f32 %v1477, %v1513
  %v1550 = vmax.f32 %v1478, %v1514
  %v1551 = vmax.f32 %v1479, %v1515
  %v1552 = vmax.f32 %v1480, %v1516
  %v1553 = vmax.f32 %v1481, %v1517
  %v1554 = vmax.f32 %v1482, %v1518
  %v1555 = vmax.f32 %v1483, %v1519
  %v1556 = vmax.f32 %v1484, %v1520
  %v1557 = vmax.f32 %v1485, %v1521
  %v1558 = vmax.f32 %v1486, %v1522
  %v1559 = vmax.f32 %v1487, %v1523
  %v1560 = vmax.f32 %v1488, %v1524
  %v1561 = vmax.f32 %v1489, %v1525
  %v1562 = vmax.f32 %v1490, %v1526
  %v1563 = vmax.f32 %v1491, %v1527
  %v1564 = vmax.f32 %v1492, %v1528
  %v1565 = vmax.f32 %v1493, %v1529
  %v1566 = vmax.f32 %v1494, %v1530
  %v1567 = vmax.f32 %v1495, %v1531
  %v1568 = vmax.f32 %v1496, %v1532
  %v1569 = vmax.f32 %v1497, %v1533
  %v1570 = vmax.f32 %v1498, %v1534
  %v1571 = vld [vmem:[%s2] sm:$0x1]
  %v1573 = vlaneseq
  %v1574 = vshrl.u32 %v1573, 7
  %v1575 = vsub.s32 0, %v1574
  %v1576 = vrot.slane %v1571, %v1575
  %v1578 = vadd.f32 %v1535, %v1576
  %v1579 = vadd.f32 %v1536, %v1576
  %v1580 = vadd.f32 %v1537, %v1576
  %v1581 = vadd.f32 %v1538, %v1576
  %v1582 = vadd.f32 %v1539, %v1576
  %v1583 = vadd.f32 %v1540, %v1576
  %v1584 = vadd.f32 %v1541, %v1576
  %v1585 = vadd.f32 %v1542, %v1576
  %v1586 = vadd.f32 %v1543, %v1576
  %v1587 = vadd.f32 %v1544, %v1576
  %v1588 = vadd.f32 %v1545, %v1576
  %v1589 = vadd.f32 %v1546, %v1576
  %v1590 = vadd.f32 %v1547, %v1576
  %v1591 = vadd.f32 %v1548, %v1576
  %v1592 = vadd.f32 %v1549, %v1576
  %v1593 = vadd.f32 %v1550, %v1576
  %v1594 = vadd.f32 %v1551, %v1576
  %v1595 = vadd.f32 %v1552, %v1576
  %v1596 = vadd.f32 %v1553, %v1576
  %v1597 = vadd.f32 %v1554, %v1576
  %v1598 = vadd.f32 %v1555, %v1576
  %v1599 = vadd.f32 %v1556, %v1576
  %v1600 = vadd.f32 %v1557, %v1576
  %v1601 = vadd.f32 %v1558, %v1576
  %v1602 = vadd.f32 %v1559, %v1576
  %v1603 = vadd.f32 %v1560, %v1576
  %v1604 = vadd.f32 %v1561, %v1576
  %v1605 = vadd.f32 %v1562, %v1576
  %v1606 = vadd.f32 %v1563, %v1576
  %v1607 = vadd.f32 %v1564, %v1576
  %v1608 = vadd.f32 %v1565, %v1576
  %v1609 = vadd.f32 %v1566, %v1576
  %v1610 = vadd.f32 %v1567, %v1576
  %v1611 = vadd.f32 %v1568, %v1576
  %v1612 = vadd.f32 %v1569, %v1576
  %v1613 = vadd.f32 %v1570, %v1576
  %v1614 = vmax.f32 %v1578, 0.0
  %v1615 = vmax.f32 %v1579, 0.0
  %v1616 = vmax.f32 %v1580, 0.0
  %v1617 = vmax.f32 %v1581, 0.0
  %v1618 = vmax.f32 %v1582, 0.0
  %v1619 = vmax.f32 %v1583, 0.0
  %v1620 = vmax.f32 %v1584, 0.0
  %v1621 = vmax.f32 %v1585, 0.0
  %v1622 = vmax.f32 %v1586, 0.0
  %v1623 = vmax.f32 %v1587, 0.0
  %v1624 = vmax.f32 %v1588, 0.0
  %v1625 = vmax.f32 %v1589, 0.0
  %v1626 = vmax.f32 %v1590, 0.0
  %v1627 = vmax.f32 %v1591, 0.0
  %v1628 = vmax.f32 %v1592, 0.0
  %v1629 = vmax.f32 %v1593, 0.0
  %v1630 = vmax.f32 %v1594, 0.0
  %v1631 = vmax.f32 %v1595, 0.0
  %v1632 = vmax.f32 %v1596, 0.0
  %v1633 = vmax.f32 %v1597, 0.0
  %v1634 = vmax.f32 %v1598, 0.0
  %v1635 = vmax.f32 %v1599, 0.0
  %v1636 = vmax.f32 %v1600, 0.0
  %v1637 = vmax.f32 %v1601, 0.0
  %v1638 = vmax.f32 %v1602, 0.0
  %v1639 = vmax.f32 %v1603, 0.0
  %v1640 = vmax.f32 %v1604, 0.0
  %v1641 = vmax.f32 %v1605, 0.0
  %v1642 = vmax.f32 %v1606, 0.0
  %v1643 = vmax.f32 %v1607, 0.0
  %v1644 = vmax.f32 %v1608, 0.0
  %v1645 = vmax.f32 %v1609, 0.0
  %v1646 = vmax.f32 %v1610, 0.0
  %v1647 = vmax.f32 %v1611, 0.0
  %v1648 = vmax.f32 %v1612, 0.0
  %v1649 = vmax.f32 %v1613, 0.0
  %v1650 = vpack.c.bf16 %v1615, %v1614
  %v1651 = vpack.c.bf16 %v1617, %v1616
  %v1652 = vpack.c.bf16 %v1619, %v1618
  %v1653 = vpack.c.bf16 %v1621, %v1620
  %v1654 = vpack.c.bf16 %v1623, %v1622
  %v1655 = vpack.c.bf16 %v1625, %v1624
  %v1656 = vpack.c.bf16 %v1627, %v1626
  %v1657 = vpack.c.bf16 %v1629, %v1628
  %v1658 = vpack.c.bf16 %v1631, %v1630
  %v1659 = vpack.c.bf16 %v1633, %v1632
  %v1660 = vpack.c.bf16 %v1635, %v1634
  %v1661 = vpack.c.bf16 %v1637, %v1636
  %v1662 = vpack.c.bf16 %v1639, %v1638
  %v1663 = vpack.c.bf16 %v1641, %v1640
  %v1664 = vpack.c.bf16 %v1643, %v1642
  %v1665 = vpack.c.bf16 %v1645, %v1644
  %v1666 = vpack.c.bf16 %v1647, %v1646
  %v1667 = vpack.c.bf16 %v1649, %v1648
  %v1686 = vunpack.c.l.b16 %v1650
  %v1687 = vunpack.c.h.b16 %v1650
  %v1688 = vunpack.c.l.b16 %v1651
  %v1689 = vunpack.c.h.b16 %v1651
  %v1690 = vunpack.c.l.b16 %v1652
  %v1691 = vunpack.c.h.b16 %v1652
  %v1692 = vunpack.c.l.b16 %v1653
  %v1693 = vunpack.c.h.b16 %v1653
  %v1694 = vunpack.c.l.b16 %v1654
  %v1695 = vunpack.c.h.b16 %v1654
  %v1696 = vunpack.c.l.b16 %v1655
  %v1697 = vunpack.c.h.b16 %v1655
  %v1698 = vunpack.c.l.b16 %v1656
  %v1699 = vunpack.c.h.b16 %v1656
  %v1700 = vunpack.c.l.b16 %v1657
  %v1701 = vunpack.c.h.b16 %v1657
  %v1702 = vunpack.c.l.b16 %v1658
  %v1703 = vunpack.c.h.b16 %v1658
  %v1704 = vunpack.c.l.b16 %v1659
  %v1705 = vunpack.c.h.b16 %v1659
  %v1706 = vunpack.c.l.b16 %v1660
  %v1707 = vunpack.c.h.b16 %v1660
  %v1708 = vunpack.c.l.b16 %v1661
  %v1709 = vunpack.c.h.b16 %v1661
  %v1710 = vunpack.c.l.b16 %v1662
  %v1711 = vunpack.c.h.b16 %v1662
  %v1712 = vunpack.c.l.b16 %v1663
  %v1713 = vunpack.c.h.b16 %v1663
  %v1714 = vunpack.c.l.b16 %v1664
  %v1715 = vunpack.c.h.b16 %v1664
  %v1716 = vunpack.c.l.b16 %v1665
  %v1717 = vunpack.c.h.b16 %v1665
  %v1718 = vunpack.c.l.b16 %v1666
  %v1719 = vunpack.c.h.b16 %v1666
  %v1720 = vunpack.c.l.b16 %v1667
  %v1721 = vunpack.c.h.b16 %v1667
  %v1722 = vpack.c.b16 %v1686, %v1686
  %v1723 = vpack.c.b16 %v1687, %v1687
  %v1724 = vpack.c.b16 %v1688, %v1688
  %v1725 = vpack.c.b16 %v1689, %v1689
  %v1726 = vpack.c.b16 %v1690, %v1690
  %v1727 = vpack.c.b16 %v1691, %v1691
  %v1728 = vpack.c.b16 %v1692, %v1692
  %v1729 = vpack.c.b16 %v1693, %v1693
  %v1730 = vpack.c.b16 %v1694, %v1694
  %v1731 = vpack.c.b16 %v1695, %v1695
  %v1732 = vpack.c.b16 %v1696, %v1696
  %v1733 = vpack.c.b16 %v1697, %v1697
  %v1734 = vpack.c.b16 %v1698, %v1698
  %v1735 = vpack.c.b16 %v1699, %v1699
  %v1736 = vpack.c.b16 %v1700, %v1700
  %v1737 = vpack.c.b16 %v1701, %v1701
  %v1738 = vpack.c.b16 %v1702, %v1702
  %v1739 = vpack.c.b16 %v1703, %v1703
  %v1740 = vpack.c.b16 %v1704, %v1704
  %v1741 = vpack.c.b16 %v1705, %v1705
  %v1742 = vpack.c.b16 %v1706, %v1706
  %v1743 = vpack.c.b16 %v1707, %v1707
  %v1744 = vpack.c.b16 %v1708, %v1708
  %v1745 = vpack.c.b16 %v1709, %v1709
  %v1746 = vpack.c.b16 %v1710, %v1710
  %v1747 = vpack.c.b16 %v1711, %v1711
  %v1748 = vpack.c.b16 %v1712, %v1712
  %v1749 = vpack.c.b16 %v1713, %v1713
  %v1750 = vpack.c.b16 %v1714, %v1714
  %v1751 = vpack.c.b16 %v1715, %v1715
  %v1752 = vpack.c.b16 %v1716, %v1716
  %v1753 = vpack.c.b16 %v1717, %v1717
  %v1754 = vpack.c.b16 %v1718, %v1718
  %v1755 = vpack.c.b16 %v1719, %v1719
  %v1756 = vpack.c.b16 %v1720, %v1720
  %v1757 = vpack.c.b16 %v1721, %v1721
  %1794 = vst [vmem:[%s3] sm:$0xf] %v1722
  %1795 = vst [vmem:[%s3 + $0x4] sm:$0xf] %v1723
  %1796 = vst [vmem:[%s3 + $0x8] sm:$0xf] %v1724
  %1797 = vst [vmem:[%s3 + $0xc] sm:$0xf] %v1725
  %1798 = vst [vmem:[%s3 + $0x10] sm:$0xf] %v1726
  %1799 = vst [vmem:[%s3 + $0x14] sm:$0xf] %v1727
  %1800 = vst [vmem:[%s3 + $0x18] sm:$0xf] %v1728
  %1801 = vst [vmem:[%s3 + $0x1c] sm:$0xf] %v1729
  %1802 = vst [vmem:[%s3 + $0x20] sm:$0xf] %v1730
  %1803 = vst [vmem:[%s3 + $0x24] sm:$0xf] %v1731
  %1804 = vst [vmem:[%s3 + $0x28] sm:$0xf] %v1732
  %1805 = vst [vmem:[%s3 + $0x2c] sm:$0xf] %v1733
  %1806 = vst [vmem:[%s3 + $0x30] sm:$0xf] %v1734
  %1807 = vst [vmem:[%s3 + $0x34] sm:$0xf] %v1735
  %1808 = vst [vmem:[%s3 + $0x38] sm:$0xf] %v1736
  %1809 = vst [vmem:[%s3 + $0x3c] sm:$0xf] %v1737
  %1810 = vst [vmem:[%s3 + $0x40] sm:$0xf] %v1738
  %1811 = vst [vmem:[%s3 + $0x44] sm:$0xf] %v1739
  %1812 = vst [vmem:[%s3 + $0x48] sm:$0xf] %v1740
  %1813 = vst [vmem:[%s3 + $0x4c] sm:$0xf] %v1741
  %1814 = vst [vmem:[%s3 + $0x50] sm:$0xf] %v1742
  %1815 = vst [vmem:[%s3 + $0x54] sm:$0xf] %v1743
  %1816 = vst [vmem:[%s3 + $0x58] sm:$0xf] %v1744
  %1817 = vst [vmem:[%s3 + $0x5c] sm:$0xf] %v1745
  %1818 = vst [vmem:[%s3 + $0x60] sm:$0xf] %v1746
  %1819 = vst [vmem:[%s3 + $0x64] sm:$0xf] %v1747
  %1820 = vst [vmem:[%s3 + $0x68] sm:$0xf] %v1748
  %1821 = vst [vmem:[%s3 + $0x6c] sm:$0xf] %v1749
  %1822 = vst [vmem:[%s3 + $0x70] sm:$0xf] %v1750
  %1823 = vst [vmem:[%s3 + $0x74] sm:$0xf] %v1751
  %1824 = vst [vmem:[%s3 + $0x78] sm:$0xf] %v1752
  %1825 = vst [vmem:[%s3 + $0x7c] sm:$0xf] %v1753
  %1826 = vst [vmem:[%s3 + $0x80] sm:$0xf] %v1754
  %1827 = vst [vmem:[%s3 + $0x84] sm:$0xf] %v1755
  %1828 = vst [vmem:[%s3 + $0x88] sm:$0xf] %v1756
  %1829 = vst [vmem:[%s3 + $0x8c] sm:$0xf] %v1757
  // Predicated region
  $region14: #{net_forward.3} parent=0 // pred_check
    _
  $region15: #{net_forward.3} parent=0 // pred_check_branch
    %1831 = sbr.rel (0) target = $region17
  $region16: #{net_forward.3} parent=0 // pred_region
    _
  $region17: #{net_forward.3} parent=0 // pred_fallthru
    _
  // Predicated region
  $region18: #{net_forward.3} parent=0 // pred_check
    _
  $region19: #{net_forward.3} parent=0 // pred_check_branch
    %1833 = sbr.rel (0) target = $region21
  $region20: #{net_forward.3} parent=0 // pred_region
    _
  $region21: #{net_forward.3} parent=0 // pred_fallthru
    _

// kernel: net_forward.4
$region0: #{net_forward.4}
  #allocation0 [shape = 'u32[]', space=smem, size = 0x4, offset = 0x4, fixed_abs, tag = 'smem constant byte address 0x4 - core index']
  #allocation1 [shape = 'u32[144,128]{1,0:T(1,128)}', space=vmem, size = 0x12000, scoped, tag = 'internal scratch']
  %s0 = inlined_call_operand.vmem [shape: bf16[4,32,512], index: 0, kind: input, shape index: {}]
  %s1 = inlined_call_operand.vmem [shape: bf16[512,128], index: 1, kind: input, shape index: {}]
  %s2 = inlined_call_operand.vmem [shape: f32[1,128], index: 2, kind: input, shape index: {}]
  %s3 = inlined_call_operand.vmem [shape: bf16[32,128], index: 3, kind: output, shape index: {}]
  %s4 = sld [smem:[#allocation0]]
  $region22: #{net_forward.4} parent=0
    _
  %s6 = ssub.s32 1, %s4
  %s7 = scalar_select 0, %s6, %s4
  // Predicated region
  $region2: #{net_forward.4} parent=0 // pred_check
    _
  $region3: #{net_forward.4} parent=0 // pred_check_branch
    %9 = sbr.rel (0) target = $region5
  $region4: #{net_forward.4} parent=0 // pred_region
    _
  $region5: #{net_forward.4} parent=0 // pred_fallthru
    _
  // Predicated region
  $region6: #{net_forward.4} parent=0 // pred_check
    _
  $region7: #{net_forward.4} parent=0 // pred_check_branch
    %11 = sbr.rel (0) target = $region9
  $region8: #{net_forward.4} parent=0 // pred_region
    _
  $region9: #{net_forward.4} parent=0 // pred_fallthru
    _
  // Predicated region
  $region10: #{net_forward.4} parent=0 // pred_check
    _
  $region11: #{net_forward.4} parent=0 // pred_check_branch
    %13 = sbr.rel (0) target = $region13
  $region12: #{net_forward.4} parent=0 // pred_region
    _
  $region13: #{net_forward.4} parent=0 // pred_fallthru
    _
  %v15 = vld [vmem:[%s1] sm:$0xf]
  %v16 = vld [vmem:[%s1 + $0x4] sm:$0xf]
  %v17 = vld [vmem:[%s1 + $0x8] sm:$0xf]
  %v18 = vld [vmem:[%s1 + $0xc] sm:$0xf]
  %v19 = vld [vmem:[%s1 + $0x10] sm:$0xf]
  %v20 = vld [vmem:[%s1 + $0x14] sm:$0xf]
  %v21 = vld [vmem:[%s1 + $0x18] sm:$0xf]
  %v22 = vld [vmem:[%s1 + $0x1c] sm:$0xf]
  %v23 = vld [vmem:[%s1 + $0x20] sm:$0xf]
  %v24 = vld [vmem:[%s1 + $0x24] sm:$0xf]
  %v25 = vld [vmem:[%s1 + $0x28] sm:$0xf]
  %v26 = vld [vmem:[%s1 + $0x2c] sm:$0xf]
  %v27 = vld [vmem:[%s1 + $0x30] sm:$0xf]
  %v28 = vld [vmem:[%s1 + $0x34] sm:$0xf]
  %v29 = vld [vmem:[%s1 + $0x38] sm:$0xf]
  %v30 = vld [vmem:[%s1 + $0x3c] sm:$0xf]
  %v31 = vld [vmem:[%s1 + $0x40] sm:$0xf]
  %v32 = vld [vmem:[%s1 + $0x44] sm:$0xf]
  %v33 = vld [vmem:[%s1 + $0x48] sm:$0xf]
  %v34 = vld [vmem:[%s1 + $0x4c] sm:$0xf]
  %v35 = vld [vmem:[%s1 + $0x50] sm:$0xf]
  %v36 = vld [vmem:[%s1 + $0x54] sm:$0xf]
  %v37 = vld [vmem:[%s1 + $0x58] sm:$0xf]
  %v38 = vld [vmem:[%s1 + $0x5c] sm:$0xf]
  %v39 = vld [vmem:[%s1 + $0x60] sm:$0xf]
  %v40 = vld [vmem:[%s1 + $0x64] sm:$0xf]
  %v41 = vld [vmem:[%s1 + $0x68] sm:$0xf]
  %v42 = vld [vmem:[%s1 + $0x6c] sm:$0xf]
  %v43 = vld [vmem:[%s1 + $0x70] sm:$0xf]
  %v44 = vld [vmem:[%s1 + $0x74] sm:$0xf]
  %v45 = vld [vmem:[%s1 + $0x78] sm:$0xf]
  %v46 = vld [vmem:[%s1 + $0x7c] sm:$0xf]
  %v47 = vld [vmem:[%s1 + $0x80] sm:$0xf]
  %v48 = vld [vmem:[%s1 + $0x84] sm:$0xf]
  %v49 = vld [vmem:[%s1 + $0x88] sm:$0xf]
  %v50 = vld [vmem:[%s1 + $0x8c] sm:$0xf]
  %v51 = vld [vmem:[%s1 + $0x90] sm:$0xf]
  %v52 = vld [vmem:[%s1 + $0x94] sm:$0xf]
  %v53 = vld [vmem:[%s1 + $0x98] sm:$0xf]
  %v54 = vld [vmem:[%s1 + $0x9c] sm:$0xf]
  %v55 = vld [vmem:[%s1 + $0xa0] sm:$0xf]
  %v56 = vld [vmem:[%s1 + $0xa4] sm:$0xf]
  %v57 = vld [vmem:[%s1 + $0xa8] sm:$0xf]
  %v58 = vld [vmem:[%s1 + $0xac] sm:$0xf]
  %v59 = vld [vmem:[%s1 + $0xb0] sm:$0xf]
  %v60 = vld [vmem:[%s1 + $0xb4] sm:$0xf]
  %v61 = vld [vmem:[%s1 + $0xb8] sm:$0xf]
  %v62 = vld [vmem:[%s1 + $0xbc] sm:$0xf]
  %v63 = vld [vmem:[%s1 + $0xc0] sm:$0xf]
  %v64 = vld [vmem:[%s1 + $0xc4] sm:$0xf]
  %v65 = vld [vmem:[%s1 + $0xc8] sm:$0xf]
  %v66 = vld [vmem:[%s1 + $0xcc] sm:$0xf]
  %v67 = vld [vmem:[%s1 + $0xd0] sm:$0xf]
  %v68 = vld [vmem:[%s1 + $0xd4] sm:$0xf]
  %v69 = vld [vmem:[%s1 + $0xd8] sm:$0xf]
  %v70 = vld [vmem:[%s1 + $0xdc] sm:$0xf]
  %v71 = vld [vmem:[%s1 + $0xe0] sm:$0xf]
  %v72 = vld [vmem:[%s1 + $0xe4] sm:$0xf]
  %v73 = vld [vmem:[%s1 + $0xe8] sm:$0xf]
  %v74 = vld [vmem:[%s1 + $0xec] sm:$0xf]
  %v75 = vld [vmem:[%s1 + $0xf0] sm:$0xf]
  %v76 = vld [vmem:[%s1 + $0xf4] sm:$0xf]
  %v77 = vld [vmem:[%s1 + $0xf8] sm:$0xf]
  %v78 = vld [vmem:[%s1 + $0xfc] sm:$0xf]
  %v79 = vld [vmem:[%s0] sm:$0xff]
  %v80 = vld [vmem:[%s0 + $0x8] sm:$0xff]
  %v81 = vld [vmem:[%s0 + $0x10] sm:$0xff]
  %v82 = vld [vmem:[%s0 + $0x18] sm:$0xff]
  %v83 = vld [vmem:[%s0 + $0x20] sm:$0xff]
  %v84 = vld [vmem:[%s0 + $0x28] sm:$0xff]
  %v85 = vld [vmem:[%s0 + $0x30] sm:$0xff]
  %v86 = vld [vmem:[%s0 + $0x38] sm:$0xff]
  %v95 = vunpack.c.l.b16 %v79
  %v96 = vunpack.c.h.b16 %v79
  %v97 = vunpack.c.l.b16 %v80
  %v98 = vunpack.c.h.b16 %v80
  %v99 = vunpack.c.l.b16 %v81
  %v100 = vunpack.c.h.b16 %v81
  %v101 = vunpack.c.l.b16 %v82
  %v102 = vunpack.c.h.b16 %v82
  %v103 = vunpack.c.l.b16 %v83
  %v104 = vunpack.c.h.b16 %v83
  %v105 = vunpack.c.l.b16 %v84
  %v106 = vunpack.c.h.b16 %v84
  %v107 = vunpack.c.l.b16 %v85
  %v108 = vunpack.c.h.b16 %v85
  %v109 = vunpack.c.l.b16 %v86
  %v110 = vunpack.c.h.b16 %v86
  %v111 = vpack.c.b16 %v99, %v95
  %v112 = vpack.c.b16 %v100, %v96
  %v113 = vpack.c.b16 %v101, %v97
  %v114 = vpack.c.b16 %v102, %v98
  %v115 = vpack.c.b16 %v107, %v103
  %v116 = vpack.c.b16 %v108, %v104
  %v117 = vpack.c.b16 %v109, %v105
  %v118 = vpack.c.b16 %v110, %v106
  %v191 = vunpack.c.l.b16 %v15
  %v192 = vunpack.c.l.b16 %v16
  %v193 = vunpack.c.l.b16 %v17
  %v194 = vunpack.c.l.b16 %v18
  %v195 = vunpack.c.l.b16 %v19
  %v196 = vunpack.c.l.b16 %v20
  %v197 = vunpack.c.l.b16 %v21
  %v198 = vunpack.c.l.b16 %v22
  %v199 = vunpack.c.l.b16 %v23
  %v200 = vunpack.c.l.b16 %v24
  %v201 = vunpack.c.l.b16 %v25
  %v202 = vunpack.c.l.b16 %v26
  %v203 = vunpack.c.l.b16 %v27
  %v204 = vunpack.c.l.b16 %v28
  %v205 = vunpack.c.l.b16 %v29
  %v206 = vunpack.c.l.b16 %v30
  %v207 = vunpack.c.l.b16 %v31
  %v208 = vunpack.c.l.b16 %v32
  %v209 = vunpack.c.l.b16 %v33
  %v210 = vunpack.c.l.b16 %v34
  %v211 = vunpack.c.l.b16 %v35
  %v212 = vunpack.c.l.b16 %v36
  %v213 = vunpack.c.l.b16 %v37
  %v214 = vunpack.c.l.b16 %v38
  %v215 = vunpack.c.l.b16 %v39
  %v216 = vunpack.c.l.b16 %v40
  %v217 = vunpack.c.l.b16 %v41
  %v218 = vunpack.c.l.b16 %v42
  %v219 = vunpack.c.l.b16 %v43
  %v220 = vunpack.c.l.b16 %v44
  %v221 = vunpack.c.l.b16 %v45
  %v222 = vunpack.c.l.b16 %v46
  %v223 = vunpack.c.l.b16 %v47
  %v224 = vunpack.c.l.b16 %v48
  %v225 = vunpack.c.l.b16 %v49
  %v226 = vunpack.c.l.b16 %v50
  %v227 = vunpack.c.l.b16 %v51
  %v228 = vunpack.c.l.b16 %v52
  %v229 = vunpack.c.l.b16 %v53
  %v230 = vunpack.c.l.b16 %v54
  %v231 = vunpack.c.l.b16 %v55
  %v232 = vunpack.c.l.b16 %v56
  %v233 = vunpack.c.l.b16 %v57
  %v234 = vunpack.c.l.b16 %v58
  %v235 = vunpack.c.l.b16 %v59
  %v236 = vunpack.c.l.b16 %v60
  %v237 = vunpack.c.l.b16 %v61
  %v238 = vunpack.c.l.b16 %v62
  %v239 = vunpack.c.l.b16 %v63
  %v240 = vunpack.c.l.b16 %v64
  %v241 = vunpack.c.l.b16 %v65
  %v242 = vunpack.c.l.b16 %v66
  %v243 = vunpack.c.l.b16 %v67
  %v244 = vunpack.c.l.b16 %v68
  %v245 = vunpack.c.l.b16 %v69
  %v246 = vunpack.c.l.b16 %v70
  %v247 = vunpack.c.l.b16 %v71
  %v248 = vunpack.c.l.b16 %v72
  %v249 = vunpack.c.l.b16 %v73
  %v250 = vunpack.c.l.b16 %v74
  %v251 = vunpack.c.l.b16 %v75
  %v252 = vunpack.c.l.b16 %v76
  %v253 = vunpack.c.l.b16 %v77
  %v254 = vunpack.c.l.b16 %v78
  %v255 = vpack.c.b16 %v192, %v191
  %v256 = vpack.c.b16 %v194, %v193
  %v257 = vpack.c.b16 %v196, %v195
  %v258 = vpack.c.b16 %v198, %v197
  %v259 = vpack.c.b16 %v200, %v199
  %v260 = vpack.c.b16 %v202, %v201
  %v261 = vpack.c.b16 %v204, %v203
  %v262 = vpack.c.b16 %v206, %v205
  %v263 = vpack.c.b16 %v208, %v207
  %v264 = vpack.c.b16 %v210, %v209
  %v265 = vpack.c.b16 %v212, %v211
  %v266 = vpack.c.b16 %v214, %v213
  %v267 = vpack.c.b16 %v216, %v215
  %v268 = vpack.c.b16 %v218, %v217
  %v269 = vpack.c.b16 %v220, %v219
  %v270 = vpack.c.b16 %v222, %v221
  %v271 = vpack.c.b16 %v224, %v223
  %v272 = vpack.c.b16 %v226, %v225
  %v273 = vpack.c.b16 %v228, %v227
  %v274 = vpack.c.b16 %v230, %v229
  %v275 = vpack.c.b16 %v232, %v231
  %v276 = vpack.c.b16 %v234, %v233
  %v277 = vpack.c.b16 %v236, %v235
  %v278 = vpack.c.b16 %v238, %v237
  %v279 = vpack.c.b16 %v240, %v239
  %v280 = vpack.c.b16 %v242, %v241
  %v281 = vpack.c.b16 %v244, %v243
  %v282 = vpack.c.b16 %v246, %v245
  %v283 = vpack.c.b16 %v248, %v247
  %v284 = vpack.c.b16 %v250, %v249
  %v285 = vpack.c.b16 %v252, %v251
  %v286 = vpack.c.b16 %v254, %v253
  %319 = vmatprep.subr.bf16.mxu0 0
  %320 = vmatpush1.bf16.msra.mxu0 %v262
  %321 = vmatprep.subr.bf16.mxu0 0
  %322 = vmatpush1.bf16.msra.mxu0 %v261
  %323 = vmatprep.subr.bf16.mxu0 0
  %324 = vmatpush1.bf16.msra.mxu0 %v260
  %325 = vmatprep.subr.bf16.mxu0 0
  %326 = vmatpush1.bf16.msra.mxu0 %v259
  %327 = vmatprep.subr.bf16.mxu0 0
  %328 = vmatpush1.bf16.msra.mxu0 %v258
  %329 = vmatprep.subr.bf16.mxu0 0
  %330 = vmatpush1.bf16.msra.mxu0 %v257
  %331 = vmatprep.subr.bf16.mxu0 0
  %332 = vmatpush1.bf16.msra.mxu0 %v256
  %333 = vmatprep.subr.bf16.mxu0 0
  %334 = vmatpush1.bf16.msra.mxu0 %v255
  %335 = vmatprep.subr.bf16.mxu0 0
  %336 = vmatpush2.bf16.msra.mxu0 %v270
  %337 = vmatprep.subr.bf16.mxu0 0
  %338 = vmatpush2.bf16.msra.mxu0 %v269
  %339 = vmatprep.subr.bf16.mxu0 0
  %340 = vmatpush2.bf16.msra.mxu0 %v268
  %341 = vmatprep.subr.bf16.mxu0 0
  %342 = vmatpush2.bf16.msra.mxu0 %v267
  %343 = vmatprep.subr.bf16.mxu0 0
  %344 = vmatpush2.bf16.msra.mxu0 %v266
  %345 = vmatprep.subr.bf16.mxu0 0
  %346 = vmatpush2.bf16.msra.mxu0 %v265
  %347 = vmatprep.subr.bf16.mxu0 0
  %348 = vmatpush2.bf16.msra.mxu0 %v264
  %349 = vmatprep.subr.bf16.mxu0 0
  %350 = vmatpush2.bf16.msra.mxu0 %v263
  %351 = vmatprep.mubr.bf16.mxu0 %v112
  %352 = vmatmul.mubr.bf16.gmra.mxu0 %v111
  %v353 = vpop.f32.mrf.mxu0
  %v354 = vadd.f32 0.0, %v353
  %v355 = vpop.f32.mrf.mxu0
  %v356 = vpop.f32.mrf.mxu0
  %v357 = vadd.f32 0.0, %v356
  %v358 = vpop.f32.mrf.mxu0
  %359 = vmatprep.mubr.bf16.mxu0 %v116
  %360 = vmatmul.mubr.bf16.gmra.mxu0 %v115
  %v361 = vpop.f32.mrf.mxu0
  %v362 = vadd.f32 0.0, %v361
  %v363 = vpop.f32.mrf.mxu0
  %v364 = vpop.f32.mrf.mxu0
  %v365 = vadd.f32 0.0, %v364
  %v366 = vpop.f32.mrf.mxu0
  %367 = vdwg.mxu0
  %368 = vmatprep.subr.bf16.mxu0 0
  %369 = vmatpush1.bf16.msra.mxu0 %v278
  %370 = vmatprep.subr.bf16.mxu0 0
  %371 = vmatpush1.bf16.msra.mxu0 %v277
  %372 = vmatprep.subr.bf16.mxu0 0
  %373 = vmatpush1.bf16.msra.mxu0 %v276
  %374 = vmatprep.subr.bf16.mxu0 0
  %375 = vmatpush1.bf16.msra.mxu0 %v275
  %376 = vmatprep.subr.bf16.mxu0 0
  %377 = vmatpush1.bf16.msra.mxu0 %v274
  %378 = vmatprep.subr.bf16.mxu0 0
  %379 = vmatpush1.bf16.msra.mxu0 %v273
  %380 = vmatprep.subr.bf16.mxu0 0
  %381 = vmatpush1.bf16.msra.mxu0 %v272
  %382 = vmatprep.subr.bf16.mxu0 0
  %383 = vmatpush1.bf16.msra.mxu0 %v271
  %384 = vmatprep.subr.bf16.mxu0 0
  %385 = vmatpush2.bf16.msra.mxu0 %v286
  %386 = vmatprep.subr.bf16.mxu0 0
  %387 = vmatpush2.bf16.msra.mxu0 %v285
  %388 = vmatprep.subr.bf16.mxu0 0
  %389 = vmatpush2.bf16.msra.mxu0 %v284
  %390 = vmatprep.subr.bf16.mxu0 0
  %391 = vmatpush2.bf16.msra.mxu0 %v283
  %392 = vmatprep.subr.bf16.mxu0 0
  %393 = vmatpush2.bf16.msra.mxu0 %v282
  %394 = vmatprep.subr.bf16.mxu0 0
  %395 = vmatpush2.bf16.msra.mxu0 %v281
  %396 = vmatprep.subr.bf16.mxu0 0
  %397 = vmatpush2.bf16.msra.mxu0 %v280
  %398 = vmatprep.subr.bf16.mxu0 0
  %399 = vmatpush2.bf16.msra.mxu0 %v279
  %400 = vmatprep.mubr.bf16.mxu0 %v114
  %401 = vmatmul.mubr.bf16.gmra.mxu0 %v113
  %v402 = vpop.f32.mrf.mxu0
  %v403 = vadd.f32 %v354, %v402
  %v404 = vpop.f32.mrf.mxu0
  %v405 = vpop.f32.mrf.mxu0
  %v406 = vadd.f32 %v357, %v405
  %v407 = vpop.f32.mrf.mxu0
  %408 = vmatprep.mubr.bf16.mxu0 %v118
  %409 = vmatmul.mubr.bf16.gmra.mxu0 %v117
  %v410 = vpop.f32.mrf.mxu0
  %v411 = vadd.f32 %v362, %v410
  %v412 = vpop.f32.mrf.mxu0
  %v413 = vpop.f32.mrf.mxu0
  %v414 = vadd.f32 %v365, %v413
  %v415 = vpop.f32.mrf.mxu0
  %416 = vdwg.mxu0
  %s417 = scalar_lea.vmem %s0, 64
  %v418 = vld [vmem:[%s417] sm:$0xff]
  %v419 = vld [vmem:[%s417 + $0x8] sm:$0xff]
  %v420 = vld [vmem:[%s417 + $0x10] sm:$0xff]
  %v421 = vld [vmem:[%s417 + $0x18] sm:$0xff]
  %v422 = vld [vmem:[%s417 + $0x20] sm:$0xff]
  %v423 = vld [vmem:[%s417 + $0x28] sm:$0xff]
  %v424 = vld [vmem:[%s417 + $0x30] sm:$0xff]
  %v425 = vld [vmem:[%s417 + $0x38] sm:$0xff]
  %v434 = vunpack.c.l.b16 %v418
  %v435 = vunpack.c.h.b16 %v418
  %v436 = vunpack.c.l.b16 %v419
  %v437 = vunpack.c.h.b16 %v419
  %v438 = vunpack.c.l.b16 %v420
  %v439 = vunpack.c.h.b16 %v420
  %v440 = vunpack.c.l.b16 %v421
  %v441 = vunpack.c.h.b16 %v421
  %v442 = vunpack.c.l.b16 %v422
  %v443 = vunpack.c.h.b16 %v422
  %v444 = vunpack.c.l.b16 %v423
  %v445 = vunpack.c.h.b16 %v423
  %v446 = vunpack.c.l.b16 %v424
  %v447 = vunpack.c.h.b16 %v424
  %v448 = vunpack.c.l.b16 %v425
  %v449 = vunpack.c.h.b16 %v425
  %v450 = vpack.c.b16 %v438, %v434
  %v451 = vpack.c.b16 %v439, %v435
  %v452 = vpack.c.b16 %v440, %v436
  %v453 = vpack.c.b16 %v441, %v437
  %v454 = vpack.c.b16 %v446, %v442
  %v455 = vpack.c.b16 %v447, %v443
  %v456 = vpack.c.b16 %v448, %v444
  %v457 = vpack.c.b16 %v449, %v445
  %466 = vmatprep.subr.bf16.mxu0 0
  %467 = vmatpush1.bf16.msra.mxu0 %v262
  %468 = vmatprep.subr.bf16.mxu0 0
  %469 = vmatpush1.bf16.msra.mxu0 %v261
  %470 = vmatprep.subr.bf16.mxu0 0
  %471 = vmatpush1.bf16.msra.mxu0 %v260
  %472 = vmatprep.subr.bf16.mxu0 0
  %473 = vmatpush1.bf16.msra.mxu0 %v259
  %474 = vmatprep.subr.bf16.mxu0 0
  %475 = vmatpush1.bf16.msra.mxu0 %v258
  %476 = vmatprep.subr.bf16.mxu0 0
  %477 = vmatpush1.bf16.msra.mxu0 %v257
  %478 = vmatprep.subr.bf16.mxu0 0
  %479 = vmatpush1.bf16.msra.mxu0 %v256
  %480 = vmatprep.subr.bf16.mxu0 0
  %481 = vmatpush1.bf16.msra.mxu0 %v255
  %482 = vmatprep.subr.bf16.mxu0 0
  %483 = vmatpush2.bf16.msra.mxu0 %v270
  %484 = vmatprep.subr.bf16.mxu0 0
  %485 = vmatpush2.bf16.msra.mxu0 %v269
  %486 = vmatprep.subr.bf16.mxu0 0
  %487 = vmatpush2.bf16.msra.mxu0 %v268
  %488 = vmatprep.subr.bf16.mxu0 0
  %489 = vmatpush2.bf16.msra.mxu0 %v267
  %490 = vmatprep.subr.bf16.mxu0 0
  %491 = vmatpush2.bf16.msra.mxu0 %v266
  %492 = vmatprep.subr.bf16.mxu0 0
  %493 = vmatpush2.bf16.msra.mxu0 %v265
  %494 = vmatprep.subr.bf16.mxu0 0
  %495 = vmatpush2.bf16.msra.mxu0 %v264
  %496 = vmatprep.subr.bf16.mxu0 0
  %497 = vmatpush2.bf16.msra.mxu0 %v263
  %498 = vmatprep.mubr.bf16.mxu0 %v451
  %499 = vmatmul.mubr.bf16.gmra.mxu0 %v450
  %v500 = vpop.f32.mrf.mxu0
  %v501 = vadd.f32 0.0, %v500
  %v502 = vpop.f32.mrf.mxu0
  %v503 = vpop.f32.mrf.mxu0
  %v504 = vadd.f32 0.0, %v503
  %v505 = vpop.f32.mrf.mxu0
  %506 = vmatprep.mubr.bf16.mxu0 %v455
  %507 = vmatmul.mubr.bf16.gmra.mxu0 %v454
  %v508 = vpop.f32.mrf.mxu0
  %v509 = vadd.f32 0.0, %v508
  %v510 = vpop.f32.mrf.mxu0
  %v511 = vpop.f32.mrf.mxu0
  %v512 = vadd.f32 0.0, %v511
  %v513 = vpop.f32.mrf.mxu0
  %514 = vdwg.mxu0
  %515 = vmatprep.subr.bf16.mxu0 0
  %516 = vmatpush1.bf16.msra.mxu0 %v278
  %517 = vmatprep.subr.bf16.mxu0 0
  %518 = vmatpush1.bf16.msra.mxu0 %v277
  %519 = vmatprep.subr.bf16.mxu0 0
  %520 = vmatpush1.bf16.msra.mxu0 %v276
  %521 = vmatprep.subr.bf16.mxu0 0
  %522 = vmatpush1.bf16.msra.mxu0 %v275
  %523 = vmatprep.subr.bf16.mxu0 0
  %524 = vmatpush1.bf16.msra.mxu0 %v274
  %525 = vmatprep.subr.bf16.mxu0 0
  %526 = vmatpush1.bf16.msra.mxu0 %v273
  %527 = vmatprep.subr.bf16.mxu0 0
  %528 = vmatpush1.bf16.msra.mxu0 %v272
  %529 = vmatprep.subr.bf16.mxu0 0
  %530 = vmatpush1.bf16.msra.mxu0 %v271
  %531 = vmatprep.subr.bf16.mxu0 0
  %532 = vmatpush2.bf16.msra.mxu0 %v286
  %533 = vmatprep.subr.bf16.mxu0 0
  %534 = vmatpush2.bf16.msra.mxu0 %v285
  %535 = vmatprep.subr.bf16.mxu0 0
  %536 = vmatpush2.bf16.msra.mxu0 %v284
  %537 = vmatprep.subr.bf16.mxu0 0
  %538 = vmatpush2.bf16.msra.mxu0 %v283
  %539 = vmatprep.subr.bf16.mxu0 0
  %540 = vmatpush2.bf16.msra.mxu0 %v282
  %541 = vmatprep.subr.bf16.mxu0 0
  %542 = vmatpush2.bf16.msra.mxu0 %v281
  %543 = vmatprep.subr.bf16.mxu0 0
  %544 = vmatpush2.bf16.msra.mxu0 %v280
  %545 = vmatprep.subr.bf16.mxu0 0
  %546 = vmatpush2.bf16.msra.mxu0 %v279
  %547 = vmatprep.mubr.bf16.mxu0 %v453
  %548 = vmatmul.mubr.bf16.gmra.mxu0 %v452
  %v549 = vpop.f32.mrf.mxu0
  %v550 = vadd.f32 %v501, %v549
  %v551 = vpop.f32.mrf.mxu0
  %v552 = vpop.f32.mrf.mxu0
  %v553 = vadd.f32 %v504, %v552
  %v554 = vpop.f32.mrf.mxu0
  %555 = vmatprep.mubr.bf16.mxu0 %v457
  %556 = vmatmul.mubr.bf16.gmra.mxu0 %v456
  %v557 = vpop.f32.mrf.mxu0
  %v558 = vadd.f32 %v509, %v557
  %v559 = vpop.f32.mrf.mxu0
  %v560 = vpop.f32.mrf.mxu0
  %v561 = vadd.f32 %v512, %v560
  %v562 = vpop.f32.mrf.mxu0
  %563 = vdwg.mxu0
  %s564 = scalar_lea.vmem %s0, 128
  %v565 = vld [vmem:[%s564] sm:$0xff]
  %v566 = vld [vmem:[%s564 + $0x8] sm:$0xff]
  %v567 = vld [vmem:[%s564 + $0x10] sm:$0xff]
  %v568 = vld [vmem:[%s564 + $0x18] sm:$0xff]
  %v569 = vld [vmem:[%s564 + $0x20] sm:$0xff]
  %v570 = vld [vmem:[%s564 + $0x28] sm:$0xff]
  %v571 = vld [vmem:[%s564 + $0x30] sm:$0xff]
  %v572 = vld [vmem:[%s564 + $0x38] sm:$0xff]
  %v581 = vunpack.c.l.b16 %v565
  %v582 = vunpack.c.h.b16 %v565
  %v583 = vunpack.c.l.b16 %v566
  %v584 = vunpack.c.h.b16 %v566
  %v585 = vunpack.c.l.b16 %v567
  %v586 = vunpack.c.h.b16 %v567
  %v587 = vunpack.c.l.b16 %v568
  %v588 = vunpack.c.h.b16 %v568
  %v589 = vunpack.c.l.b16 %v569
  %v590 = vunpack.c.h.b16 %v569
  %v591 = vunpack.c.l.b16 %v570
  %v592 = vunpack.c.h.b16 %v570
  %v593 = vunpack.c.l.b16 %v571
  %v594 = vunpack.c.h.b16 %v571
  %v595 = vunpack.c.l.b16 %v572
  %v596 = vunpack.c.h.b16 %v572
  %v597 = vpack.c.b16 %v585, %v581
  %v598 = vpack.c.b16 %v586, %v582
  %v599 = vpack.c.b16 %v587, %v583
  %v600 = vpack.c.b16 %v588, %v584
  %v601 = vpack.c.b16 %v593, %v589
  %v602 = vpack.c.b16 %v594, %v590
  %v603 = vpack.c.b16 %v595, %v591
  %v604 = vpack.c.b16 %v596, %v592
  %613 = vmatprep.subr.bf16.mxu0 0
  %614 = vmatpush1.bf16.msra.mxu0 %v262
  %615 = vmatprep.subr.bf16.mxu0 0
  %616 = vmatpush1.bf16.msra.mxu0 %v261
  %617 = vmatprep.subr.bf16.mxu0 0
  %618 = vmatpush1.bf16.msra.mxu0 %v260
  %619 = vmatprep.subr.bf16.mxu0 0
  %620 = vmatpush1.bf16.msra.mxu0 %v259
  %621 = vmatprep.subr.bf16.mxu0 0
  %622 = vmatpush1.bf16.msra.mxu0 %v258
  %623 = vmatprep.subr.bf16.mxu0 0
  %624 = vmatpush1.bf16.msra.mxu0 %v257
  %625 = vmatprep.subr.bf16.mxu0 0
  %626 = vmatpush1.bf16.msra.mxu0 %v256
  %627 = vmatprep.subr.bf16.mxu0 0
  %628 = vmatpush1.bf16.msra.mxu0 %v255
  %629 = vmatprep.subr.bf16.mxu0 0
  %630 = vmatpush2.bf16.msra.mxu0 %v270
  %631 = vmatprep.subr.bf16.mxu0 0
  %632 = vmatpush2.bf16.msra.mxu0 %v269
  %633 = vmatprep.subr.bf16.mxu0 0
  %634 = vmatpush2.bf16.msra.mxu0 %v268
  %635 = vmatprep.subr.bf16.mxu0 0
  %636 = vmatpush2.bf16.msra.mxu0 %v267
  %637 = vmatprep.subr.bf16.mxu0 0
  %638 = vmatpush2.bf16.msra.mxu0 %v266
  %639 = vmatprep.subr.bf16.mxu0 0
  %640 = vmatpush2.bf16.msra.mxu0 %v265
  %641 = vmatprep.subr.bf16.mxu0 0
  %642 = vmatpush2.bf16.msra.mxu0 %v264
  %643 = vmatprep.subr.bf16.mxu0 0
  %644 = vmatpush2.bf16.msra.mxu0 %v263
  %645 = vmatprep.mubr.bf16.mxu0 %v598
  %646 = vmatmul.mubr.bf16.gmra.mxu0 %v597
  %v647 = vpop.f32.mrf.mxu0
  %v648 = vadd.f32 0.0, %v647
  %v649 = vpop.f32.mrf.mxu0
  %v650 = vpop.f32.mrf.mxu0
  %v651 = vadd.f32 0.0, %v650
  %v652 = vpop.f32.mrf.mxu0
  %653 = vmatprep.mubr.bf16.mxu0 %v602
  %654 = vmatmul.mubr.bf16.gmra.mxu0 %v601
  %v655 = vpop.f32.mrf.mxu0
  %v656 = vadd.f32 0.0, %v655
  %v657 = vpop.f32.mrf.mxu0
  %v658 = vpop.f32.mrf.mxu0
  %v659 = vadd.f32 0.0, %v658
  %v660 = vpop.f32.mrf.mxu0
  %661 = vdwg.mxu0
  %662 = vmatprep.subr.bf16.mxu0 0
  %663 = vmatpush1.bf16.msra.mxu0 %v278
  %664 = vmatprep.subr.bf16.mxu0 0
  %665 = vmatpush1.bf16.msra.mxu0 %v277
  %666 = vmatprep.subr.bf16.mxu0 0
  %667 = vmatpush1.bf16.msra.mxu0 %v276
  %668 = vmatprep.subr.bf16.mxu0 0
  %669 = vmatpush1.bf16.msra.mxu0 %v275
  %670 = vmatprep.subr.bf16.mxu0 0
  %671 = vmatpush1.bf16.msra.mxu0 %v274
  %672 = vmatprep.subr.bf16.mxu0 0
  %673 = vmatpush1.bf16.msra.mxu0 %v273
  %674 = vmatprep.subr.bf16.mxu0 0
  %675 = vmatpush1.bf16.msra.mxu0 %v272
  %676 = vmatprep.subr.bf16.mxu0 0
  %677 = vmatpush1.bf16.msra.mxu0 %v271
  %678 = vmatprep.subr.bf16.mxu0 0
  %679 = vmatpush2.bf16.msra.mxu0 %v286
  %680 = vmatprep.subr.bf16.mxu0 0
  %681 = vmatpush2.bf16.msra.mxu0 %v285
  %682 = vmatprep.subr.bf16.mxu0 0
  %683 = vmatpush2.bf16.msra.mxu0 %v284
  %684 = vmatprep.subr.bf16.mxu0 0
  %685 = vmatpush2.bf16.msra.mxu0 %v283
  %686 = vmatprep.subr.bf16.mxu0 0
  %687 = vmatpush2.bf16.msra.mxu0 %v282
  %688 = vmatprep.subr.bf16.mxu0 0
  %689 = vmatpush2.bf16.msra.mxu0 %v281
  %690 = vmatprep.subr.bf16.mxu0 0
  %691 = vmatpush2.bf16.msra.mxu0 %v280
  %692 = vmatprep.subr.bf16.mxu0 0
  %693 = vmatpush2.bf16.msra.mxu0 %v279
  %694 = vmatprep.mubr.bf16.mxu0 %v600
  %695 = vmatmul.mubr.bf16.gmra.mxu0 %v599
  %v696 = vpop.f32.mrf.mxu0
  %v697 = vadd.f32 %v648, %v696
  %v698 = vpop.f32.mrf.mxu0
  %v699 = vpop.f32.mrf.mxu0
  %v700 = vadd.f32 %v651, %v699
  %v701 = vpop.f32.mrf.mxu0
  %702 = vmatprep.mubr.bf16.mxu0 %v604
  %703 = vmatmul.mubr.bf16.gmra.mxu0 %v603
  %v704 = vpop.f32.mrf.mxu0
  %v705 = vadd.f32 %v656, %v704
  %v706 = vpop.f32.mrf.mxu0
  %v707 = vpop.f32.mrf.mxu0
  %v708 = vadd.f32 %v659, %v707
  %v709 = vpop.f32.mrf.mxu0
  %710 = vdwg.mxu0
  %s711 = scalar_lea.vmem %s0, 192
  %v712 = vld [vmem:[%s711] sm:$0xff]
  %v713 = vld [vmem:[%s711 + $0x8] sm:$0xff]
  %v714 = vld [vmem:[%s711 + $0x10] sm:$0xff]
  %v715 = vld [vmem:[%s711 + $0x18] sm:$0xff]
  %v716 = vld [vmem:[%s711 + $0x20] sm:$0xff]
  %v717 = vld [vmem:[%s711 + $0x28] sm:$0xff]
  %v718 = vld [vmem:[%s711 + $0x30] sm:$0xff]
  %v719 = vld [vmem:[%s711 + $0x38] sm:$0xff]
  %v728 = vunpack.c.l.b16 %v712
  %v729 = vunpack.c.h.b16 %v712
  %v730 = vunpack.c.l.b16 %v713
  %v731 = vunpack.c.h.b16 %v713
  %v732 = vunpack.c.l.b16 %v714
  %v733 = vunpack.c.h.b16 %v714
  %v734 = vunpack.c.l.b16 %v715
  %v735 = vunpack.c.h.b16 %v715
  %v736 = vunpack.c.l.b16 %v716
  %v737 = vunpack.c.h.b16 %v716
  %v738 = vunpack.c.l.b16 %v717
  %v739 = vunpack.c.h.b16 %v717
  %v740 = vunpack.c.l.b16 %v718
  %v741 = vunpack.c.h.b16 %v718
  %v742 = vunpack.c.l.b16 %v719
  %v743 = vunpack.c.h.b16 %v719
  %v744 = vpack.c.b16 %v732, %v728
  %v745 = vpack.c.b16 %v733, %v729
  %v746 = vpack.c.b16 %v734, %v730
  %v747 = vpack.c.b16 %v735, %v731
  %v748 = vpack.c.b16 %v740, %v736
  %v749 = vpack.c.b16 %v741, %v737
  %v750 = vpack.c.b16 %v742, %v738
  %v751 = vpack.c.b16 %v743, %v739
  %760 = vmatprep.subr.bf16.mxu0 0
  %761 = vmatpush1.bf16.msra.mxu0 %v262
  %762 = vmatprep.subr.bf16.mxu0 0
  %763 = vmatpush1.bf16.msra.mxu0 %v261
  %764 = vmatprep.subr.bf16.mxu0 0
  %765 = vmatpush1.bf16.msra.mxu0 %v260
  %766 = vmatprep.subr.bf16.mxu0 0
  %767 = vmatpush1.bf16.msra.mxu0 %v259
  %768 = vmatprep.subr.bf16.mxu0 0
  %769 = vmatpush1.bf16.msra.mxu0 %v258
  %770 = vmatprep.subr.bf16.mxu0 0
  %771 = vmatpush1.bf16.msra.mxu0 %v257
  %772 = vmatprep.subr.bf16.mxu0 0
  %773 = vmatpush1.bf16.msra.mxu0 %v256
  %774 = vmatprep.subr.bf16.mxu0 0
  %775 = vmatpush1.bf16.msra.mxu0 %v255
  %776 = vmatprep.subr.bf16.mxu0 0
  %777 = vmatpush2.bf16.msra.mxu0 %v270
  %778 = vmatprep.subr.bf16.mxu0 0
  %779 = vmatpush2.bf16.msra.mxu0 %v269
  %780 = vmatprep.subr.bf16.mxu0 0
  %781 = vmatpush2.bf16.msra.mxu0 %v268
  %782 = vmatprep.subr.bf16.mxu0 0
  %783 = vmatpush2.bf16.msra.mxu0 %v267
  %784 = vmatprep.subr.bf16.mxu0 0
  %785 = vmatpush2.bf16.msra.mxu0 %v266
  %786 = vmatprep.subr.bf16.mxu0 0
  %787 = vmatpush2.bf16.msra.mxu0 %v265
  %788 = vmatprep.subr.bf16.mxu0 0
  %789 = vmatpush2.bf16.msra.mxu0 %v264
  %790 = vmatprep.subr.bf16.mxu0 0
  %791 = vmatpush2.bf16.msra.mxu0 %v263
  %792 = vmatprep.mubr.bf16.mxu0 %v745
  %793 = vmatmul.mubr.bf16.gmra.mxu0 %v744
  %v794 = vpop.f32.mrf.mxu0
  %v795 = vadd.f32 0.0, %v794
  %v796 = vpop.f32.mrf.mxu0
  %v797 = vpop.f32.mrf.mxu0
  %v798 = vadd.f32 0.0, %v797
  %v799 = vpop.f32.mrf.mxu0
  %800 = vmatprep.mubr.bf16.mxu0 %v749
  %801 = vmatmul.mubr.bf16.gmra.mxu0 %v748
  %v802 = vpop.f32.mrf.mxu0
  %v803 = vadd.f32 0.0, %v802
  %v804 = vpop.f32.mrf.mxu0
  %v805 = vpop.f32.mrf.mxu0
  %v806 = vadd.f32 0.0, %v805
  %v807 = vpop.f32.mrf.mxu0
  %808 = vdwg.mxu0
  %809 = vmatprep.subr.bf16.mxu0 0
  %810 = vmatpush1.bf16.msra.mxu0 %v278
  %811 = vmatprep.subr.bf16.mxu0 0
  %812 = vmatpush1.bf16.msra.mxu0 %v277
  %813 = vmatprep.subr.bf16.mxu0 0
  %814 = vmatpush1.bf16.msra.mxu0 %v276
  %815 = vmatprep.subr.bf16.mxu0 0
  %816 = vmatpush1.bf16.msra.mxu0 %v275
  %817 = vmatprep.subr.bf16.mxu0 0
  %818 = vmatpush1.bf16.msra.mxu0 %v274
  %819 = vmatprep.subr.bf16.mxu0 0
  %820 = vmatpush1.bf16.msra.mxu0 %v273
  %821 = vmatprep.subr.bf16.mxu0 0
  %822 = vmatpush1.bf16.msra.mxu0 %v272
  %823 = vmatprep.subr.bf16.mxu0 0
  %824 = vmatpush1.bf16.msra.mxu0 %v271
  %825 = vmatprep.subr.bf16.mxu0 0
  %826 = vmatpush2.bf16.msra.mxu0 %v286
  %827 = vmatprep.subr.bf16.mxu0 0
  %828 = vmatpush2.bf16.msra.mxu0 %v285
  %829 = vmatprep.subr.bf16.mxu0 0
  %830 = vmatpush2.bf16.msra.mxu0 %v284
  %831 = vmatprep.subr.bf16.mxu0 0
  %832 = vmatpush2.bf16.msra.mxu0 %v283
  %833 = vmatprep.subr.bf16.mxu0 0
  %834 = vmatpush2.bf16.msra.mxu0 %v282
  %835 = vmatprep.subr.bf16.mxu0 0
  %836 = vmatpush2.bf16.msra.mxu0 %v281
  %837 = vmatprep.subr.bf16.mxu0 0
  %838 = vmatpush2.bf16.msra.mxu0 %v280
  %839 = vmatprep.subr.bf16.mxu0 0
  %840 = vmatpush2.bf16.msra.mxu0 %v279
  %841 = vmatprep.mubr.bf16.mxu0 %v747
  %842 = vmatmul.mubr.bf16.gmra.mxu0 %v746
  %v843 = vpop.f32.mrf.mxu0
  %v844 = vadd.f32 %v795, %v843
  %v845 = vpop.f32.mrf.mxu0
  %v846 = vpop.f32.mrf.mxu0
  %v847 = vadd.f32 %v798, %v846
  %v848 = vpop.f32.mrf.mxu0
  %849 = vmatprep.mubr.bf16.mxu0 %v751
  %850 = vmatmul.mubr.bf16.gmra.mxu0 %v750
  %v851 = vpop.f32.mrf.mxu0
  %v852 = vadd.f32 %v803, %v851
  %v853 = vpop.f32.mrf.mxu0
  %v854 = vpop.f32.mrf.mxu0
  %v855 = vadd.f32 %v806, %v854
  %v856 = vpop.f32.mrf.mxu0
  %857 = vdwg.mxu0
  %v858 = vmax.f32 %v403, %v550
  %v859 = vmax.f32 %v406, %v553
  %v860 = vmax.f32 %v411, %v558
  %v861 = vmax.f32 %v414, %v561
  %v862 = vmax.f32 %v697, %v844
  %v863 = vmax.f32 %v700, %v847
  %v864 = vmax.f32 %v705, %v852
  %v865 = vmax.f32 %v708, %v855
  %v866 = vmax.f32 %v858, %v862
  %v867 = vmax.f32 %v859, %v863
  %v868 = vmax.f32 %v860, %v864
  %v869 = vmax.f32 %v861, %v865
  %v870 = vld [vmem:[%s2] sm:$0x1]
  %v872 = vlaneseq
  %v873 = vshrl.u32 %v872, 7
  %v874 = vsub.s32 0, %v873
  %v875 = vrot.slane %v870, %v874
  %v877 = vadd.f32 %v866, %v875
  %v878 = vadd.f32 %v867, %v875
  %v879 = vadd.f32 %v868, %v875
  %v880 = vadd.f32 %v869, %v875
  %v881 = vmax.f32 %v877, 0.0
  %v882 = vmax.f32 %v878, 0.0
  %v883 = vmax.f32 %v879, 0.0
  %v884 = vmax.f32 %v880, 0.0
  %v885 = vpack.c.bf16 %v882, %v881
  %v886 = vpack.c.bf16 %v884, %v883
  %v889 = vunpack.c.l.b16 %v885
  %v890 = vunpack.c.h.b16 %v885
  %v891 = vunpack.c.l.b16 %v886
  %v892 = vunpack.c.h.b16 %v886
  %v893 = vpack.c.b16 %v889, %v889
  %v894 = vpack.c.b16 %v890, %v890
  %v895 = vpack.c.b16 %v891, %v891
  %v896 = vpack.c.b16 %v892, %v892
  %901 = vst [vmem:[%s3] sm:$0xf] %v893
  %902 = vst [vmem:[%s3 + $0x4] sm:$0xf] %v894
  %903 = vst [vmem:[%s3 + $0x8] sm:$0xf] %v895
  %904 = vst [vmem:[%s3 + $0xc] sm:$0xf] %v896
  // Predicated region
  $region14: #{net_forward.4} parent=0 // pred_check
    _
  $region15: #{net_forward.4} parent=0 // pred_check_branch
    %906 = sbr.rel (0) target = $region17
  $region16: #{net_forward.4} parent=0 // pred_region
    _
  $region17: #{net_forward.4} parent=0 // pred_fallthru
    _
  // Predicated region
  $region18: #{net_forward.4} parent=0 // pred_check
    _
  $region19: #{net_forward.4} parent=0 // pred_check_branch
    %908 = sbr.rel (0) target = $region21
  $region20: #{net_forward.4} parent=0 // pred_region
    _
  $region21: #{net_forward.4} parent=0 // pred_fallthru
    _

// kernel: net_forward.5
$region0: #{net_forward.5}
  #allocation0 [shape = 'u32[]', space=smem, size = 0x4, offset = 0x4, fixed_abs, tag = 'smem constant byte address 0x4 - core index']
  #allocation1 [shape = 'u32[144,128]{1,0:T(1,128)}', space=vmem, size = 0x12000, scoped, tag = 'internal scratch']
  %s0 = inlined_call_operand.vmem [shape: bf16[16,2048], index: 0, kind: input, shape index: {}]
  %s1 = inlined_call_operand.vmem [shape: bf16[2048,512], index: 1, kind: input, shape index: {}]
  %s2 = inlined_call_operand.vmem [shape: f32[1,512], index: 2, kind: input, shape index: {}]
  %s3 = inlined_call_operand.vmem [shape: bf16[512,128], index: 3, kind: input, shape index: {}]
  %s4 = inlined_call_operand.vmem [shape: f32[1,128], index: 4, kind: input, shape index: {}]
  %s5 = inlined_call_operand.vmem [shape: f32[16,128], index: 5, kind: output, shape index: {}]
  %s6 = sld [smem:[#allocation0]]
  $region30: #{net_forward.5} parent=0
    _
  %s8 = ssub.s32 1, %s6
  %s9 = scalar_select 0, %s8, %s6
  // Predicated region
  $region2: #{net_forward.5} parent=0 // pred_check
    _
  $region3: #{net_forward.5} parent=0 // pred_check_branch
    %11 = sbr.rel (0) target = $region5
  $region4: #{net_forward.5} parent=0 // pred_region
    _
  $region5: #{net_forward.5} parent=0 // pred_fallthru
    _
  // Predicated region
  $region6: #{net_forward.5} parent=0 // pred_check
    _
  $region7: #{net_forward.5} parent=0 // pred_check_branch
    %13 = sbr.rel (0) target = $region9
  $region8: #{net_forward.5} parent=0 // pred_region
    _
  $region9: #{net_forward.5} parent=0 // pred_fallthru
    _
  // Predicated region
  $region10: #{net_forward.5} parent=0 // pred_check
    _
  $region11: #{net_forward.5} parent=0 // pred_check_branch
    %15 = sbr.rel (0) target = $region13
  $region12: #{net_forward.5} parent=0 // pred_region
    _
  $region13: #{net_forward.5} parent=0 // pred_fallthru
    _
  // Predicated region
  $region14: #{net_forward.5} parent=0 // pred_check
    _
  $region15: #{net_forward.5} parent=0 // pred_check_branch
    %17 = sbr.rel (0) target = $region17
  $region16: #{net_forward.5} parent=0 // pred_region
    _
  $region17: #{net_forward.5} parent=0 // pred_fallthru
    _
  // Predicated region
  $region18: #{net_forward.5} parent=0 // pred_check
    _
  $region19: #{net_forward.5} parent=0 // pred_check_branch
    %19 = sbr.rel (0) target = $region21
  $region20: #{net_forward.5} parent=0 // pred_region
    _
  $region21: #{net_forward.5} parent=0 // pred_fallthru
    _
  %v21 = vld [vmem:[%s0] sm:$0xff]
  %v22 = vld [vmem:[%s0 + $0x8] sm:$0xff]
  %v23 = vld [vmem:[%s0 + $0x10] sm:$0xff]
  %v24 = vld [vmem:[%s0 + $0x18] sm:$0xff]
  %v25 = vld [vmem:[%s0 + $0x20] sm:$0xff]
  %v26 = vld [vmem:[%s0 + $0x28] sm:$0xff]
  %v27 = vld [vmem:[%s0 + $0x30] sm:$0xff]
  %v28 = vld [vmem:[%s0 + $0x38] sm:$0xff]
  %v29 = vld [vmem:[%s0 + $0x40] sm:$0xff]
  %v30 = vld [vmem:[%s0 + $0x48] sm:$0xff]
  %v31 = vld [vmem:[%s0 + $0x50] sm:$0xff]
  %v32 = vld [vmem:[%s0 + $0x58] sm:$0xff]
  %v33 = vld [vmem:[%s0 + $0x60] sm:$0xff]
  %v34 = vld [vmem:[%s0 + $0x68] sm:$0xff]
  %v35 = vld [vmem:[%s0 + $0x70] sm:$0xff]
  %v36 = vld [vmem:[%s0 + $0x78] sm:$0xff]
  %v37 = vld [vmem:[%s1] sm:$0xff]
  %v38 = vld [vmem:[%s1 + $0x8] sm:$0xff]
  %v39 = vld [vmem:[%s1 + $0x10] sm:$0xff]
  %v40 = vld [vmem:[%s1 + $0x18] sm:$0xff]
  %v41 = vld [vmem:[%s1 + $0x20] sm:$0xff]
  %v42 = vld [vmem:[%s1 + $0x28] sm:$0xff]
  %v43 = vld [vmem:[%s1 + $0x30] sm:$0xff]
  %v44 = vld [vmem:[%s1 + $0x38] sm:$0xff]
  %v45 = vld [vmem:[%s1 + $0x40] sm:$0xff]
  %v46 = vld [vmem:[%s1 + $0x48] sm:$0xff]
  %v47 = vld [vmem:[%s1 + $0x50] sm:$0xff]
  %v48 = vld [vmem:[%s1 + $0x58] sm:$0xff]
  %v49 = vld [vmem:[%s1 + $0x60] sm:$0xff]
  %v50 = vld [vmem:[%s1 + $0x68] sm:$0xff]
  %v51 = vld [vmem:[%s1 + $0x70] sm:$0xff]
  %v52 = vld [vmem:[%s1 + $0x78] sm:$0xff]
  %v53 = vld [vmem:[%s1 + $0x80] sm:$0xff]
  %v54 = vld [vmem:[%s1 + $0x88] sm:$0xff]
  %v55 = vld [vmem:[%s1 + $0x90] sm:$0xff]
  %v56 = vld [vmem:[%s1 + $0x98] sm:$0xff]
  %v57 = vld [vmem:[%s1 + $0xa0] sm:$0xff]
  %v58 = vld [vmem:[%s1 + $0xa8] sm:$0xff]
  %v59 = vld [vmem:[%s1 + $0xb0] sm:$0xff]
  %v60 = vld [vmem:[%s1 + $0xb8] sm:$0xff]
  %v61 = vld [vmem:[%s1 + $0xc0] sm:$0xff]
  %v62 = vld [vmem:[%s1 + $0xc8] sm:$0xff]
  %v63 = vld [vmem:[%s1 + $0xd0] sm:$0xff]
  %v64 = vld [vmem:[%s1 + $0xd8] sm:$0xff]
  %v65 = vld [vmem:[%s1 + $0xe0] sm:$0xff]
  %v66 = vld [vmem:[%s1 + $0xe8] sm:$0xff]
  %v67 = vld [vmem:[%s1 + $0xf0] sm:$0xff]
  %v68 = vld [vmem:[%s1 + $0xf8] sm:$0xff]
  %v69 = vld [vmem:[%s1 + $0x100] sm:$0xff]
  %v70 = vld [vmem:[%s1 + $0x108] sm:$0xff]
  %v71 = vld [vmem:[%s1 + $0x110] sm:$0xff]
  %v72 = vld [vmem:[%s1 + $0x118] sm:$0xff]
  %v73 = vld [vmem:[%s1 + $0x120] sm:$0xff]
  %v74 = vld [vmem:[%s1 + $0x128] sm:$0xff]
  %v75 = vld [vmem:[%s1 + $0x130] sm:$0xff]
  %v76 = vld [vmem:[%s1 + $0x138] sm:$0xff]
  %v77 = vld [vmem:[%s1 + $0x140] sm:$0xff]
  %v78 = vld [vmem:[%s1 + $0x148] sm:$0xff]
  %v79 = vld [vmem:[%s1 + $0x150] sm:$0xff]
  %v80 = vld [vmem:[%s1 + $0x158] sm:$0xff]
  %v81 = vld [vmem:[%s1 + $0x160] sm:$0xff]
  %v82 = vld [vmem:[%s1 + $0x168] sm:$0xff]
  %v83 = vld [vmem:[%s1 + $0x170] sm:$0xff]
  %v84 = vld [vmem:[%s1 + $0x178] sm:$0xff]
  %v85 = vld [vmem:[%s1 + $0x180] sm:$0xff]
  %v86 = vld [vmem:[%s1 + $0x188] sm:$0xff]
  %v87 = vld [vmem:[%s1 + $0x190] sm:$0xff]
  %v88 = vld [vmem:[%s1 + $0x198] sm:$0xff]
  %v89 = vld [vmem:[%s1 + $0x1a0] sm:$0xff]
  %v90 = vld [vmem:[%s1 + $0x1a8] sm:$0xff]
  %v91 = vld [vmem:[%s1 + $0x1b0] sm:$0xff]
  %v92 = vld [vmem:[%s1 + $0x1b8] sm:$0xff]
  %v93 = vld [vmem:[%s1 + $0x1c0] sm:$0xff]
  %v94 = vld [vmem:[%s1 + $0x1c8] sm:$0xff]
  %v95 = vld [vmem:[%s1 + $0x1d0] sm:$0xff]
  %v96 = vld [vmem:[%s1 + $0x1d8] sm:$0xff]
  %v97 = vld [vmem:[%s1 + $0x1e0] sm:$0xff]
  %v98 = vld [vmem:[%s1 + $0x1e8] sm:$0xff]
  %v99 = vld [vmem:[%s1 + $0x1f0] sm:$0xff]
  %v100 = vld [vmem:[%s1 + $0x1f8] sm:$0xff]
  %v101 = vld [vmem:[%s1 + $0x200] sm:$0xff]
  %v102 = vld [vmem:[%s1 + $0x208] sm:$0xff]
  %v103 = vld [vmem:[%s1 + $0x210] sm:$0xff]
  %v104 = vld [vmem:[%s1 + $0x218] sm:$0xff]
  %v105 = vld [vmem:[%s1 + $0x220] sm:$0xff]
  %v106 = vld [vmem:[%s1 + $0x228] sm:$0xff]
  %v107 = vld [vmem:[%s1 + $0x230] sm:$0xff]
  %v108 = vld [vmem:[%s1 + $0x238] sm:$0xff]
  %v109 = vld [vmem:[%s1 + $0x240] sm:$0xff]
  %v110 = vld [vmem:[%s1 + $0x248] sm:$0xff]
  %v111 = vld [vmem:[%s1 + $0x250] sm:$0xff]
  %v112 = vld [vmem:[%s1 + $0x258] sm:$0xff]
  %v113 = vld [vmem:[%s1 + $0x260] sm:$0xff]
  %v114 = vld [vmem:[%s1 + $0x268] sm:$0xff]
  %v115 = vld [vmem:[%s1 + $0x270] sm:$0xff]
  %v116 = vld [vmem:[%s1 + $0x278] sm:$0xff]
  %v117 = vld [vmem:[%s1 + $0x280] sm:$0xff]
  %v118 = vld [vmem:[%s1 + $0x288] sm:$0xff]
  %v119 = vld [vmem:[%s1 + $0x290] sm:$0xff]
  %v120 = vld [vmem:[%s1 + $0x298] sm:$0xff]
  %v121 = vld [vmem:[%s1 + $0x2a0] sm:$0xff]
  %v122 = vld [vmem:[%s1 + $0x2a8] sm:$0xff]
  %v123 = vld [vmem:[%s1 + $0x2b0] sm:$0xff]
  %v124 = vld [vmem:[%s1 + $0x2b8] sm:$0xff]
  %v125 = vld [vmem:[%s1 + $0x2c0] sm:$0xff]
  %v126 = vld [vmem:[%s1 + $0x2c8] sm:$0xff]
  %v127 = vld [vmem:[%s1 + $0x2d0] sm:$0xff]
  %v128 = vld [vmem:[%s1 + $0x2d8] sm:$0xff]
  %v129 = vld [vmem:[%s1 + $0x2e0] sm:$0xff]
  %v130 = vld [vmem:[%s1 + $0x2e8] sm:$0xff]
  %v131 = vld [vmem:[%s1 + $0x2f0] sm:$0xff]
  %v132 = vld [vmem:[%s1 + $0x2f8] sm:$0xff]
  %v133 = vld [vmem:[%s1 + $0x300] sm:$0xff]
  %v134 = vld [vmem:[%s1 + $0x308] sm:$0xff]
  %v135 = vld [vmem:[%s1 + $0x310] sm:$0xff]
  %v136 = vld [vmem:[%s1 + $0x318] sm:$0xff]
  %v137 = vld [vmem:[%s1 + $0x320] sm:$0xff]
  %v138 = vld [vmem:[%s1 + $0x328] sm:$0xff]
  %v139 = vld [vmem:[%s1 + $0x330] sm:$0xff]
  %v140 = vld [vmem:[%s1 + $0x338] sm:$0xff]
  %v141 = vld [vmem:[%s1 + $0x340] sm:$0xff]
  %v142 = vld [vmem:[%s1 + $0x348] sm:$0xff]
  %v143 = vld [vmem:[%s1 + $0x350] sm:$0xff]
  %v144 = vld [vmem:[%s1 + $0x358] sm:$0xff]
  %v145 = vld [vmem:[%s1 + $0x360] sm:$0xff]
  %v146 = vld [vmem:[%s1 + $0x368] sm:$0xff]
  %v147 = vld [vmem:[%s1 + $0x370] sm:$0xff]
  %v148 = vld [vmem:[%s1 + $0x378] sm:$0xff]
  %v149 = vld [vmem:[%s1 + $0x380] sm:$0xff]
  %v150 = vld [vmem:[%s1 + $0x388] sm:$0xff]
  %v151 = vld [vmem:[%s1 + $0x390] sm:$0xff]
  %v152 = vld [vmem:[%s1 + $0x398] sm:$0xff]
  %v153 = vld [vmem:[%s1 + $0x3a0] sm:$0xff]
  %v154 = vld [vmem:[%s1 + $0x3a8] sm:$0xff]
  %v155 = vld [vmem:[%s1 + $0x3b0] sm:$0xff]
  %v156 = vld [vmem:[%s1 + $0x3b8] sm:$0xff]
  %v157 = vld [vmem:[%s1 + $0x3c0] sm:$0xff]
  %v158 = vld [vmem:[%s1 + $0x3c8] sm:$0xff]
  %v159 = vld [vmem:[%s1 + $0x3d0] sm:$0xff]
  %v160 = vld [vmem:[%s1 + $0x3d8] sm:$0xff]
  %v161 = vld [vmem:[%s1 + $0x3e0] sm:$0xff]
  %v162 = vld [vmem:[%s1 + $0x3e8] sm:$0xff]
  %v163 = vld [vmem:[%s1 + $0x3f0] sm:$0xff]
  %v164 = vld [vmem:[%s1 + $0x3f8] sm:$0xff]
  %v165 = vld [vmem:[%s1 + $0x400] sm:$0xff]
  %v166 = vld [vmem:[%s1 + $0x408] sm:$0xff]
  %v167 = vld [vmem:[%s1 + $0x410] sm:$0xff]
  %v168 = vld [vmem:[%s1 + $0x418] sm:$0xff]
  %v169 = vld [vmem:[%s1 + $0x420] sm:$0xff]
  %v170 = vld [vmem:[%s1 + $0x428] sm:$0xff]
  %v171 = vld [vmem:[%s1 + $0x430] sm:$0xff]
  %v172 = vld [vmem:[%s1 + $0x438] sm:$0xff]
  %v173 = vld [vmem:[%s1 + $0x440] sm:$0xff]
  %v174 = vld [vmem:[%s1 + $0x448] sm:$0xff]
  %v175 = vld [vmem:[%s1 + $0x450] sm:$0xff]
  %v176 = vld [vmem:[%s1 + $0x458] sm:$0xff]
  %v177 = vld [vmem:[%s1 + $0x460] sm:$0xff]
  %v178 = vld [vmem:[%s1 + $0x468] sm:$0xff]
  %v179 = vld [vmem:[%s1 + $0x470] sm:$0xff]
  %v180 = vld [vmem:[%s1 + $0x478] sm:$0xff]
  %v181 = vld [vmem:[%s1 + $0x480] sm:$0xff]
  %v182 = vld [vmem:[%s1 + $0x488] sm:$0xff]
  %v183 = vld [vmem:[%s1 + $0x490] sm:$0xff]
  %v184 = vld [vmem:[%s1 + $0x498] sm:$0xff]
  %v185 = vld [vmem:[%s1 + $0x4a0] sm:$0xff]
  %v186 = vld [vmem:[%s1 + $0x4a8] sm:$0xff]
  %v187 = vld [vmem:[%s1 + $0x4b0] sm:$0xff]
  %v188 = vld [vmem:[%s1 + $0x4b8] sm:$0xff]
  %v189 = vld [vmem:[%s1 + $0x4c0] sm:$0xff]
  %v190 = vld [vmem:[%s1 + $0x4c8] sm:$0xff]
  %v191 = vld [vmem:[%s1 + $0x4d0] sm:$0xff]
  %v192 = vld [vmem:[%s1 + $0x4d8] sm:$0xff]
  %v193 = vld [vmem:[%s1 + $0x4e0] sm:$0xff]
  %v194 = vld [vmem:[%s1 + $0x4e8] sm:$0xff]
  %v195 = vld [vmem:[%s1 + $0x4f0] sm:$0xff]
  %v196 = vld [vmem:[%s1 + $0x4f8] sm:$0xff]
  %v197 = vld [vmem:[%s1 + $0x500] sm:$0xff]
  %v198 = vld [vmem:[%s1 + $0x508] sm:$0xff]
  %v199 = vld [vmem:[%s1 + $0x510] sm:$0xff]
  %v200 = vld [vmem:[%s1 + $0x518] sm:$0xff]
  %v201 = vld [vmem:[%s1 + $0x520] sm:$0xff]
  %v202 = vld [vmem:[%s1 + $0x528] sm:$0xff]
  %v203 = vld [vmem:[%s1 + $0x530] sm:$0xff]
  %v204 = vld [vmem:[%s1 + $0x538] sm:$0xff]
  %v205 = vld [vmem:[%s1 + $0x540] sm:$0xff]
  %v206 = vld [vmem:[%s1 + $0x548] sm:$0xff]
  %v207 = vld [vmem:[%s1 + $0x550] sm:$0xff]
  %v208 = vld [vmem:[%s1 + $0x558] sm:$0xff]
  %v209 = vld [vmem:[%s1 + $0x560] sm:$0xff]
  %v210 = vld [vmem:[%s1 + $0x568] sm:$0xff]
  %v211 = vld [vmem:[%s1 + $0x570] sm:$0xff]
  %v212 = vld [vmem:[%s1 + $0x578] sm:$0xff]
  %v213 = vld [vmem:[%s1 + $0x580] sm:$0xff]
  %v214 = vld [vmem:[%s1 + $0x588] sm:$0xff]
  %v215 = vld [vmem:[%s1 + $0x590] sm:$0xff]
  %v216 = vld [vmem:[%s1 + $0x598] sm:$0xff]
  %v217 = vld [vmem:[%s1 + $0x5a0] sm:$0xff]
  %v218 = vld [vmem:[%s1 + $0x5a8] sm:$0xff]
  %v219 = vld [vmem:[%s1 + $0x5b0] sm:$0xff]
  %v220 = vld [vmem:[%s1 + $0x5b8] sm:$0xff]
  %v221 = vld [vmem:[%s1 + $0x5c0] sm:$0xff]
  %v222 = vld [vmem:[%s1 + $0x5c8] sm:$0xff]
  %v223 = vld [vmem:[%s1 + $0x5d0] sm:$0xff]
  %v224 = vld [vmem:[%s1 + $0x5d8] sm:$0xff]
  %v225 = vld [vmem:[%s1 + $0x5e0] sm:$0xff]
  %v226 = vld [vmem:[%s1 + $0x5e8] sm:$0xff]
  %v227 = vld [vmem:[%s1 + $0x5f0] sm:$0xff]
  %v228 = vld [vmem:[%s1 + $0x5f8] sm:$0xff]
  %v229 = vld [vmem:[%s1 + $0x600] sm:$0xff]
  %v230 = vld [vmem:[%s1 + $0x608] sm:$0xff]
  %v231 = vld [vmem:[%s1 + $0x610] sm:$0xff]
  %v232 = vld [vmem:[%s1 + $0x618] sm:$0xff]
  %v233 = vld [vmem:[%s1 + $0x620] sm:$0xff]
  %v234 = vld [vmem:[%s1 + $0x628] sm:$0xff]
  %v235 = vld [vmem:[%s1 + $0x630] sm:$0xff]
  %v236 = vld [vmem:[%s1 + $0x638] sm:$0xff]
  %v237 = vld [vmem:[%s1 + $0x640] sm:$0xff]
  %v238 = vld [vmem:[%s1 + $0x648] sm:$0xff]
  %v239 = vld [vmem:[%s1 + $0x650] sm:$0xff]
  %v240 = vld [vmem:[%s1 + $0x658] sm:$0xff]
  %v241 = vld [vmem:[%s1 + $0x660] sm:$0xff]
  %v242 = vld [vmem:[%s1 + $0x668] sm:$0xff]
  %v243 = vld [vmem:[%s1 + $0x670] sm:$0xff]
  %v244 = vld [vmem:[%s1 + $0x678] sm:$0xff]
  %v245 = vld [vmem:[%s1 + $0x680] sm:$0xff]
  %v246 = vld [vmem:[%s1 + $0x688] sm:$0xff]
  %v247 = vld [vmem:[%s1 + $0x690] sm:$0xff]
  %v248 = vld [vmem:[%s1 + $0x698] sm:$0xff]
  %v249 = vld [vmem:[%s1 + $0x6a0] sm:$0xff]
  %v250 = vld [vmem:[%s1 + $0x6a8] sm:$0xff]
  %v251 = vld [vmem:[%s1 + $0x6b0] sm:$0xff]
  %v252 = vld [vmem:[%s1 + $0x6b8] sm:$0xff]
  %v253 = vld [vmem:[%s1 + $0x6c0] sm:$0xff]
  %v254 = vld [vmem:[%s1 + $0x6c8] sm:$0xff]
  %v255 = vld [vmem:[%s1 + $0x6d0] sm:$0xff]
  %v256 = vld [vmem:[%s1 + $0x6d8] sm:$0xff]
  %v257 = vld [vmem:[%s1 + $0x6e0] sm:$0xff]
  %v258 = vld [vmem:[%s1 + $0x6e8] sm:$0xff]
  %v259 = vld [vmem:[%s1 + $0x6f0] sm:$0xff]
  %v260 = vld [vmem:[%s1 + $0x6f8] sm:$0xff]
  %v261 = vld [vmem:[%s1 + $0x700] sm:$0xff]
  %v262 = vld [vmem:[%s1 + $0x708] sm:$0xff]
  %v263 = vld [vmem:[%s1 + $0x710] sm:$0xff]
  %v264 = vld [vmem:[%s1 + $0x718] sm:$0xff]
  %v265 = vld [vmem:[%s1 + $0x720] sm:$0xff]
  %v266 = vld [vmem:[%s1 + $0x728] sm:$0xff]
  %v267 = vld [vmem:[%s1 + $0x730] sm:$0xff]
  %v268 = vld [vmem:[%s1 + $0x738] sm:$0xff]
  %v269 = vld [vmem:[%s1 + $0x740] sm:$0xff]
  %v270 = vld [vmem:[%s1 + $0x748] sm:$0xff]
  %v271 = vld [vmem:[%s1 + $0x750] sm:$0xff]
  %v272 = vld [vmem:[%s1 + $0x758] sm:$0xff]
  %v273 = vld [vmem:[%s1 + $0x760] sm:$0xff]
  %v274 = vld [vmem:[%s1 + $0x768] sm:$0xff]
  %v275 = vld [vmem:[%s1 + $0x770] sm:$0xff]
  %v276 = vld [vmem:[%s1 + $0x778] sm:$0xff]
  %v277 = vld [vmem:[%s1 + $0x780] sm:$0xff]
  %v278 = vld [vmem:[%s1 + $0x788] sm:$0xff]
  %v279 = vld [vmem:[%s1 + $0x790] sm:$0xff]
  %v280 = vld [vmem:[%s1 + $0x798] sm:$0xff]
  %v281 = vld [vmem:[%s1 + $0x7a0] sm:$0xff]
  %v282 = vld [vmem:[%s1 + $0x7a8] sm:$0xff]
  %v283 = vld [vmem:[%s1 + $0x7b0] sm:$0xff]
  %v284 = vld [vmem:[%s1 + $0x7b8] sm:$0xff]
  %v285 = vld [vmem:[%s1 + $0x7c0] sm:$0xff]
  %v286 = vld [vmem:[%s1 + $0x7c8] sm:$0xff]
  %v287 = vld [vmem:[%s1 + $0x7d0] sm:$0xff]
  %v288 = vld [vmem:[%s1 + $0x7d8] sm:$0xff]
  %v289 = vld [vmem:[%s1 + $0x7e0] sm:$0xff]
  %v290 = vld [vmem:[%s1 + $0x7e8] sm:$0xff]
  %v291 = vld [vmem:[%s1 + $0x7f0] sm:$0xff]
  %v292 = vld [vmem:[%s1 + $0x7f8] sm:$0xff]
  %v293 = vld [vmem:[%s1 + $0x800] sm:$0xff]
  %v294 = vld [vmem:[%s1 + $0x808] sm:$0xff]
  %v295 = vld [vmem:[%s1 + $0x810] sm:$0xff]
  %v296 = vld [vmem:[%s1 + $0x818] sm:$0xff]
  %v297 = vld [vmem:[%s1 + $0x820] sm:$0xff]
  %v298 = vld [vmem:[%s1 + $0x828] sm:$0xff]
  %v299 = vld [vmem:[%s1 + $0x830] sm:$0xff]
  %v300 = vld [vmem:[%s1 + $0x838] sm:$0xff]
  %v301 = vld [vmem:[%s1 + $0x840] sm:$0xff]
  %v302 = vld [vmem:[%s1 + $0x848] sm:$0xff]
  %v303 = vld [vmem:[%s1 + $0x850] sm:$0xff]
  %v304 = vld [vmem:[%s1 + $0x858] sm:$0xff]
  %v305 = vld [vmem:[%s1 + $0x860] sm:$0xff]
  %v306 = vld [vmem:[%s1 + $0x868] sm:$0xff]
  %v307 = vld [vmem:[%s1 + $0x870] sm:$0xff]
  %v308 = vld [vmem:[%s1 + $0x878] sm:$0xff]
  %v309 = vld [vmem:[%s1 + $0x880] sm:$0xff]
  %v310 = vld [vmem:[%s1 + $0x888] sm:$0xff]
  %v311 = vld [vmem:[%s1 + $0x890] sm:$0xff]
  %v312 = vld [vmem:[%s1 + $0x898] sm:$0xff]
  %v313 = vld [vmem:[%s1 + $0x8a0] sm:$0xff]
  %v314 = vld [vmem:[%s1 + $0x8a8] sm:$0xff]
  %v315 = vld [vmem:[%s1 + $0x8b0] sm:$0xff]
  %v316 = vld [vmem:[%s1 + $0x8b8] sm:$0xff]
  %v317 = vld [vmem:[%s1 + $0x8c0] sm:$0xff]
  %v318 = vld [vmem:[%s1 + $0x8c8] sm:$0xff]
  %v319 = vld [vmem:[%s1 + $0x8d0] sm:$0xff]
  %v320 = vld [vmem:[%s1 + $0x8d8] sm:$0xff]
  %v321 = vld [vmem:[%s1 + $0x8e0] sm:$0xff]
  %v322 = vld [vmem:[%s1 + $0x8e8] sm:$0xff]
  %v323 = vld [vmem:[%s1 + $0x8f0] sm:$0xff]
  %v324 = vld [vmem:[%s1 + $0x8f8] sm:$0xff]
  %v325 = vld [vmem:[%s1 + $0x900] sm:$0xff]
  %v326 = vld [vmem:[%s1 + $0x908] sm:$0xff]
  %v327 = vld [vmem:[%s1 + $0x910] sm:$0xff]
  %v328 = vld [vmem:[%s1 + $0x918] sm:$0xff]
  %v329 = vld [vmem:[%s1 + $0x920] sm:$0xff]
  %v330 = vld [vmem:[%s1 + $0x928] sm:$0xff]
  %v331 = vld [vmem:[%s1 + $0x930] sm:$0xff]
  %v332 = vld [vmem:[%s1 + $0x938] sm:$0xff]
  %v333 = vld [vmem:[%s1 + $0x940] sm:$0xff]
  %v334 = vld [vmem:[%s1 + $0x948] sm:$0xff]
  %v335 = vld [vmem:[%s1 + $0x950] sm:$0xff]
  %v336 = vld [vmem:[%s1 + $0x958] sm:$0xff]
  %v337 = vld [vmem:[%s1 + $0x960] sm:$0xff]
  %v338 = vld [vmem:[%s1 + $0x968] sm:$0xff]
  %v339 = vld [vmem:[%s1 + $0x970] sm:$0xff]
  %v340 = vld [vmem:[%s1 + $0x978] sm:$0xff]
  %v341 = vld [vmem:[%s1 + $0x980] sm:$0xff]
  %v342 = vld [vmem:[%s1 + $0x988] sm:$0xff]
  %v343 = vld [vmem:[%s1 + $0x990] sm:$0xff]
  %v344 = vld [vmem:[%s1 + $0x998] sm:$0xff]
  %v345 = vld [vmem:[%s1 + $0x9a0] sm:$0xff]
  %v346 = vld [vmem:[%s1 + $0x9a8] sm:$0xff]
  %v347 = vld [vmem:[%s1 + $0x9b0] sm:$0xff]
  %v348 = vld [vmem:[%s1 + $0x9b8] sm:$0xff]
  %v349 = vld [vmem:[%s1 + $0x9c0] sm:$0xff]
  %v350 = vld [vmem:[%s1 + $0x9c8] sm:$0xff]
  %v351 = vld [vmem:[%s1 + $0x9d0] sm:$0xff]
  %v352 = vld [vmem:[%s1 + $0x9d8] sm:$0xff]
  %v353 = vld [vmem:[%s1 + $0x9e0] sm:$0xff]
  %v354 = vld [vmem:[%s1 + $0x9e8] sm:$0xff]
  %v355 = vld [vmem:[%s1 + $0x9f0] sm:$0xff]
  %v356 = vld [vmem:[%s1 + $0x9f8] sm:$0xff]
  %v357 = vld [vmem:[%s1 + $0xa00] sm:$0xff]
  %v358 = vld [vmem:[%s1 + $0xa08] sm:$0xff]
  %v359 = vld [vmem:[%s1 + $0xa10] sm:$0xff]
  %v360 = vld [vmem:[%s1 + $0xa18] sm:$0xff]
  %v361 = vld [vmem:[%s1 + $0xa20] sm:$0xff]
  %v362 = vld [vmem:[%s1 + $0xa28] sm:$0xff]
  %v363 = vld [vmem:[%s1 + $0xa30] sm:$0xff]
  %v364 = vld [vmem:[%s1 + $0xa38] sm:$0xff]
  %v365 = vld [vmem:[%s1 + $0xa40] sm:$0xff]
  %v366 = vld [vmem:[%s1 + $0xa48] sm:$0xff]
  %v367 = vld [vmem:[%s1 + $0xa50] sm:$0xff]
  %v368 = vld [vmem:[%s1 + $0xa58] sm:$0xff]
  %v369 = vld [vmem:[%s1 + $0xa60] sm:$0xff]
  %v370 = vld [vmem:[%s1 + $0xa68] sm:$0xff]
  %v371 = vld [vmem:[%s1 + $0xa70] sm:$0xff]
  %v372 = vld [vmem:[%s1 + $0xa78] sm:$0xff]
  %v373 = vld [vmem:[%s1 + $0xa80] sm:$0xff]
  %v374 = vld [vmem:[%s1 + $0xa88] sm:$0xff]
  %v375 = vld [vmem:[%s1 + $0xa90] sm:$0xff]
  %v376 = vld [vmem:[%s1 + $0xa98] sm:$0xff]
  %v377 = vld [vmem:[%s1 + $0xaa0] sm:$0xff]
  %v378 = vld [vmem:[%s1 + $0xaa8] sm:$0xff]
  %v379 = vld [vmem:[%s1 + $0xab0] sm:$0xff]
  %v380 = vld [vmem:[%s1 + $0xab8] sm:$0xff]
  %v381 = vld [vmem:[%s1 + $0xac0] sm:$0xff]
  %v382 = vld [vmem:[%s1 + $0xac8] sm:$0xff]
  %v383 = vld [vmem:[%s1 + $0xad0] sm:$0xff]
  %v384 = vld [vmem:[%s1 + $0xad8] sm:$0xff]
  %v385 = vld [vmem:[%s1 + $0xae0] sm:$0xff]
  %v386 = vld [vmem:[%s1 + $0xae8] sm:$0xff]
  %v387 = vld [vmem:[%s1 + $0xaf0] sm:$0xff]
  %v388 = vld [vmem:[%s1 + $0xaf8] sm:$0xff]
  %v389 = vld [vmem:[%s1 + $0xb00] sm:$0xff]
  %v390 = vld [vmem:[%s1 + $0xb08] sm:$0xff]
  %v391 = vld [vmem:[%s1 + $0xb10] sm:$0xff]
  %v392 = vld [vmem:[%s1 + $0xb18] sm:$0xff]
  %v393 = vld [vmem:[%s1 + $0xb20] sm:$0xff]
  %v394 = vld [vmem:[%s1 + $0xb28] sm:$0xff]
  %v395 = vld [vmem:[%s1 + $0xb30] sm:$0xff]
  %v396 = vld [vmem:[%s1 + $0xb38] sm:$0xff]
  %v397 = vld [vmem:[%s1 + $0xb40] sm:$0xff]
  %v398 = vld [vmem:[%s1 + $0xb48] sm:$0xff]
  %v399 = vld [vmem:[%s1 + $0xb50] sm:$0xff]
  %v400 = vld [vmem:[%s1 + $0xb58] sm:$0xff]
  %v401 = vld [vmem:[%s1 + $0xb60] sm:$0xff]
  %v402 = vld [vmem:[%s1 + $0xb68] sm:$0xff]
  %v403 = vld [vmem:[%s1 + $0xb70] sm:$0xff]
  %v404 = vld [vmem:[%s1 + $0xb78] sm:$0xff]
  %v405 = vld [vmem:[%s1 + $0xb80] sm:$0xff]
  %v406 = vld [vmem:[%s1 + $0xb88] sm:$0xff]
  %v407 = vld [vmem:[%s1 + $0xb90] sm:$0xff]
  %v408 = vld [vmem:[%s1 + $0xb98] sm:$0xff]
  %v409 = vld [vmem:[%s1 + $0xba0] sm:$0xff]
  %v410 = vld [vmem:[%s1 + $0xba8] sm:$0xff]
  %v411 = vld [vmem:[%s1 + $0xbb0] sm:$0xff]
  %v412 = vld [vmem:[%s1 + $0xbb8] sm:$0xff]
  %v413 = vld [vmem:[%s1 + $0xbc0] sm:$0xff]
  %v414 = vld [vmem:[%s1 + $0xbc8] sm:$0xff]
  %v415 = vld [vmem:[%s1 + $0xbd0] sm:$0xff]
  %v416 = vld [vmem:[%s1 + $0xbd8] sm:$0xff]
  %v417 = vld [vmem:[%s1 + $0xbe0] sm:$0xff]
  %v418 = vld [vmem:[%s1 + $0xbe8] sm:$0xff]
  %v419 = vld [vmem:[%s1 + $0xbf0] sm:$0xff]
  %v420 = vld [vmem:[%s1 + $0xbf8] sm:$0xff]
  %v421 = vld [vmem:[%s1 + $0xc00] sm:$0xff]
  %v422 = vld [vmem:[%s1 + $0xc08] sm:$0xff]
  %v423 = vld [vmem:[%s1 + $0xc10] sm:$0xff]
  %v424 = vld [vmem:[%s1 + $0xc18] sm:$0xff]
  %v425 = vld [vmem:[%s1 + $0xc20] sm:$0xff]
  %v426 = vld [vmem:[%s1 + $0xc28] sm:$0xff]
  %v427 = vld [vmem:[%s1 + $0xc30] sm:$0xff]
  %v428 = vld [vmem:[%s1 + $0xc38] sm:$0xff]
  %v429 = vld [vmem:[%s1 + $0xc40] sm:$0xff]
  %v430 = vld [vmem:[%s1 + $0xc48] sm:$0xff]
  %v431 = vld [vmem:[%s1 + $0xc50] sm:$0xff]
  %v432 = vld [vmem:[%s1 + $0xc58] sm:$0xff]
  %v433 = vld [vmem:[%s1 + $0xc60] sm:$0xff]
  %v434 = vld [vmem:[%s1 + $0xc68] sm:$0xff]
  %v435 = vld [vmem:[%s1 + $0xc70] sm:$0xff]
  %v436 = vld [vmem:[%s1 + $0xc78] sm:$0xff]
  %v437 = vld [vmem:[%s1 + $0xc80] sm:$0xff]
  %v438 = vld [vmem:[%s1 + $0xc88] sm:$0xff]
  %v439 = vld [vmem:[%s1 + $0xc90] sm:$0xff]
  %v440 = vld [vmem:[%s1 + $0xc98] sm:$0xff]
  %v441 = vld [vmem:[%s1 + $0xca0] sm:$0xff]
  %v442 = vld [vmem:[%s1 + $0xca8] sm:$0xff]
  %v443 = vld [vmem:[%s1 + $0xcb0] sm:$0xff]
  %v444 = vld [vmem:[%s1 + $0xcb8] sm:$0xff]
  %v445 = vld [vmem:[%s1 + $0xcc0] sm:$0xff]
  %v446 = vld [vmem:[%s1 + $0xcc8] sm:$0xff]
  %v447 = vld [vmem:[%s1 + $0xcd0] sm:$0xff]
  %v448 = vld [vmem:[%s1 + $0xcd8] sm:$0xff]
  %v449 = vld [vmem:[%s1 + $0xce0] sm:$0xff]
  %v450 = vld [vmem:[%s1 + $0xce8] sm:$0xff]
  %v451 = vld [vmem:[%s1 + $0xcf0] sm:$0xff]
  %v452 = vld [vmem:[%s1 + $0xcf8] sm:$0xff]
  %v453 = vld [vmem:[%s1 + $0xd00] sm:$0xff]
  %v454 = vld [vmem:[%s1 + $0xd08] sm:$0xff]
  %v455 = vld [vmem:[%s1 + $0xd10] sm:$0xff]
  %v456 = vld [vmem:[%s1 + $0xd18] sm:$0xff]
  %v457 = vld [vmem:[%s1 + $0xd20] sm:$0xff]
  %v458 = vld [vmem:[%s1 + $0xd28] sm:$0xff]
  %v459 = vld [vmem:[%s1 + $0xd30] sm:$0xff]
  %v460 = vld [vmem:[%s1 + $0xd38] sm:$0xff]
  %v461 = vld [vmem:[%s1 + $0xd40] sm:$0xff]
  %v462 = vld [vmem:[%s1 + $0xd48] sm:$0xff]
  %v463 = vld [vmem:[%s1 + $0xd50] sm:$0xff]
  %v464 = vld [vmem:[%s1 + $0xd58] sm:$0xff]
  %v465 = vld [vmem:[%s1 + $0xd60] sm:$0xff]
  %v466 = vld [vmem:[%s1 + $0xd68] sm:$0xff]
  %v467 = vld [vmem:[%s1 + $0xd70] sm:$0xff]
  %v468 = vld [vmem:[%s1 + $0xd78] sm:$0xff]
  %v469 = vld [vmem:[%s1 + $0xd80] sm:$0xff]
  %v470 = vld [vmem:[%s1 + $0xd88] sm:$0xff]
  %v471 = vld [vmem:[%s1 + $0xd90] sm:$0xff]
  %v472 = vld [vmem:[%s1 + $0xd98] sm:$0xff]
  %v473 = vld [vmem:[%s1 + $0xda0] sm:$0xff]
  %v474 = vld [vmem:[%s1 + $0xda8] sm:$0xff]
  %v475 = vld [vmem:[%s1 + $0xdb0] sm:$0xff]
  %v476 = vld [vmem:[%s1 + $0xdb8] sm:$0xff]
  %v477 = vld [vmem:[%s1 + $0xdc0] sm:$0xff]
  %v478 = vld [vmem:[%s1 + $0xdc8] sm:$0xff]
  %v479 = vld [vmem:[%s1 + $0xdd0] sm:$0xff]
  %v480 = vld [vmem:[%s1 + $0xdd8] sm:$0xff]
  %v481 = vld [vmem:[%s1 + $0xde0] sm:$0xff]
  %v482 = vld [vmem:[%s1 + $0xde8] sm:$0xff]
  %v483 = vld [vmem:[%s1 + $0xdf0] sm:$0xff]
  %v484 = vld [vmem:[%s1 + $0xdf8] sm:$0xff]
  %v485 = vld [vmem:[%s1 + $0xe00] sm:$0xff]
  %v486 = vld [vmem:[%s1 + $0xe08] sm:$0xff]
  %v487 = vld [vmem:[%s1 + $0xe10] sm:$0xff]
  %v488 = vld [vmem:[%s1 + $0xe18] sm:$0xff]
  %v489 = vld [vmem:[%s1 + $0xe20] sm:$0xff]
  %v490 = vld [vmem:[%s1 + $0xe28] sm:$0xff]
  %v491 = vld [vmem:[%s1 + $0xe30] sm:$0xff]
  %v492 = vld [vmem:[%s1 + $0xe38] sm:$0xff]
  %v493 = vld [vmem:[%s1 + $0xe40] sm:$0xff]
  %v494 = vld [vmem:[%s1 + $0xe48] sm:$0xff]
  %v495 = vld [vmem:[%s1 + $0xe50] sm:$0xff]
  %v496 = vld [vmem:[%s1 + $0xe58] sm:$0xff]
  %v497 = vld [vmem:[%s1 + $0xe60] sm:$0xff]
  %v498 = vld [vmem:[%s1 + $0xe68] sm:$0xff]
  %v499 = vld [vmem:[%s1 + $0xe70] sm:$0xff]
  %v500 = vld [vmem:[%s1 + $0xe78] sm:$0xff]
  %v501 = vld [vmem:[%s1 + $0xe80] sm:$0xff]
  %v502 = vld [vmem:[%s1 + $0xe88] sm:$0xff]
  %v503 = vld [vmem:[%s1 + $0xe90] sm:$0xff]
  %v504 = vld [vmem:[%s1 + $0xe98] sm:$0xff]
  %v505 = vld [vmem:[%s1 + $0xea0] sm:$0xff]
  %v506 = vld [vmem:[%s1 + $0xea8] sm:$0xff]
  %v507 = vld [vmem:[%s1 + $0xeb0] sm:$0xff]
  %v508 = vld [vmem:[%s1 + $0xeb8] sm:$0xff]
  %v509 = vld [vmem:[%s1 + $0xec0] sm:$0xff]
  %v510 = vld [vmem:[%s1 + $0xec8] sm:$0xff]
  %v511 = vld [vmem:[%s1 + $0xed0] sm:$0xff]
  %v512 = vld [vmem:[%s1 + $0xed8] sm:$0xff]
  %v513 = vld [vmem:[%s1 + $0xee0] sm:$0xff]
  %v514 = vld [vmem:[%s1 + $0xee8] sm:$0xff]
  %v515 = vld [vmem:[%s1 + $0xef0] sm:$0xff]
  %v516 = vld [vmem:[%s1 + $0xef8] sm:$0xff]
  %v517 = vld [vmem:[%s1 + $0xf00] sm:$0xff]
  %v518 = vld [vmem:[%s1 + $0xf08] sm:$0xff]
  %v519 = vld [vmem:[%s1 + $0xf10] sm:$0xff]
  %v520 = vld [vmem:[%s1 + $0xf18] sm:$0xff]
  %v521 = vld [vmem:[%s1 + $0xf20] sm:$0xff]
  %v522 = vld [vmem:[%s1 + $0xf28] sm:$0xff]
  %v523 = vld [vmem:[%s1 + $0xf30] sm:$0xff]
  %v524 = vld [vmem:[%s1 + $0xf38] sm:$0xff]
  %v525 = vld [vmem:[%s1 + $0xf40] sm:$0xff]
  %v526 = vld [vmem:[%s1 + $0xf48] sm:$0xff]
  %v527 = vld [vmem:[%s1 + $0xf50] sm:$0xff]
  %v528 = vld [vmem:[%s1 + $0xf58] sm:$0xff]
  %v529 = vld [vmem:[%s1 + $0xf60] sm:$0xff]
  %v530 = vld [vmem:[%s1 + $0xf68] sm:$0xff]
  %v531 = vld [vmem:[%s1 + $0xf70] sm:$0xff]
  %v532 = vld [vmem:[%s1 + $0xf78] sm:$0xff]
  %v533 = vld [vmem:[%s1 + $0xf80] sm:$0xff]
  %v534 = vld [vmem:[%s1 + $0xf88] sm:$0xff]
  %v535 = vld [vmem:[%s1 + $0xf90] sm:$0xff]
  %v536 = vld [vmem:[%s1 + $0xf98] sm:$0xff]
  %v537 = vld [vmem:[%s1 + $0xfa0] sm:$0xff]
  %v538 = vld [vmem:[%s1 + $0xfa8] sm:$0xff]
  %v539 = vld [vmem:[%s1 + $0xfb0] sm:$0xff]
  %v540 = vld [vmem:[%s1 + $0xfb8] sm:$0xff]
  %v541 = vld [vmem:[%s1 + $0xfc0] sm:$0xff]
  %v542 = vld [vmem:[%s1 + $0xfc8] sm:$0xff]
  %v543 = vld [vmem:[%s1 + $0xfd0] sm:$0xff]
  %v544 = vld [vmem:[%s1 + $0xfd8] sm:$0xff]
  %v545 = vld [vmem:[%s1 + $0xfe0] sm:$0xff]
  %v546 = vld [vmem:[%s1 + $0xfe8] sm:$0xff]
  %v547 = vld [vmem:[%s1 + $0xff0] sm:$0xff]
  %v548 = vld [vmem:[%s1 + $0xff8] sm:$0xff]
  %v549 = vld [vmem:[%s2] sm:$0xf]
  %v551 = vlaneseq
  %v552 = vshrl.u32 %v551, 7
  %v553 = vsub.s32 0, %v552
  %v554 = vrot.slane %v549, %v553
  %v555 = vlaneseq
  %v556 = vshrl.u32 %v555, 7
  %v557 = vsub.s32 1, %v556
  %v558 = vrot.slane %v549, %v557
  %v559 = vlaneseq
  %v560 = vshrl.u32 %v559, 7
  %v561 = vsub.s32 2, %v560
  %v562 = vrot.slane %v549, %v561
  %v563 = vlaneseq
  %v564 = vshrl.u32 %v563, 7
  %v565 = vsub.s32 3, %v564
  %v566 = vrot.slane %v549, %v565
  %v587 = vunpack.c.l.b16 %v21
  %v588 = vunpack.c.h.b16 %v21
  %v589 = vunpack.c.l.b16 %v22
  %v590 = vunpack.c.h.b16 %v22
  %v591 = vunpack.c.l.b16 %v23
  %v592 = vunpack.c.h.b16 %v23
  %v593 = vunpack.c.l.b16 %v24
  %v594 = vunpack.c.h.b16 %v24
  %v595 = vunpack.c.l.b16 %v25
  %v596 = vunpack.c.h.b16 %v25
  %v597 = vunpack.c.l.b16 %v26
  %v598 = vunpack.c.h.b16 %v26
  %v599 = vunpack.c.l.b16 %v27
  %v600 = vunpack.c.h.b16 %v27
  %v601 = vunpack.c.l.b16 %v28
  %v602 = vunpack.c.h.b16 %v28
  %v603 = vunpack.c.l.b16 %v29
  %v604 = vunpack.c.h.b16 %v29
  %v605 = vunpack.c.l.b16 %v30
  %v606 = vunpack.c.h.b16 %v30
  %v607 = vunpack.c.l.b16 %v31
  %v608 = vunpack.c.h.b16 %v31
  %v609 = vunpack.c.l.b16 %v32
  %v610 = vunpack.c.h.b16 %v32
  %v611 = vunpack.c.l.b16 %v33
  %v612 = vunpack.c.h.b16 %v33
  %v613 = vunpack.c.l.b16 %v34
  %v614 = vunpack.c.h.b16 %v34
  %v615 = vunpack.c.l.b16 %v35
  %v616 = vunpack.c.h.b16 %v35
  %v617 = vunpack.c.l.b16 %v36
  %v618 = vunpack.c.h.b16 %v36
  %v619 = vpack.c.b16 %v603, %v587
  %v620 = vpack.c.b16 %v604, %v588
  %v621 = vpack.c.b16 %v605, %v589
  %v622 = vpack.c.b16 %v606, %v590
  %v623 = vpack.c.b16 %v607, %v591
  %v624 = vpack.c.b16 %v608, %v592
  %v625 = vpack.c.b16 %v609, %v593
  %v626 = vpack.c.b16 %v610, %v594
  %v627 = vpack.c.b16 %v611, %v595
  %v628 = vpack.c.b16 %v612, %v596
  %v629 = vpack.c.b16 %v613, %v597
  %v630 = vpack.c.b16 %v614, %v598
  %v631 = vpack.c.b16 %v615, %v599
  %v632 = vpack.c.b16 %v616, %v600
  %v633 = vpack.c.b16 %v617, %v601
  %v634 = vpack.c.b16 %v618, %v602
  %v1163 = vunpack.c.l.b16 %v37
  %v1164 = vunpack.c.h.b16 %v37
  %v1165 = vunpack.c.l.b16 %v38
  %v1166 = vunpack.c.h.b16 %v38
  %v1167 = vunpack.c.l.b16 %v39
  %v1168 = vunpack.c.h.b16 %v39
  %v1169 = vunpack.c.l.b16 %v40
  %v1170 = vunpack.c.h.b16 %v40
  %v1171 = vunpack.c.l.b16 %v41
  %v1172 = vunpack.c.h.b16 %v41
  %v1173 = vunpack.c.l.b16 %v42
  %v1174 = vunpack.c.h.b16 %v42
  %v1175 = vunpack.c.l.b16 %v43
  %v1176 = vunpack.c.h.b16 %v43
  %v1177 = vunpack.c.l.b16 %v44
  %v1178 = vunpack.c.h.b16 %v44
  %v1179 = vunpack.c.l.b16 %v45
  %v1180 = vunpack.c.h.b16 %v45
  %v1181 = vunpack.c.l.b16 %v46
  %v1182 = vunpack.c.h.b16 %v46
  %v1183 = vunpack.c.l.b16 %v47
  %v1184 = vunpack.c.h.b16 %v47
  %v1185 = vunpack.c.l.b16 %v48
  %v1186 = vunpack.c.h.b16 %v48
  %v1187 = vunpack.c.l.b16 %v49
  %v1188 = vunpack.c.h.b16 %v49
  %v1189 = vunpack.c.l.b16 %v50
  %v1190 = vunpack.c.h.b16 %v50
  %v1191 = vunpack.c.l.b16 %v51
  %v1192 = vunpack.c.h.b16 %v51
  %v1193 = vunpack.c.l.b16 %v52
  %v1194 = vunpack.c.h.b16 %v52
  %v1195 = vunpack.c.l.b16 %v53
  %v1196 = vunpack.c.h.b16 %v53
  %v1197 = vunpack.c.l.b16 %v54
  %v1198 = vunpack.c.h.b16 %v54
  %v1199 = vunpack.c.l.b16 %v55
  %v1200 = vunpack.c.h.b16 %v55
  %v1201 = vunpack.c.l.b16 %v56
  %v1202 = vunpack.c.h.b16 %v56
  %v1203 = vunpack.c.l.b16 %v57
  %v1204 = vunpack.c.h.b16 %v57
  %v1205 = vunpack.c.l.b16 %v58
  %v1206 = vunpack.c.h.b16 %v58
  %v1207 = vunpack.c.l.b16 %v59
  %v1208 = vunpack.c.h.b16 %v59
  %v1209 = vunpack.c.l.b16 %v60
  %v1210 = vunpack.c.h.b16 %v60
  %v1211 = vunpack.c.l.b16 %v61
  %v1212 = vunpack.c.h.b16 %v61
  %v1213 = vunpack.c.l.b16 %v62
  %v1214 = vunpack.c.h.b16 %v62
  %v1215 = vunpack.c.l.b16 %v63
  %v1216 = vunpack.c.h.b16 %v63
  %v1217 = vunpack.c.l.b16 %v64
  %v1218 = vunpack.c.h.b16 %v64
  %v1219 = vunpack.c.l.b16 %v65
  %v1220 = vunpack.c.h.b16 %v65
  %v1221 = vunpack.c.l.b16 %v66
  %v1222 = vunpack.c.h.b16 %v66
  %v1223 = vunpack.c.l.b16 %v67
  %v1224 = vunpack.c.h.b16 %v67
  %v1225 = vunpack.c.l.b16 %v68
  %v1226 = vunpack.c.h.b16 %v68
  %v1227 = vunpack.c.l.b16 %v69
  %v1228 = vunpack.c.h.b16 %v69
  %v1229 = vunpack.c.l.b16 %v70
  %v1230 = vunpack.c.h.b16 %v70
  %v1231 = vunpack.c.l.b16 %v71
  %v1232 = vunpack.c.h.b16 %v71
  %v1233 = vunpack.c.l.b16 %v72
  %v1234 = vunpack.c.h.b16 %v72
  %v1235 = vunpack.c.l.b16 %v73
  %v1236 = vunpack.c.h.b16 %v73
  %v1237 = vunpack.c.l.b16 %v74
  %v1238 = vunpack.c.h.b16 %v74
  %v1239 = vunpack.c.l.b16 %v75
  %v1240 = vunpack.c.h.b16 %v75
  %v1241 = vunpack.c.l.b16 %v76
  %v1242 = vunpack.c.h.b16 %v76
  %v1243 = vunpack.c.l.b16 %v77
  %v1244 = vunpack.c.h.b16 %v77
  %v1245 = vunpack.c.l.b16 %v78
  %v1246 = vunpack.c.h.b16 %v78
  %v1247 = vunpack.c.l.b16 %v79
  %v1248 = vunpack.c.h.b16 %v79
  %v1249 = vunpack.c.l.b16 %v80
  %v1250 = vunpack.c.h.b16 %v80
  %v1251 = vunpack.c.l.b16 %v81
  %v1252 = vunpack.c.h.b16 %v81
  %v1253 = vunpack.c.l.b16 %v82
  %v1254 = vunpack.c.h.b16 %v82
  %v1255 = vunpack.c.l.b16 %v83
  %v1256 = vunpack.c.h.b16 %v83
  %v1257 = vunpack.c.l.b16 %v84
  %v1258 = vunpack.c.h.b16 %v84
  %v1259 = vunpack.c.l.b16 %v85
  %v1260 = vunpack.c.h.b16 %v85
  %v1261 = vunpack.c.l.b16 %v86
  %v1262 = vunpack.c.h.b16 %v86
  %v1263 = vunpack.c.l.b16 %v87
  %v1264 = vunpack.c.h.b16 %v87
  %v1265 = vunpack.c.l.b16 %v88
  %v1266 = vunpack.c.h.b16 %v88
  %v1267 = vunpack.c.l.b16 %v89
  %v1268 = vunpack.c.h.b16 %v89
  %v1269 = vunpack.c.l.b16 %v90
  %v1270 = vunpack.c.h.b16 %v90
  %v1271 = vunpack.c.l.b16 %v91
  %v1272 = vunpack.c.h.b16 %v91
  %v1273 = vunpack.c.l.b16 %v92
  %v1274 = vunpack.c.h.b16 %v92
  %v1275 = vunpack.c.l.b16 %v93
  %v1276 = vunpack.c.h.b16 %v93
  %v1277 = vunpack.c.l.b16 %v94
  %v1278 = vunpack.c.h.b16 %v94
  %v1279 = vunpack.c.l.b16 %v95
  %v1280 = vunpack.c.h.b16 %v95
  %v1281 = vunpack.c.l.b16 %v96
  %v1282 = vunpack.c.h.b16 %v96
  %v1283 = vunpack.c.l.b16 %v97
  %v1284 = vunpack.c.h.b16 %v97
  %v1285 = vunpack.c.l.b16 %v98
  %v1286 = vunpack.c.h.b16 %v98
  %v1287 = vunpack.c.l.b16 %v99
  %v1288 = vunpack.c.h.b16 %v99
  %v1289 = vunpack.c.l.b16 %v100
  %v1290 = vunpack.c.h.b16 %v100
  %v1291 = vunpack.c.l.b16 %v101
  %v1292 = vunpack.c.h.b16 %v101
  %v1293 = vunpack.c.l.b16 %v102
  %v1294 = vunpack.c.h.b16 %v102
  %v1295 = vunpack.c.l.b16 %v103
  %v1296 = vunpack.c.h.b16 %v103
  %v1297 = vunpack.c.l.b16 %v104
  %v1298 = vunpack.c.h.b16 %v104
  %v1299 = vunpack.c.l.b16 %v105
  %v1300 = vunpack.c.h.b16 %v105
  %v1301 = vunpack.c.l.b16 %v106
  %v1302 = vunpack.c.h.b16 %v106
  %v1303 = vunpack.c.l.b16 %v107
  %v1304 = vunpack.c.h.b16 %v107
  %v1305 = vunpack.c.l.b16 %v108
  %v1306 = vunpack.c.h.b16 %v108
  %v1307 = vunpack.c.l.b16 %v109
  %v1308 = vunpack.c.h.b16 %v109
  %v1309 = vunpack.c.l.b16 %v110
  %v1310 = vunpack.c.h.b16 %v110
  %v1311 = vunpack.c.l.b16 %v111
  %v1312 = vunpack.c.h.b16 %v111
  %v1313 = vunpack.c.l.b16 %v112
  %v1314 = vunpack.c.h.b16 %v112
  %v1315 = vunpack.c.l.b16 %v113
  %v1316 = vunpack.c.h.b16 %v113
  %v1317 = vunpack.c.l.b16 %v114
  %v1318 = vunpack.c.h.b16 %v114
  %v1319 = vunpack.c.l.b16 %v115
  %v1320 = vunpack.c.h.b16 %v115
  %v1321 = vunpack.c.l.b16 %v116
  %v1322 = vunpack.c.h.b16 %v116
  %v1323 = vunpack.c.l.b16 %v117
  %v1324 = vunpack.c.h.b16 %v117
  %v1325 = vunpack.c.l.b16 %v118
  %v1326 = vunpack.c.h.b16 %v118
  %v1327 = vunpack.c.l.b16 %v119
  %v1328 = vunpack.c.h.b16 %v119
  %v1329 = vunpack.c.l.b16 %v120
  %v1330 = vunpack.c.h.b16 %v120
  %v1331 = vunpack.c.l.b16 %v121
  %v1332 = vunpack.c.h.b16 %v121
  %v1333 = vunpack.c.l.b16 %v122
  %v1334 = vunpack.c.h.b16 %v122
  %v1335 = vunpack.c.l.b16 %v123
  %v1336 = vunpack.c.h.b16 %v123
  %v1337 = vunpack.c.l.b16 %v124
  %v1338 = vunpack.c.h.b16 %v124
  %v1339 = vunpack.c.l.b16 %v125
  %v1340 = vunpack.c.h.b16 %v125
  %v1341 = vunpack.c.l.b16 %v126
  %v1342 = vunpack.c.h.b16 %v126
  %v1343 = vunpack.c.l.b16 %v127
  %v1344 = vunpack.c.h.b16 %v127
  %v1345 = vunpack.c.l.b16 %v128
  %v1346 = vunpack.c.h.b16 %v128
  %v1347 = vunpack.c.l.b16 %v129
  %v1348 = vunpack.c.h.b16 %v129
  %v1349 = vunpack.c.l.b16 %v130
  %v1350 = vunpack.c.h.b16 %v130
  %v1351 = vunpack.c.l.b16 %v131
  %v1352 = vunpack.c.h.b16 %v131
  %v1353 = vunpack.c.l.b16 %v132
  %v1354 = vunpack.c.h.b16 %v132
  %v1355 = vunpack.c.l.b16 %v133
  %v1356 = vunpack.c.h.b16 %v133
  %v1357 = vunpack.c.l.b16 %v134
  %v1358 = vunpack.c.h.b16 %v134
  %v1359 = vunpack.c.l.b16 %v135
  %v1360 = vunpack.c.h.b16 %v135
  %v1361 = vunpack.c.l.b16 %v136
  %v1362 = vunpack.c.h.b16 %v136
  %v1363 = vunpack.c.l.b16 %v137
  %v1364 = vunpack.c.h.b16 %v137
  %v1365 = vunpack.c.l.b16 %v138
  %v1366 = vunpack.c.h.b16 %v138
  %v1367 = vunpack.c.l.b16 %v139
  %v1368 = vunpack.c.h.b16 %v139
  %v1369 = vunpack.c.l.b16 %v140
  %v1370 = vunpack.c.h.b16 %v140
  %v1371 = vunpack.c.l.b16 %v141
  %v1372 = vunpack.c.h.b16 %v141
  %v1373 = vunpack.c.l.b16 %v142
  %v1374 = vunpack.c.h.b16 %v142
  %v1375 = vunpack.c.l.b16 %v143
  %v1376 = vunpack.c.h.b16 %v143
  %v1377 = vunpack.c.l.b16 %v144
  %v1378 = vunpack.c.h.b16 %v144
  %v1379 = vunpack.c.l.b16 %v145
  %v1380 = vunpack.c.h.b16 %v145
  %v1381 = vunpack.c.l.b16 %v146
  %v1382 = vunpack.c.h.b16 %v146
  %v1383 = vunpack.c.l.b16 %v147
  %v1384 = vunpack.c.h.b16 %v147
  %v1385 = vunpack.c.l.b16 %v148
  %v1386 = vunpack.c.h.b16 %v148
  %v1387 = vunpack.c.l.b16 %v149
  %v1388 = vunpack.c.h.b16 %v149
  %v1389 = vunpack.c.l.b16 %v150
  %v1390 = vunpack.c.h.b16 %v150
  %v1391 = vunpack.c.l.b16 %v151
  %v1392 = vunpack.c.h.b16 %v151
  %v1393 = vunpack.c.l.b16 %v152
  %v1394 = vunpack.c.h.b16 %v152
  %v1395 = vunpack.c.l.b16 %v153
  %v1396 = vunpack.c.h.b16 %v153
  %v1397 = vunpack.c.l.b16 %v154
  %v1398 = vunpack.c.h.b16 %v154
  %v1399 = vunpack.c.l.b16 %v155
  %v1400 = vunpack.c.h.b16 %v155
  %v1401 = vunpack.c.l.b16 %v156
  %v1402 = vunpack.c.h.b16 %v156
  %v1403 = vunpack.c.l.b16 %v157
  %v1404 = vunpack.c.h.b16 %v157
  %v1405 = vunpack.c.l.b16 %v158
  %v1406 = vunpack.c.h.b16 %v158
  %v1407 = vunpack.c.l.b16 %v159
  %v1408 = vunpack.c.h.b16 %v159
  %v1409 = vunpack.c.l.b16 %v160
  %v1410 = vunpack.c.h.b16 %v160
  %v1411 = vunpack.c.l.b16 %v161
  %v1412 = vunpack.c.h.b16 %v161
  %v1413 = vunpack.c.l.b16 %v162
  %v1414 = vunpack.c.h.b16 %v162
  %v1415 = vunpack.c.l.b16 %v163
  %v1416 = vunpack.c.h.b16 %v163
  %v1417 = vunpack.c.l.b16 %v164
  %v1418 = vunpack.c.h.b16 %v164
  %v1419 = vunpack.c.l.b16 %v165
  %v1420 = vunpack.c.h.b16 %v165
  %v1421 = vunpack.c.l.b16 %v166
  %v1422 = vunpack.c.h.b16 %v166
  %v1423 = vunpack.c.l.b16 %v167
  %v1424 = vunpack.c.h.b16 %v167
  %v1425 = vunpack.c.l.b16 %v168
  %v1426 = vunpack.c.h.b16 %v168
  %v1427 = vunpack.c.l.b16 %v169
  %v1428 = vunpack.c.h.b16 %v169
  %v1429 = vunpack.c.l.b16 %v170
  %v1430 = vunpack.c.h.b16 %v170
  %v1431 = vunpack.c.l.b16 %v171
  %v1432 = vunpack.c.h.b16 %v171
  %v1433 = vunpack.c.l.b16 %v172
  %v1434 = vunpack.c.h.b16 %v172
  %v1435 = vunpack.c.l.b16 %v173
  %v1436 = vunpack.c.h.b16 %v173
  %v1437 = vunpack.c.l.b16 %v174
  %v1438 = vunpack.c.h.b16 %v174
  %v1439 = vunpack.c.l.b16 %v175
  %v1440 = vunpack.c.h.b16 %v175
  %v1441 = vunpack.c.l.b16 %v176
  %v1442 = vunpack.c.h.b16 %v176
  %v1443 = vunpack.c.l.b16 %v177
  %v1444 = vunpack.c.h.b16 %v177
  %v1445 = vunpack.c.l.b16 %v178
  %v1446 = vunpack.c.h.b16 %v178
  %v1447 = vunpack.c.l.b16 %v179
  %v1448 = vunpack.c.h.b16 %v179
  %v1449 = vunpack.c.l.b16 %v180
  %v1450 = vunpack.c.h.b16 %v180
  %v1451 = vunpack.c.l.b16 %v181
  %v1452 = vunpack.c.h.b16 %v181
  %v1453 = vunpack.c.l.b16 %v182
  %v1454 = vunpack.c.h.b16 %v182
  %v1455 = vunpack.c.l.b16 %v183
  %v1456 = vunpack.c.h.b16 %v183
  %v1457 = vunpack.c.l.b16 %v184
  %v1458 = vunpack.c.h.b16 %v184
  %v1459 = vunpack.c.l.b16 %v185
  %v1460 = vunpack.c.h.b16 %v185
  %v1461 = vunpack.c.l.b16 %v186
  %v1462 = vunpack.c.h.b16 %v186
  %v1463 = vunpack.c.l.b16 %v187
  %v1464 = vunpack.c.h.b16 %v187
  %v1465 = vunpack.c.l.b16 %v188
  %v1466 = vunpack.c.h.b16 %v188
  %v1467 = vunpack.c.l.b16 %v189
  %v1468 = vunpack.c.h.b16 %v189
  %v1469 = vunpack.c.l.b16 %v190
  %v1470 = vunpack.c.h.b16 %v190
  %v1471 = vunpack.c.l.b16 %v191
  %v1472 = vunpack.c.h.b16 %v191
  %v1473 = vunpack.c.l.b16 %v192
  %v1474 = vunpack.c.h.b16 %v192
  %v1475 = vunpack.c.l.b16 %v193
  %v1476 = vunpack.c.h.b16 %v193
  %v1477 = vunpack.c.l.b16 %v194
  %v1478 = vunpack.c.h.b16 %v194
  %v1479 = vunpack.c.l.b16 %v195
  %v1480 = vunpack.c.h.b16 %v195
  %v1481 = vunpack.c.l.b16 %v196
  %v1482 = vunpack.c.h.b16 %v196
  %v1483 = vunpack.c.l.b16 %v197
  %v1484 = vunpack.c.h.b16 %v197
  %v1485 = vunpack.c.l.b16 %v198
  %v1486 = vunpack.c.h.b16 %v198
  %v1487 = vunpack.c.l.b16 %v199
  %v1488 = vunpack.c.h.b16 %v199
  %v1489 = vunpack.c.l.b16 %v200
  %v1490 = vunpack.c.h.b16 %v200
  %v1491 = vunpack.c.l.b16 %v201
  %v1492 = vunpack.c.h.b16 %v201
  %v1493 = vunpack.c.l.b16 %v202
  %v1494 = vunpack.c.h.b16 %v202
  %v1495 = vunpack.c.l.b16 %v203
  %v1496 = vunpack.c.h.b16 %v203
  %v1497 = vunpack.c.l.b16 %v204
  %v1498 = vunpack.c.h.b16 %v204
  %v1499 = vunpack.c.l.b16 %v205
  %v1500 = vunpack.c.h.b16 %v205
  %v1501 = vunpack.c.l.b16 %v206
  %v1502 = vunpack.c.h.b16 %v206
  %v1503 = vunpack.c.l.b16 %v207
  %v1504 = vunpack.c.h.b16 %v207
  %v1505 = vunpack.c.l.b16 %v208
  %v1506 = vunpack.c.h.b16 %v208
  %v1507 = vunpack.c.l.b16 %v209
  %v1508 = vunpack.c.h.b16 %v209
  %v1509 = vunpack.c.l.b16 %v210
  %v1510 = vunpack.c.h.b16 %v210
  %v1511 = vunpack.c.l.b16 %v211
  %v1512 = vunpack.c.h.b16 %v211
  %v1513 = vunpack.c.l.b16 %v212
  %v1514 = vunpack.c.h.b16 %v212
  %v1515 = vunpack.c.l.b16 %v213
  %v1516 = vunpack.c.h.b16 %v213
  %v1517 = vunpack.c.l.b16 %v214
  %v1518 = vunpack.c.h.b16 %v214
  %v1519 = vunpack.c.l.b16 %v215
  %v1520 = vunpack.c.h.b16 %v215
  %v1521 = vunpack.c.l.b16 %v216
  %v1522 = vunpack.c.h.b16 %v216
  %v1523 = vunpack.c.l.b16 %v217
  %v1524 = vunpack.c.h.b16 %v217
  %v1525 = vunpack.c.l.b16 %v218
  %v1526 = vunpack.c.h.b16 %v218
  %v1527 = vunpack.c.l.b16 %v219
  %v1528 = vunpack.c.h.b16 %v219
  %v1529 = vunpack.c.l.b16 %v220
  %v1530 = vunpack.c.h.b16 %v220
  %v1531 = vunpack.c.l.b16 %v221
  %v1532 = vunpack.c.h.b16 %v221
  %v1533 = vunpack.c.l.b16 %v222
  %v1534 = vunpack.c.h.b16 %v222
  %v1535 = vunpack.c.l.b16 %v223
  %v1536 = vunpack.c.h.b16 %v223
  %v1537 = vunpack.c.l.b16 %v224
  %v1538 = vunpack.c.h.b16 %v224
  %v1539 = vunpack.c.l.b16 %v225
  %v1540 = vunpack.c.h.b16 %v225
  %v1541 = vunpack.c.l.b16 %v226
  %v1542 = vunpack.c.h.b16 %v226
  %v1543 = vunpack.c.l.b16 %v227
  %v1544 = vunpack.c.h.b16 %v227
  %v1545 = vunpack.c.l.b16 %v228
  %v1546 = vunpack.c.h.b16 %v228
  %v1547 = vunpack.c.l.b16 %v229
  %v1548 = vunpack.c.h.b16 %v229
  %v1549 = vunpack.c.l.b16 %v230
  %v1550 = vunpack.c.h.b16 %v230
  %v1551 = vunpack.c.l.b16 %v231
  %v1552 = vunpack.c.h.b16 %v231
  %v1553 = vunpack.c.l.b16 %v232
  %v1554 = vunpack.c.h.b16 %v232
  %v1555 = vunpack.c.l.b16 %v233
  %v1556 = vunpack.c.h.b16 %v233
  %v1557 = vunpack.c.l.b16 %v234
  %v1558 = vunpack.c.h.b16 %v234
  %v1559 = vunpack.c.l.b16 %v235
  %v1560 = vunpack.c.h.b16 %v235
  %v1561 = vunpack.c.l.b16 %v236
  %v1562 = vunpack.c.h.b16 %v236
  %v1563 = vunpack.c.l.b16 %v237
  %v1564 = vunpack.c.h.b16 %v237
  %v1565 = vunpack.c.l.b16 %v238
  %v1566 = vunpack.c.h.b16 %v238
  %v1567 = vunpack.c.l.b16 %v239
  %v1568 = vunpack.c.h.b16 %v239
  %v1569 = vunpack.c.l.b16 %v240
  %v1570 = vunpack.c.h.b16 %v240
  %v1571 = vunpack.c.l.b16 %v241
  %v1572 = vunpack.c.h.b16 %v241
  %v1573 = vunpack.c.l.b16 %v242
  %v1574 = vunpack.c.h.b16 %v242
  %v1575 = vunpack.c.l.b16 %v243
  %v1576 = vunpack.c.h.b16 %v243
  %v1577 = vunpack.c.l.b16 %v244
  %v1578 = vunpack.c.h.b16 %v244
  %v1579 = vunpack.c.l.b16 %v245
  %v1580 = vunpack.c.h.b16 %v245
  %v1581 = vunpack.c.l.b16 %v246
  %v1582 = vunpack.c.h.b16 %v246
  %v1583 = vunpack.c.l.b16 %v247
  %v1584 = vunpack.c.h.b16 %v247
  %v1585 = vunpack.c.l.b16 %v248
  %v1586 = vunpack.c.h.b16 %v248
  %v1587 = vunpack.c.l.b16 %v249
  %v1588 = vunpack.c.h.b16 %v249
  %v1589 = vunpack.c.l.b16 %v250
  %v1590 = vunpack.c.h.b16 %v250
  %v1591 = vunpack.c.l.b16 %v251
  %v1592 = vunpack.c.h.b16 %v251
  %v1593 = vunpack.c.l.b16 %v252
  %v1594 = vunpack.c.h.b16 %v252
  %v1595 = vunpack.c.l.b16 %v253
  %v1596 = vunpack.c.h.b16 %v253
  %v1597 = vunpack.c.l.b16 %v254
  %v1598 = vunpack.c.h.b16 %v254
  %v1599 = vunpack.c.l.b16 %v255
  %v1600 = vunpack.c.h.b16 %v255
  %v1601 = vunpack.c.l.b16 %v256
  %v1602 = vunpack.c.h.b16 %v256
  %v1603 = vunpack.c.l.b16 %v257
  %v1604 = vunpack.c.h.b16 %v257
  %v1605 = vunpack.c.l.b16 %v258
  %v1606 = vunpack.c.h.b16 %v258
  %v1607 = vunpack.c.l.b16 %v259
  %v1608 = vunpack.c.h.b16 %v259
  %v1609 = vunpack.c.l.b16 %v260
  %v1610 = vunpack.c.h.b16 %v260
  %v1611 = vunpack.c.l.b16 %v261
  %v1612 = vunpack.c.h.b16 %v261
  %v1613 = vunpack.c.l.b16 %v262
  %v1614 = vunpack.c.h.b16 %v262
  %v1615 = vunpack.c.l.b16 %v263
  %v1616 = vunpack.c.h.b16 %v263
  %v1617 = vunpack.c.l.b16 %v264
  %v1618 = vunpack.c.h.b16 %v264
  %v1619 = vunpack.c.l.b16 %v265
  %v1620 = vunpack.c.h.b16 %v265
  %v1621 = vunpack.c.l.b16 %v266
  %v1622 = vunpack.c.h.b16 %v266
  %v1623 = vunpack.c.l.b16 %v267
  %v1624 = vunpack.c.h.b16 %v267
  %v1625 = vunpack.c.l.b16 %v268
  %v1626 = vunpack.c.h.b16 %v268
  %v1627 = vunpack.c.l.b16 %v269
  %v1628 = vunpack.c.h.b16 %v269
  %v1629 = vunpack.c.l.b16 %v270
  %v1630 = vunpack.c.h.b16 %v270
  %v1631 = vunpack.c.l.b16 %v271
  %v1632 = vunpack.c.h.b16 %v271
  %v1633 = vunpack.c.l.b16 %v272
  %v1634 = vunpack.c.h.b16 %v272
  %v1635 = vunpack.c.l.b16 %v273
  %v1636 = vunpack.c.h.b16 %v273
  %v1637 = vunpack.c.l.b16 %v274
  %v1638 = vunpack.c.h.b16 %v274
  %v1639 = vunpack.c.l.b16 %v275
  %v1640 = vunpack.c.h.b16 %v275
  %v1641 = vunpack.c.l.b16 %v276
  %v1642 = vunpack.c.h.b16 %v276
  %v1643 = vunpack.c.l.b16 %v277
  %v1644 = vunpack.c.h.b16 %v277
  %v1645 = vunpack.c.l.b16 %v278
  %v1646 = vunpack.c.h.b16 %v278
  %v1647 = vunpack.c.l.b16 %v279
  %v1648 = vunpack.c.h.b16 %v279
  %v1649 = vunpack.c.l.b16 %v280
  %v1650 = vunpack.c.h.b16 %v280
  %v1651 = vunpack.c.l.b16 %v281
  %v1652 = vunpack.c.h.b16 %v281
  %v1653 = vunpack.c.l.b16 %v282
  %v1654 = vunpack.c.h.b16 %v282
  %v1655 = vunpack.c.l.b16 %v283
  %v1656 = vunpack.c.h.b16 %v283
  %v1657 = vunpack.c.l.b16 %v284
  %v1658 = vunpack.c.h.b16 %v284
  %v1659 = vunpack.c.l.b16 %v285
  %v1660 = vunpack.c.h.b16 %v285
  %v1661 = vunpack.c.l.b16 %v286
  %v1662 = vunpack.c.h.b16 %v286
  %v1663 = vunpack.c.l.b16 %v287
  %v1664 = vunpack.c.h.b16 %v287
  %v1665 = vunpack.c.l.b16 %v288
  %v1666 = vunpack.c.h.b16 %v288
  %v1667 = vunpack.c.l.b16 %v289
  %v1668 = vunpack.c.h.b16 %v289
  %v1669 = vunpack.c.l.b16 %v290
  %v1670 = vunpack.c.h.b16 %v290
  %v1671 = vunpack.c.l.b16 %v291
  %v1672 = vunpack.c.h.b16 %v291
  %v1673 = vunpack.c.l.b16 %v292
  %v1674 = vunpack.c.h.b16 %v292
  %v1675 = vunpack.c.l.b16 %v293
  %v1676 = vunpack.c.h.b16 %v293
  %v1677 = vunpack.c.l.b16 %v294
  %v1678 = vunpack.c.h.b16 %v294
  %v1679 = vunpack.c.l.b16 %v295
  %v1680 = vunpack.c.h.b16 %v295
  %v1681 = vunpack.c.l.b16 %v296
  %v1682 = vunpack.c.h.b16 %v296
  %v1683 = vunpack.c.l.b16 %v297
  %v1684 = vunpack.c.h.b16 %v297
  %v1685 = vunpack.c.l.b16 %v298
  %v1686 = vunpack.c.h.b16 %v298
  %v1687 = vunpack.c.l.b16 %v299
  %v1688 = vunpack.c.h.b16 %v299
  %v1689 = vunpack.c.l.b16 %v300
  %v1690 = vunpack.c.h.b16 %v300
  %v1691 = vunpack.c.l.b16 %v301
  %v1692 = vunpack.c.h.b16 %v301
  %v1693 = vunpack.c.l.b16 %v302
  %v1694 = vunpack.c.h.b16 %v302
  %v1695 = vunpack.c.l.b16 %v303
  %v1696 = vunpack.c.h.b16 %v303
  %v1697 = vunpack.c.l.b16 %v304
  %v1698 = vunpack.c.h.b16 %v304
  %v1699 = vunpack.c.l.b16 %v305
  %v1700 = vunpack.c.h.b16 %v305
  %v1701 = vunpack.c.l.b16 %v306
  %v1702 = vunpack.c.h.b16 %v306
  %v1703 = vunpack.c.l.b16 %v307
  %v1704 = vunpack.c.h.b16 %v307
  %v1705 = vunpack.c.l.b16 %v308
  %v1706 = vunpack.c.h.b16 %v308
  %v1707 = vunpack.c.l.b16 %v309
  %v1708 = vunpack.c.h.b16 %v309
  %v1709 = vunpack.c.l.b16 %v310
  %v1710 = vunpack.c.h.b16 %v310
  %v1711 = vunpack.c.l.b16 %v311
  %v1712 = vunpack.c.h.b16 %v311
  %v1713 = vunpack.c.l.b16 %v312
  %v1714 = vunpack.c.h.b16 %v312
  %v1715 = vunpack.c.l.b16 %v313
  %v1716 = vunpack.c.h.b16 %v313
  %v1717 = vunpack.c.l.b16 %v314
  %v1718 = vunpack.c.h.b16 %v314
  %v1719 = vunpack.c.l.b16 %v315
  %v1720 = vunpack.c.h.b16 %v315
  %v1721 = vunpack.c.l.b16 %v316
  %v1722 = vunpack.c.h.b16 %v316
  %v1723 = vunpack.c.l.b16 %v317
  %v1724 = vunpack.c.h.b16 %v317
  %v1725 = vunpack.c.l.b16 %v318
  %v1726 = vunpack.c.h.b16 %v318
  %v1727 = vunpack.c.l.b16 %v319
  %v1728 = vunpack.c.h.b16 %v319
  %v1729 = vunpack.c.l.b16 %v320
  %v1730 = vunpack.c.h.b16 %v320
  %v1731 = vunpack.c.l.b16 %v321
  %v1732 = vunpack.c.h.b16 %v321
  %v1733 = vunpack.c.l.b16 %v322
  %v1734 = vunpack.c.h.b16 %v322
  %v1735 = vunpack.c.l.b16 %v323
  %v1736 = vunpack.c.h.b16 %v323
  %v1737 = vunpack.c.l.b16 %v324
  %v1738 = vunpack.c.h.b16 %v324
  %v1739 = vunpack.c.l.b16 %v325
  %v1740 = vunpack.c.h.b16 %v325
  %v1741 = vunpack.c.l.b16 %v326
  %v1742 = vunpack.c.h.b16 %v326
  %v1743 = vunpack.c.l.b16 %v327
  %v1744 = vunpack.c.h.b16 %v327
  %v1745 = vunpack.c.l.b16 %v328
  %v1746 = vunpack.c.h.b16 %v328
  %v1747 = vunpack.c.l.b16 %v329
  %v1748 = vunpack.c.h.b16 %v329
  %v1749 = vunpack.c.l.b16 %v330
  %v1750 = vunpack.c.h.b16 %v330
  %v1751 = vunpack.c.l.b16 %v331
  %v1752 = vunpack.c.h.b16 %v331
  %v1753 = vunpack.c.l.b16 %v332
  %v1754 = vunpack.c.h.b16 %v332
  %v1755 = vunpack.c.l.b16 %v333
  %v1756 = vunpack.c.h.b16 %v333
  %v1757 = vunpack.c.l.b16 %v334
  %v1758 = vunpack.c.h.b16 %v334
  %v1759 = vunpack.c.l.b16 %v335
  %v1760 = vunpack.c.h.b16 %v335
  %v1761 = vunpack.c.l.b16 %v336
  %v1762 = vunpack.c.h.b16 %v336
  %v1763 = vunpack.c.l.b16 %v337
  %v1764 = vunpack.c.h.b16 %v337
  %v1765 = vunpack.c.l.b16 %v338
  %v1766 = vunpack.c.h.b16 %v338
  %v1767 = vunpack.c.l.b16 %v339
  %v1768 = vunpack.c.h.b16 %v339
  %v1769 = vunpack.c.l.b16 %v340
  %v1770 = vunpack.c.h.b16 %v340
  %v1771 = vunpack.c.l.b16 %v341
  %v1772 = vunpack.c.h.b16 %v341
  %v1773 = vunpack.c.l.b16 %v342
  %v1774 = vunpack.c.h.b16 %v342
  %v1775 = vunpack.c.l.b16 %v343
  %v1776 = vunpack.c.h.b16 %v343
  %v1777 = vunpack.c.l.b16 %v344
  %v1778 = vunpack.c.h.b16 %v344
  %v1779 = vunpack.c.l.b16 %v345
  %v1780 = vunpack.c.h.b16 %v345
  %v1781 = vunpack.c.l.b16 %v346
  %v1782 = vunpack.c.h.b16 %v346
  %v1783 = vunpack.c.l.b16 %v347
  %v1784 = vunpack.c.h.b16 %v347
  %v1785 = vunpack.c.l.b16 %v348
  %v1786 = vunpack.c.h.b16 %v348
  %v1787 = vunpack.c.l.b16 %v349
  %v1788 = vunpack.c.h.b16 %v349
  %v1789 = vunpack.c.l.b16 %v350
  %v1790 = vunpack.c.h.b16 %v350
  %v1791 = vunpack.c.l.b16 %v351
  %v1792 = vunpack.c.h.b16 %v351
  %v1793 = vunpack.c.l.b16 %v352
  %v1794 = vunpack.c.h.b16 %v352
  %v1795 = vunpack.c.l.b16 %v353
  %v1796 = vunpack.c.h.b16 %v353
  %v1797 = vunpack.c.l.b16 %v354
  %v1798 = vunpack.c.h.b16 %v354
  %v1799 = vunpack.c.l.b16 %v355
  %v1800 = vunpack.c.h.b16 %v355
  %v1801 = vunpack.c.l.b16 %v356
  %v1802 = vunpack.c.h.b16 %v356
  %v1803 = vunpack.c.l.b16 %v357
  %v1804 = vunpack.c.h.b16 %v357
  %v1805 = vunpack.c.l.b16 %v358
  %v1806 = vunpack.c.h.b16 %v358
  %v1807 = vunpack.c.l.b16 %v359
  %v1808 = vunpack.c.h.b16 %v359
  %v1809 = vunpack.c.l.b16 %v360
  %v1810 = vunpack.c.h.b16 %v360
  %v1811 = vunpack.c.l.b16 %v361
  %v1812 = vunpack.c.h.b16 %v361
  %v1813 = vunpack.c.l.b16 %v362
  %v1814 = vunpack.c.h.b16 %v362
  %v1815 = vunpack.c.l.b16 %v363
  %v1816 = vunpack.c.h.b16 %v363
  %v1817 = vunpack.c.l.b16 %v364
  %v1818 = vunpack.c.h.b16 %v364
  %v1819 = vunpack.c.l.b16 %v365
  %v1820 = vunpack.c.h.b16 %v365
  %v1821 = vunpack.c.l.b16 %v366
  %v1822 = vunpack.c.h.b16 %v366
  %v1823 = vunpack.c.l.b16 %v367
  %v1824 = vunpack.c.h.b16 %v367
  %v1825 = vunpack.c.l.b16 %v368
  %v1826 = vunpack.c.h.b16 %v368
  %v1827 = vunpack.c.l.b16 %v369
  %v1828 = vunpack.c.h.b16 %v369
  %v1829 = vunpack.c.l.b16 %v370
  %v1830 = vunpack.c.h.b16 %v370
  %v1831 = vunpack.c.l.b16 %v371
  %v1832 = vunpack.c.h.b16 %v371
  %v1833 = vunpack.c.l.b16 %v372
  %v1834 = vunpack.c.h.b16 %v372
  %v1835 = vunpack.c.l.b16 %v373
  %v1836 = vunpack.c.h.b16 %v373
  %v1837 = vunpack.c.l.b16 %v374
  %v1838 = vunpack.c.h.b16 %v374
  %v1839 = vunpack.c.l.b16 %v375
  %v1840 = vunpack.c.h.b16 %v375
  %v1841 = vunpack.c.l.b16 %v376
  %v1842 = vunpack.c.h.b16 %v376
  %v1843 = vunpack.c.l.b16 %v377
  %v1844 = vunpack.c.h.b16 %v377
  %v1845 = vunpack.c.l.b16 %v378
  %v1846 = vunpack.c.h.b16 %v378
  %v1847 = vunpack.c.l.b16 %v379
  %v1848 = vunpack.c.h.b16 %v379
  %v1849 = vunpack.c.l.b16 %v380
  %v1850 = vunpack.c.h.b16 %v380
  %v1851 = vunpack.c.l.b16 %v381
  %v1852 = vunpack.c.h.b16 %v381
  %v1853 = vunpack.c.l.b16 %v382
  %v1854 = vunpack.c.h.b16 %v382
  %v1855 = vunpack.c.l.b16 %v383
  %v1856 = vunpack.c.h.b16 %v383
  %v1857 = vunpack.c.l.b16 %v384
  %v1858 = vunpack.c.h.b16 %v384
  %v1859 = vunpack.c.l.b16 %v385
  %v1860 = vunpack.c.h.b16 %v385
  %v1861 = vunpack.c.l.b16 %v386
  %v1862 = vunpack.c.h.b16 %v386
  %v1863 = vunpack.c.l.b16 %v387
  %v1864 = vunpack.c.h.b16 %v387
  %v1865 = vunpack.c.l.b16 %v388
  %v1866 = vunpack.c.h.b16 %v388
  %v1867 = vunpack.c.l.b16 %v389
  %v1868 = vunpack.c.h.b16 %v389
  %v1869 = vunpack.c.l.b16 %v390
  %v1870 = vunpack.c.h.b16 %v390
  %v1871 = vunpack.c.l.b16 %v391
  %v1872 = vunpack.c.h.b16 %v391
  %v1873 = vunpack.c.l.b16 %v392
  %v1874 = vunpack.c.h.b16 %v392
  %v1875 = vunpack.c.l.b16 %v393
  %v1876 = vunpack.c.h.b16 %v393
  %v1877 = vunpack.c.l.b16 %v394
  %v1878 = vunpack.c.h.b16 %v394
  %v1879 = vunpack.c.l.b16 %v395
  %v1880 = vunpack.c.h.b16 %v395
  %v1881 = vunpack.c.l.b16 %v396
  %v1882 = vunpack.c.h.b16 %v396
  %v1883 = vunpack.c.l.b16 %v397
  %v1884 = vunpack.c.h.b16 %v397
  %v1885 = vunpack.c.l.b16 %v398
  %v1886 = vunpack.c.h.b16 %v398
  %v1887 = vunpack.c.l.b16 %v399
  %v1888 = vunpack.c.h.b16 %v399
  %v1889 = vunpack.c.l.b16 %v400
  %v1890 = vunpack.c.h.b16 %v400
  %v1891 = vunpack.c.l.b16 %v401
  %v1892 = vunpack.c.h.b16 %v401
  %v1893 = vunpack.c.l.b16 %v402
  %v1894 = vunpack.c.h.b16 %v402
  %v1895 = vunpack.c.l.b16 %v403
  %v1896 = vunpack.c.h.b16 %v403
  %v1897 = vunpack.c.l.b16 %v404
  %v1898 = vunpack.c.h.b16 %v404
  %v1899 = vunpack.c.l.b16 %v405
  %v1900 = vunpack.c.h.b16 %v405
  %v1901 = vunpack.c.l.b16 %v406
  %v1902 = vunpack.c.h.b16 %v406
  %v1903 = vunpack.c.l.b16 %v407
  %v1904 = vunpack.c.h.b16 %v407
  %v1905 = vunpack.c.l.b16 %v408
  %v1906 = vunpack.c.h.b16 %v408
  %v1907 = vunpack.c.l.b16 %v409
  %v1908 = vunpack.c.h.b16 %v409
  %v1909 = vunpack.c.l.b16 %v410
  %v1910 = vunpack.c.h.b16 %v410
  %v1911 = vunpack.c.l.b16 %v411
  %v1912 = vunpack.c.h.b16 %v411
  %v1913 = vunpack.c.l.b16 %v412
  %v1914 = vunpack.c.h.b16 %v412
  %v1915 = vunpack.c.l.b16 %v413
  %v1916 = vunpack.c.h.b16 %v413
  %v1917 = vunpack.c.l.b16 %v414
  %v1918 = vunpack.c.h.b16 %v414
  %v1919 = vunpack.c.l.b16 %v415
  %v1920 = vunpack.c.h.b16 %v415
  %v1921 = vunpack.c.l.b16 %v416
  %v1922 = vunpack.c.h.b16 %v416
  %v1923 = vunpack.c.l.b16 %v417
  %v1924 = vunpack.c.h.b16 %v417
  %v1925 = vunpack.c.l.b16 %v418
  %v1926 = vunpack.c.h.b16 %v418
  %v1927 = vunpack.c.l.b16 %v419
  %v1928 = vunpack.c.h.b16 %v419
  %v1929 = vunpack.c.l.b16 %v420
  %v1930 = vunpack.c.h.b16 %v420
  %v1931 = vunpack.c.l.b16 %v421
  %v1932 = vunpack.c.h.b16 %v421
  %v1933 = vunpack.c.l.b16 %v422
  %v1934 = vunpack.c.h.b16 %v422
  %v1935 = vunpack.c.l.b16 %v423
  %v1936 = vunpack.c.h.b16 %v423
  %v1937 = vunpack.c.l.b16 %v424
  %v1938 = vunpack.c.h.b16 %v424
  %v1939 = vunpack.c.l.b16 %v425
  %v1940 = vunpack.c.h.b16 %v425
  %v1941 = vunpack.c.l.b16 %v426
  %v1942 = vunpack.c.h.b16 %v426
  %v1943 = vunpack.c.l.b16 %v427
  %v1944 = vunpack.c.h.b16 %v427
  %v1945 = vunpack.c.l.b16 %v428
  %v1946 = vunpack.c.h.b16 %v428
  %v1947 = vunpack.c.l.b16 %v429
  %v1948 = vunpack.c.h.b16 %v429
  %v1949 = vunpack.c.l.b16 %v430
  %v1950 = vunpack.c.h.b16 %v430
  %v1951 = vunpack.c.l.b16 %v431
  %v1952 = vunpack.c.h.b16 %v431
  %v1953 = vunpack.c.l.b16 %v432
  %v1954 = vunpack.c.h.b16 %v432
  %v1955 = vunpack.c.l.b16 %v433
  %v1956 = vunpack.c.h.b16 %v433
  %v1957 = vunpack.c.l.b16 %v434
  %v1958 = vunpack.c.h.b16 %v434
  %v1959 = vunpack.c.l.b16 %v435
  %v1960 = vunpack.c.h.b16 %v435
  %v1961 = vunpack.c.l.b16 %v436
  %v1962 = vunpack.c.h.b16 %v436
  %v1963 = vunpack.c.l.b16 %v437
  %v1964 = vunpack.c.h.b16 %v437
  %v1965 = vunpack.c.l.b16 %v438
  %v1966 = vunpack.c.h.b16 %v438
  %v1967 = vunpack.c.l.b16 %v439
  %v1968 = vunpack.c.h.b16 %v439
  %v1969 = vunpack.c.l.b16 %v440
  %v1970 = vunpack.c.h.b16 %v440
  %v1971 = vunpack.c.l.b16 %v441
  %v1972 = vunpack.c.h.b16 %v441
  %v1973 = vunpack.c.l.b16 %v442
  %v1974 = vunpack.c.h.b16 %v442
  %v1975 = vunpack.c.l.b16 %v443
  %v1976 = vunpack.c.h.b16 %v443
  %v1977 = vunpack.c.l.b16 %v444
  %v1978 = vunpack.c.h.b16 %v444
  %v1979 = vunpack.c.l.b16 %v445
  %v1980 = vunpack.c.h.b16 %v445
  %v1981 = vunpack.c.l.b16 %v446
  %v1982 = vunpack.c.h.b16 %v446
  %v1983 = vunpack.c.l.b16 %v447
  %v1984 = vunpack.c.h.b16 %v447
  %v1985 = vunpack.c.l.b16 %v448
  %v1986 = vunpack.c.h.b16 %v448
  %v1987 = vunpack.c.l.b16 %v449
  %v1988 = vunpack.c.h.b16 %v449
  %v1989 = vunpack.c.l.b16 %v450
  %v1990 = vunpack.c.h.b16 %v450
  %v1991 = vunpack.c.l.b16 %v451
  %v1992 = vunpack.c.h.b16 %v451
  %v1993 = vunpack.c.l.b16 %v452
  %v1994 = vunpack.c.h.b16 %v452
  %v1995 = vunpack.c.l.b16 %v453
  %v1996 = vunpack.c.h.b16 %v453
  %v1997 = vunpack.c.l.b16 %v454
  %v1998 = vunpack.c.h.b16 %v454
  %v1999 = vunpack.c.l.b16 %v455
  %v2000 = vunpack.c.h.b16 %v455
  %v2001 = vunpack.c.l.b16 %v456
  %v2002 = vunpack.c.h.b16 %v456
  %v2003 = vunpack.c.l.b16 %v457
  %v2004 = vunpack.c.h.b16 %v457
  %v2005 = vunpack.c.l.b16 %v458
  %v2006 = vunpack.c.h.b16 %v458
  %v2007 = vunpack.c.l.b16 %v459
  %v2008 = vunpack.c.h.b16 %v459
  %v2009 = vunpack.c.l.b16 %v460
  %v2010 = vunpack.c.h.b16 %v460
  %v2011 = vunpack.c.l.b16 %v461
  %v2012 = vunpack.c.h.b16 %v461
  %v2013 = vunpack.c.l.b16 %v462
  %v2014 = vunpack.c.h.b16 %v462
  %v2015 = vunpack.c.l.b16 %v463
  %v2016 = vunpack.c.h.b16 %v463
  %v2017 = vunpack.c.l.b16 %v464
  %v2018 = vunpack.c.h.b16 %v464
  %v2019 = vunpack.c.l.b16 %v465
  %v2020 = vunpack.c.h.b16 %v465
  %v2021 = vunpack.c.l.b16 %v466
  %v2022 = vunpack.c.h.b16 %v466
  %v2023 = vunpack.c.l.b16 %v467
  %v2024 = vunpack.c.h.b16 %v467
  %v2025 = vunpack.c.l.b16 %v468
  %v2026 = vunpack.c.h.b16 %v468
  %v2027 = vunpack.c.l.b16 %v469
  %v2028 = vunpack.c.h.b16 %v469
  %v2029 = vunpack.c.l.b16 %v470
  %v2030 = vunpack.c.h.b16 %v470
  %v2031 = vunpack.c.l.b16 %v471
  %v2032 = vunpack.c.h.b16 %v471
  %v2033 = vunpack.c.l.b16 %v472
  %v2034 = vunpack.c.h.b16 %v472
  %v2035 = vunpack.c.l.b16 %v473
  %v2036 = vunpack.c.h.b16 %v473
  %v2037 = vunpack.c.l.b16 %v474
  %v2038 = vunpack.c.h.b16 %v474
  %v2039 = vunpack.c.l.b16 %v475
  %v2040 = vunpack.c.h.b16 %v475
  %v2041 = vunpack.c.l.b16 %v476
  %v2042 = vunpack.c.h.b16 %v476
  %v2043 = vunpack.c.l.b16 %v477
  %v2044 = vunpack.c.h.b16 %v477
  %v2045 = vunpack.c.l.b16 %v478
  %v2046 = vunpack.c.h.b16 %v478
  %v2047 = vunpack.c.l.b16 %v479
  %v2048 = vunpack.c.h.b16 %v479
  %v2049 = vunpack.c.l.b16 %v480
  %v2050 = vunpack.c.h.b16 %v480
  %v2051 = vunpack.c.l.b16 %v481
  %v2052 = vunpack.c.h.b16 %v481
  %v2053 = vunpack.c.l.b16 %v482
  %v2054 = vunpack.c.h.b16 %v482
  %v2055 = vunpack.c.l.b16 %v483
  %v2056 = vunpack.c.h.b16 %v483
  %v2057 = vunpack.c.l.b16 %v484
  %v2058 = vunpack.c.h.b16 %v484
  %v2059 = vunpack.c.l.b16 %v485
  %v2060 = vunpack.c.h.b16 %v485
  %v2061 = vunpack.c.l.b16 %v486
  %v2062 = vunpack.c.h.b16 %v486
  %v2063 = vunpack.c.l.b16 %v487
  %v2064 = vunpack.c.h.b16 %v487
  %v2065 = vunpack.c.l.b16 %v488
  %v2066 = vunpack.c.h.b16 %v488
  %v2067 = vunpack.c.l.b16 %v489
  %v2068 = vunpack.c.h.b16 %v489
  %v2069 = vunpack.c.l.b16 %v490
  %v2070 = vunpack.c.h.b16 %v490
  %v2071 = vunpack.c.l.b16 %v491
  %v2072 = vunpack.c.h.b16 %v491
  %v2073 = vunpack.c.l.b16 %v492
  %v2074 = vunpack.c.h.b16 %v492
  %v2075 = vunpack.c.l.b16 %v493
  %v2076 = vunpack.c.h.b16 %v493
  %v2077 = vunpack.c.l.b16 %v494
  %v2078 = vunpack.c.h.b16 %v494
  %v2079 = vunpack.c.l.b16 %v495
  %v2080 = vunpack.c.h.b16 %v495
  %v2081 = vunpack.c.l.b16 %v496
  %v2082 = vunpack.c.h.b16 %v496
  %v2083 = vunpack.c.l.b16 %v497
  %v2084 = vunpack.c.h.b16 %v497
  %v2085 = vunpack.c.l.b16 %v498
  %v2086 = vunpack.c.h.b16 %v498
  %v2087 = vunpack.c.l.b16 %v499
  %v2088 = vunpack.c.h.b16 %v499
  %v2089 = vunpack.c.l.b16 %v500
  %v2090 = vunpack.c.h.b16 %v500
  %v2091 = vunpack.c.l.b16 %v501
  %v2092 = vunpack.c.h.b16 %v501
  %v2093 = vunpack.c.l.b16 %v502
  %v2094 = vunpack.c.h.b16 %v502
  %v2095 = vunpack.c.l.b16 %v503
  %v2096 = vunpack.c.h.b16 %v503
  %v2097 = vunpack.c.l.b16 %v504
  %v2098 = vunpack.c.h.b16 %v504
  %v2099 = vunpack.c.l.b16 %v505
  %v2100 = vunpack.c.h.b16 %v505
  %v2101 = vunpack.c.l.b16 %v506
  %v2102 = vunpack.c.h.b16 %v506
  %v2103 = vunpack.c.l.b16 %v507
  %v2104 = vunpack.c.h.b16 %v507
  %v2105 = vunpack.c.l.b16 %v508
  %v2106 = vunpack.c.h.b16 %v508
  %v2107 = vunpack.c.l.b16 %v509
  %v2108 = vunpack.c.h.b16 %v509
  %v2109 = vunpack.c.l.b16 %v510
  %v2110 = vunpack.c.h.b16 %v510
  %v2111 = vunpack.c.l.b16 %v511
  %v2112 = vunpack.c.h.b16 %v511
  %v2113 = vunpack.c.l.b16 %v512
  %v2114 = vunpack.c.h.b16 %v512
  %v2115 = vunpack.c.l.b16 %v513
  %v2116 = vunpack.c.h.b16 %v513
  %v2117 = vunpack.c.l.b16 %v514
  %v2118 = vunpack.c.h.b16 %v514
  %v2119 = vunpack.c.l.b16 %v515
  %v2120 = vunpack.c.h.b16 %v515
  %v2121 = vunpack.c.l.b16 %v516
  %v2122 = vunpack.c.h.b16 %v516
  %v2123 = vunpack.c.l.b16 %v517
  %v2124 = vunpack.c.h.b16 %v517
  %v2125 = vunpack.c.l.b16 %v518
  %v2126 = vunpack.c.h.b16 %v518
  %v2127 = vunpack.c.l.b16 %v519
  %v2128 = vunpack.c.h.b16 %v519
  %v2129 = vunpack.c.l.b16 %v520
  %v2130 = vunpack.c.h.b16 %v520
  %v2131 = vunpack.c.l.b16 %v521
  %v2132 = vunpack.c.h.b16 %v521
  %v2133 = vunpack.c.l.b16 %v522
  %v2134 = vunpack.c.h.b16 %v522
  %v2135 = vunpack.c.l.b16 %v523
  %v2136 = vunpack.c.h.b16 %v523
  %v2137 = vunpack.c.l.b16 %v524
  %v2138 = vunpack.c.h.b16 %v524
  %v2139 = vunpack.c.l.b16 %v525
  %v2140 = vunpack.c.h.b16 %v525
  %v2141 = vunpack.c.l.b16 %v526
  %v2142 = vunpack.c.h.b16 %v526
  %v2143 = vunpack.c.l.b16 %v527
  %v2144 = vunpack.c.h.b16 %v527
  %v2145 = vunpack.c.l.b16 %v528
  %v2146 = vunpack.c.h.b16 %v528
  %v2147 = vunpack.c.l.b16 %v529
  %v2148 = vunpack.c.h.b16 %v529
  %v2149 = vunpack.c.l.b16 %v530
  %v2150 = vunpack.c.h.b16 %v530
  %v2151 = vunpack.c.l.b16 %v531
  %v2152 = vunpack.c.h.b16 %v531
  %v2153 = vunpack.c.l.b16 %v532
  %v2154 = vunpack.c.h.b16 %v532
  %v2155 = vunpack.c.l.b16 %v533
  %v2156 = vunpack.c.h.b16 %v533
  %v2157 = vunpack.c.l.b16 %v534
  %v2158 = vunpack.c.h.b16 %v534
  %v2159 = vunpack.c.l.b16 %v535
  %v2160 = vunpack.c.h.b16 %v535
  %v2161 = vunpack.c.l.b16 %v536
  %v2162 = vunpack.c.h.b16 %v536
  %v2163 = vunpack.c.l.b16 %v537
  %v2164 = vunpack.c.h.b16 %v537
  %v2165 = vunpack.c.l.b16 %v538
  %v2166 = vunpack.c.h.b16 %v538
  %v2167 = vunpack.c.l.b16 %v539
  %v2168 = vunpack.c.h.b16 %v539
  %v2169 = vunpack.c.l.b16 %v540
  %v2170 = vunpack.c.h.b16 %v540
  %v2171 = vunpack.c.l.b16 %v541
  %v2172 = vunpack.c.h.b16 %v541
  %v2173 = vunpack.c.l.b16 %v542
  %v2174 = vunpack.c.h.b16 %v542
  %v2175 = vunpack.c.l.b16 %v543
  %v2176 = vunpack.c.h.b16 %v543
  %v2177 = vunpack.c.l.b16 %v544
  %v2178 = vunpack.c.h.b16 %v544
  %v2179 = vunpack.c.l.b16 %v545
  %v2180 = vunpack.c.h.b16 %v545
  %v2181 = vunpack.c.l.b16 %v546
  %v2182 = vunpack.c.h.b16 %v546
  %v2183 = vunpack.c.l.b16 %v547
  %v2184 = vunpack.c.h.b16 %v547
  %v2185 = vunpack.c.l.b16 %v548
  %v2186 = vunpack.c.h.b16 %v548
  %v2187 = vpack.c.b16 %v1167, %v1163
  %v2188 = vpack.c.b16 %v1168, %v1164
  %v2189 = vpack.c.b16 %v1169, %v1165
  %v2190 = vpack.c.b16 %v1170, %v1166
  %v2191 = vpack.c.b16 %v1175, %v1171
  %v2192 = vpack.c.b16 %v1176, %v1172
  %v2193 = vpack.c.b16 %v1177, %v1173
  %v2194 = vpack.c.b16 %v1178, %v1174
  %v2195 = vpack.c.b16 %v1183, %v1179
  %v2196 = vpack.c.b16 %v1184, %v1180
  %v2197 = vpack.c.b16 %v1185, %v1181
  %v2198 = vpack.c.b16 %v1186, %v1182
  %v2199 = vpack.c.b16 %v1191, %v1187
  %v2200 = vpack.c.b16 %v1192, %v1188
  %v2201 = vpack.c.b16 %v1193, %v1189
  %v2202 = vpack.c.b16 %v1194, %v1190
  %v2203 = vpack.c.b16 %v1199, %v1195
  %v2204 = vpack.c.b16 %v1200, %v1196
  %v2205 = vpack.c.b16 %v1201, %v1197
  %v2206 = vpack.c.b16 %v1202, %v1198
  %v2207 = vpack.c.b16 %v1207, %v1203
  %v2208 = vpack.c.b16 %v1208, %v1204
  %v2209 = vpack.c.b16 %v1209, %v1205
  %v2210 = vpack.c.b16 %v1210, %v1206
  %v2211 = vpack.c.b16 %v1215, %v1211
  %v2212 = vpack.c.b16 %v1216, %v1212
  %v2213 = vpack.c.b16 %v1217, %v1213
  %v2214 = vpack.c.b16 %v1218, %v1214
  %v2215 = vpack.c.b16 %v1223, %v1219
  %v2216 = vpack.c.b16 %v1224, %v1220
  %v2217 = vpack.c.b16 %v1225, %v1221
  %v2218 = vpack.c.b16 %v1226, %v1222
  %v2219 = vpack.c.b16 %v1231, %v1227
  %v2220 = vpack.c.b16 %v1232, %v1228
  %v2221 = vpack.c.b16 %v1233, %v1229
  %v2222 = vpack.c.b16 %v1234, %v1230
  %v2223 = vpack.c.b16 %v1239, %v1235
  %v2224 = vpack.c.b16 %v1240, %v1236
  %v2225 = vpack.c.b16 %v1241, %v1237
  %v2226 = vpack.c.b16 %v1242, %v1238
  %v2227 = vpack.c.b16 %v1247, %v1243
  %v2228 = vpack.c.b16 %v1248, %v1244
  %v2229 = vpack.c.b16 %v1249, %v1245
  %v2230 = vpack.c.b16 %v1250, %v1246
  %v2231 = vpack.c.b16 %v1255, %v1251
  %v2232 = vpack.c.b16 %v1256, %v1252
  %v2233 = vpack.c.b16 %v1257, %v1253
  %v2234 = vpack.c.b16 %v1258, %v1254
  %v2235 = vpack.c.b16 %v1263, %v1259
  %v2236 = vpack.c.b16 %v1264, %v1260
  %v2237 = vpack.c.b16 %v1265, %v1261
  %v2238 = vpack.c.b16 %v1266, %v1262
  %v2239 = vpack.c.b16 %v1271, %v1267
  %v2240 = vpack.c.b16 %v1272, %v1268
  %v2241 = vpack.c.b16 %v1273, %v1269
  %v2242 = vpack.c.b16 %v1274, %v1270
  %v2243 = vpack.c.b16 %v1279, %v1275
  %v2244 = vpack.c.b16 %v1280, %v1276
  %v2245 = vpack.c.b16 %v1281, %v1277
  %v2246 = vpack.c.b16 %v1282, %v1278
  %v2247 = vpack.c.b16 %v1287, %v1283
  %v2248 = vpack.c.b16 %v1288, %v1284
  %v2249 = vpack.c.b16 %v1289, %v1285
  %v2250 = vpack.c.b16 %v1290, %v1286
  %v2251 = vpack.c.b16 %v1295, %v1291
  %v2252 = vpack.c.b16 %v1296, %v1292
  %v2253 = vpack.c.b16 %v1297, %v1293
  %v2254 = vpack.c.b16 %v1298, %v1294
  %v2255 = vpack.c.b16 %v1303, %v1299
  %v2256 = vpack.c.b16 %v1304, %v1300
  %v2257 = vpack.c.b16 %v1305, %v1301
  %v2258 = vpack.c.b16 %v1306, %v1302
  %v2259 = vpack.c.b16 %v1311, %v1307
  %v2260 = vpack.c.b16 %v1312, %v1308
  %v2261 = vpack.c.b16 %v1313, %v1309
  %v2262 = vpack.c.b16 %v1314, %v1310
  %v2263 = vpack.c.b16 %v1319, %v1315
  %v2264 = vpack.c.b16 %v1320, %v1316
  %v2265 = vpack.c.b16 %v1321, %v1317
  %v2266 = vpack.c.b16 %v1322, %v1318
  %v2267 = vpack.c.b16 %v1327, %v1323
  %v2268 = vpack.c.b16 %v1328, %v1324
  %v2269 = vpack.c.b16 %v1329, %v1325
  %v2270 = vpack.c.b16 %v1330, %v1326
  %v2271 = vpack.c.b16 %v1335, %v1331
  %v2272 = vpack.c.b16 %v1336, %v1332
  %v2273 = vpack.c.b16 %v1337, %v1333
  %v2274 = vpack.c.b16 %v1338, %v1334
  %v2275 = vpack.c.b16 %v1343, %v1339
  %v2276 = vpack.c.b16 %v1344, %v1340
  %v2277 = vpack.c.b16 %v1345, %v1341
  %v2278 = vpack.c.b16 %v1346, %v1342
  %v2279 = vpack.c.b16 %v1351, %v1347
  %v2280 = vpack.c.b16 %v1352, %v1348
  %v2281 = vpack.c.b16 %v1353, %v1349
  %v2282 = vpack.c.b16 %v1354, %v1350
  %v2283 = vpack.c.b16 %v1359, %v1355
  %v2284 = vpack.c.b16 %v1360, %v1356
  %v2285 = vpack.c.b16 %v1361, %v1357
  %v2286 = vpack.c.b16 %v1362, %v1358
  %v2287 = vpack.c.b16 %v1367, %v1363
  %v2288 = vpack.c.b16 %v1368, %v1364
  %v2289 = vpack.c.b16 %v1369, %v1365
  %v2290 = vpack.c.b16 %v1370, %v1366
  %v2291 = vpack.c.b16 %v1375, %v1371
  %v2292 = vpack.c.b16 %v1376, %v1372
  %v2293 = vpack.c.b16 %v1377, %v1373
  %v2294 = vpack.c.b16 %v1378, %v1374
  %v2295 = vpack.c.b16 %v1383, %v1379
  %v2296 = vpack.c.b16 %v1384, %v1380
  %v2297 = vpack.c.b16 %v1385, %v1381
  %v2298 = vpack.c.b16 %v1386, %v1382
  %v2299 = vpack.c.b16 %v1391, %v1387
  %v2300 = vpack.c.b16 %v1392, %v1388
  %v2301 = vpack.c.b16 %v1393, %v1389
  %v2302 = vpack.c.b16 %v1394, %v1390
  %v2303 = vpack.c.b16 %v1399, %v1395
  %v2304 = vpack.c.b16 %v1400, %v1396
  %v2305 = vpack.c.b16 %v1401, %v1397
  %v2306 = vpack.c.b16 %v1402, %v1398
  %v2307 = vpack.c.b16 %v1407, %v1403
  %v2308 = vpack.c.b16 %v1408, %v1404
  %v2309 = vpack.c.b16 %v1409, %v1405
  %v2310 = vpack.c.b16 %v1410, %v1406
  %v2311 = vpack.c.b16 %v1415, %v1411
  %v2312 = vpack.c.b16 %v1416, %v1412
  %v2313 = vpack.c.b16 %v1417, %v1413
  %v2314 = vpack.c.b16 %v1418, %v1414
  %v2315 = vpack.c.b16 %v1423, %v1419
  %v2316 = vpack.c.b16 %v1424, %v1420
  %v2317 = vpack.c.b16 %v1425, %v1421
  %v2318 = vpack.c.b16 %v1426, %v1422
  %v2319 = vpack.c.b16 %v1431, %v1427
  %v2320 = vpack.c.b16 %v1432, %v1428
  %v2321 = vpack.c.b16 %v1433, %v1429
  %v2322 = vpack.c.b16 %v1434, %v1430
  %v2323 = vpack.c.b16 %v1439, %v1435
  %v2324 = vpack.c.b16 %v1440, %v1436
  %v2325 = vpack.c.b16 %v1441, %v1437
  %v2326 = vpack.c.b16 %v1442, %v1438
  %v2327 = vpack.c.b16 %v1447, %v1443
  %v2328 = vpack.c.b16 %v1448, %v1444
  %v2329 = vpack.c.b16 %v1449, %v1445
  %v2330 = vpack.c.b16 %v1450, %v1446
  %v2331 = vpack.c.b16 %v1455, %v1451
  %v2332 = vpack.c.b16 %v1456, %v1452
  %v2333 = vpack.c.b16 %v1457, %v1453
  %v2334 = vpack.c.b16 %v1458, %v1454
  %v2335 = vpack.c.b16 %v1463, %v1459
  %v2336 = vpack.c.b16 %v1464, %v1460
  %v2337 = vpack.c.b16 %v1465, %v1461
  %v2338 = vpack.c.b16 %v1466, %v1462
  %v2339 = vpack.c.b16 %v1471, %v1467
  %v2340 = vpack.c.b16 %v1472, %v1468
  %v2341 = vpack.c.b16 %v1473, %v1469
  %v2342 = vpack.c.b16 %v1474, %v1470
  %v2343 = vpack.c.b16 %v1479, %v1475
  %v2344 = vpack.c.b16 %v1480, %v1476
  %v2345 = vpack.c.b16 %v1481, %v1477
  %v2346 = vpack.c.b16 %v1482, %v1478
  %v2347 = vpack.c.b16 %v1487, %v1483
  %v2348 = vpack.c.b16 %v1488, %v1484
  %v2349 = vpack.c.b16 %v1489, %v1485
  %v2350 = vpack.c.b16 %v1490, %v1486
  %v2351 = vpack.c.b16 %v1495, %v1491
  %v2352 = vpack.c.b16 %v1496, %v1492
  %v2353 = vpack.c.b16 %v1497, %v1493
  %v2354 = vpack.c.b16 %v1498, %v1494
  %v2355 = vpack.c.b16 %v1503, %v1499
  %v2356 = vpack.c.b16 %v1504, %v1500
  %v2357 = vpack.c.b16 %v1505, %v1501
  %v2358 = vpack.c.b16 %v1506, %v1502
  %v2359 = vpack.c.b16 %v1511, %v1507
  %v2360 = vpack.c.b16 %v1512, %v1508
  %v2361 = vpack.c.b16 %v1513, %v1509
  %v2362 = vpack.c.b16 %v1514, %v1510
  %v2363 = vpack.c.b16 %v1519, %v1515
  %v2364 = vpack.c.b16 %v1520, %v1516
  %v2365 = vpack.c.b16 %v1521, %v1517
  %v2366 = vpack.c.b16 %v1522, %v1518
  %v2367 = vpack.c.b16 %v1527, %v1523
  %v2368 = vpack.c.b16 %v1528, %v1524
  %v2369 = vpack.c.b16 %v1529, %v1525
  %v2370 = vpack.c.b16 %v1530, %v1526
  %v2371 = vpack.c.b16 %v1535, %v1531
  %v2372 = vpack.c.b16 %v1536, %v1532
  %v2373 = vpack.c.b16 %v1537, %v1533
  %v2374 = vpack.c.b16 %v1538, %v1534
  %v2375 = vpack.c.b16 %v1543, %v1539
  %v2376 = vpack.c.b16 %v1544, %v1540
  %v2377 = vpack.c.b16 %v1545, %v1541
  %v2378 = vpack.c.b16 %v1546, %v1542
  %v2379 = vpack.c.b16 %v1551, %v1547
  %v2380 = vpack.c.b16 %v1552, %v1548
  %v2381 = vpack.c.b16 %v1553, %v1549
  %v2382 = vpack.c.b16 %v1554, %v1550
  %v2383 = vpack.c.b16 %v1559, %v1555
  %v2384 = vpack.c.b16 %v1560, %v1556
  %v2385 = vpack.c.b16 %v1561, %v1557
  %v2386 = vpack.c.b16 %v1562, %v1558
  %v2387 = vpack.c.b16 %v1567, %v1563
  %v2388 = vpack.c.b16 %v1568, %v1564
  %v2389 = vpack.c.b16 %v1569, %v1565
  %v2390 = vpack.c.b16 %v1570, %v1566
  %v2391 = vpack.c.b16 %v1575, %v1571
  %v2392 = vpack.c.b16 %v1576, %v1572
  %v2393 = vpack.c.b16 %v1577, %v1573
  %v2394 = vpack.c.b16 %v1578, %v1574
  %v2395 = vpack.c.b16 %v1583, %v1579
  %v2396 = vpack.c.b16 %v1584, %v1580
  %v2397 = vpack.c.b16 %v1585, %v1581
  %v2398 = vpack.c.b16 %v1586, %v1582
  %v2399 = vpack.c.b16 %v1591, %v1587
  %v2400 = vpack.c.b16 %v1592, %v1588
  %v2401 = vpack.c.b16 %v1593, %v1589
  %v2402 = vpack.c.b16 %v1594, %v1590
  %v2403 = vpack.c.b16 %v1599, %v1595
  %v2404 = vpack.c.b16 %v1600, %v1596
  %v2405 = vpack.c.b16 %v1601, %v1597
  %v2406 = vpack.c.b16 %v1602, %v1598
  %v2407 = vpack.c.b16 %v1607, %v1603
  %v2408 = vpack.c.b16 %v1608, %v1604
  %v2409 = vpack.c.b16 %v1609, %v1605
  %v2410 = vpack.c.b16 %v1610, %v1606
  %v2411 = vpack.c.b16 %v1615, %v1611
  %v2412 = vpack.c.b16 %v1616, %v1612
  %v2413 = vpack.c.b16 %v1617, %v1613
  %v2414 = vpack.c.b16 %v1618, %v1614
  %v2415 = vpack.c.b16 %v1623, %v1619
  %v2416 = vpack.c.b16 %v1624, %v1620
  %v2417 = vpack.c.b16 %v1625, %v1621
  %v2418 = vpack.c.b16 %v1626, %v1622
  %v2419 = vpack.c.b16 %v1631, %v1627
  %v2420 = vpack.c.b16 %v1632, %v1628
  %v2421 = vpack.c.b16 %v1633, %v1629
  %v2422 = vpack.c.b16 %v1634, %v1630
  %v2423 = vpack.c.b16 %v1639, %v1635
  %v2424 = vpack.c.b16 %v1640, %v1636
  %v2425 = vpack.c.b16 %v1641, %v1637
  %v2426 = vpack.c.b16 %v1642, %v1638
  %v2427 = vpack.c.b16 %v1647, %v1643
  %v2428 = vpack.c.b16 %v1648, %v1644
  %v2429 = vpack.c.b16 %v1649, %v1645
  %v2430 = vpack.c.b16 %v1650, %v1646
  %v2431 = vpack.c.b16 %v1655, %v1651
  %v2432 = vpack.c.b16 %v1656, %v1652
  %v2433 = vpack.c.b16 %v1657, %v1653
  %v2434 = vpack.c.b16 %v1658, %v1654
  %v2435 = vpack.c.b16 %v1663, %v1659
  %v2436 = vpack.c.b16 %v1664, %v1660
  %v2437 = vpack.c.b16 %v1665, %v1661
  %v2438 = vpack.c.b16 %v1666, %v1662
  %v2439 = vpack.c.b16 %v1671, %v1667
  %v2440 = vpack.c.b16 %v1672, %v1668
  %v2441 = vpack.c.b16 %v1673, %v1669
  %v2442 = vpack.c.b16 %v1674, %v1670
  %v2443 = vpack.c.b16 %v1679, %v1675
  %v2444 = vpack.c.b16 %v1680, %v1676
  %v2445 = vpack.c.b16 %v1681, %v1677
  %v2446 = vpack.c.b16 %v1682, %v1678
  %v2447 = vpack.c.b16 %v1687, %v1683
  %v2448 = vpack.c.b16 %v1688, %v1684
  %v2449 = vpack.c.b16 %v1689, %v1685
  %v2450 = vpack.c.b16 %v1690, %v1686
  %v2451 = vpack.c.b16 %v1695, %v1691
  %v2452 = vpack.c.b16 %v1696, %v1692
  %v2453 = vpack.c.b16 %v1697, %v1693
  %v2454 = vpack.c.b16 %v1698, %v1694
  %v2455 = vpack.c.b16 %v1703, %v1699
  %v2456 = vpack.c.b16 %v1704, %v1700
  %v2457 = vpack.c.b16 %v1705, %v1701
  %v2458 = vpack.c.b16 %v1706, %v1702
  %v2459 = vpack.c.b16 %v1711, %v1707
  %v2460 = vpack.c.b16 %v1712, %v1708
  %v2461 = vpack.c.b16 %v1713, %v1709
  %v2462 = vpack.c.b16 %v1714, %v1710
  %v2463 = vpack.c.b16 %v1719, %v1715
  %v2464 = vpack.c.b16 %v1720, %v1716
  %v2465 = vpack.c.b16 %v1721, %v1717
  %v2466 = vpack.c.b16 %v1722, %v1718
  %v2467 = vpack.c.b16 %v1727, %v1723
  %v2468 = vpack.c.b16 %v1728, %v1724
  %v2469 = vpack.c.b16 %v1729, %v1725
  %v2470 = vpack.c.b16 %v1730, %v1726
  %v2471 = vpack.c.b16 %v1735, %v1731
  %v2472 = vpack.c.b16 %v1736, %v1732
  %v2473 = vpack.c.b16 %v1737, %v1733
  %v2474 = vpack.c.b16 %v1738, %v1734
  %v2475 = vpack.c.b16 %v1743, %v1739
  %v2476 = vpack.c.b16 %v1744, %v1740
  %v2477 = vpack.c.b16 %v1745, %v1741
  %v2478 = vpack.c.b16 %v1746, %v1742
  %v2479 = vpack.c.b16 %v1751, %v1747
  %v2480 = vpack.c.b16 %v1752, %v1748
  %v2481 = vpack.c.b16 %v1753, %v1749
  %v2482 = vpack.c.b16 %v1754, %v1750
  %v2483 = vpack.c.b16 %v1759, %v1755
  %v2484 = vpack.c.b16 %v1760, %v1756
  %v2485 = vpack.c.b16 %v1761, %v1757
  %v2486 = vpack.c.b16 %v1762, %v1758
  %v2487 = vpack.c.b16 %v1767, %v1763
  %v2488 = vpack.c.b16 %v1768, %v1764
  %v2489 = vpack.c.b16 %v1769, %v1765
  %v2490 = vpack.c.b16 %v1770, %v1766
  %v2491 = vpack.c.b16 %v1775, %v1771
  %v2492 = vpack.c.b16 %v1776, %v1772
  %v2493 = vpack.c.b16 %v1777, %v1773
  %v2494 = vpack.c.b16 %v1778, %v1774
  %v2495 = vpack.c.b16 %v1783, %v1779
  %v2496 = vpack.c.b16 %v1784, %v1780
  %v2497 = vpack.c.b16 %v1785, %v1781
  %v2498 = vpack.c.b16 %v1786, %v1782
  %v2499 = vpack.c.b16 %v1791, %v1787
  %v2500 = vpack.c.b16 %v1792, %v1788
  %v2501 = vpack.c.b16 %v1793, %v1789
  %v2502 = vpack.c.b16 %v1794, %v1790
  %v2503 = vpack.c.b16 %v1799, %v1795
  %v2504 = vpack.c.b16 %v1800, %v1796
  %v2505 = vpack.c.b16 %v1801, %v1797
  %v2506 = vpack.c.b16 %v1802, %v1798
  %v2507 = vpack.c.b16 %v1807, %v1803
  %v2508 = vpack.c.b16 %v1808, %v1804
  %v2509 = vpack.c.b16 %v1809, %v1805
  %v2510 = vpack.c.b16 %v1810, %v1806
  %v2511 = vpack.c.b16 %v1815, %v1811
  %v2512 = vpack.c.b16 %v1816, %v1812
  %v2513 = vpack.c.b16 %v1817, %v1813
  %v2514 = vpack.c.b16 %v1818, %v1814
  %v2515 = vpack.c.b16 %v1823, %v1819
  %v2516 = vpack.c.b16 %v1824, %v1820
  %v2517 = vpack.c.b16 %v1825, %v1821
  %v2518 = vpack.c.b16 %v1826, %v1822
  %v2519 = vpack.c.b16 %v1831, %v1827
  %v2520 = vpack.c.b16 %v1832, %v1828
  %v2521 = vpack.c.b16 %v1833, %v1829
  %v2522 = vpack.c.b16 %v1834, %v1830
  %v2523 = vpack.c.b16 %v1839, %v1835
  %v2524 = vpack.c.b16 %v1840, %v1836
  %v2525 = vpack.c.b16 %v1841, %v1837
  %v2526 = vpack.c.b16 %v1842, %v1838
  %v2527 = vpack.c.b16 %v1847, %v1843
  %v2528 = vpack.c.b16 %v1848, %v1844
  %v2529 = vpack.c.b16 %v1849, %v1845
  %v2530 = vpack.c.b16 %v1850, %v1846
  %v2531 = vpack.c.b16 %v1855, %v1851
  %v2532 = vpack.c.b16 %v1856, %v1852
  %v2533 = vpack.c.b16 %v1857, %v1853
  %v2534 = vpack.c.b16 %v1858, %v1854
  %v2535 = vpack.c.b16 %v1863, %v1859
  %v2536 = vpack.c.b16 %v1864, %v1860
  %v2537 = vpack.c.b16 %v1865, %v1861
  %v2538 = vpack.c.b16 %v1866, %v1862
  %v2539 = vpack.c.b16 %v1871, %v1867
  %v2540 = vpack.c.b16 %v1872, %v1868
  %v2541 = vpack.c.b16 %v1873, %v1869
  %v2542 = vpack.c.b16 %v1874, %v1870
  %v2543 = vpack.c.b16 %v1879, %v1875
  %v2544 = vpack.c.b16 %v1880, %v1876
  %v2545 = vpack.c.b16 %v1881, %v1877
  %v2546 = vpack.c.b16 %v1882, %v1878
  %v2547 = vpack.c.b16 %v1887, %v1883
  %v2548 = vpack.c.b16 %v1888, %v1884
  %v2549 = vpack.c.b16 %v1889, %v1885
  %v2550 = vpack.c.b16 %v1890, %v1886
  %v2551 = vpack.c.b16 %v1895, %v1891
  %v2552 = vpack.c.b16 %v1896, %v1892
  %v2553 = vpack.c.b16 %v1897, %v1893
  %v2554 = vpack.c.b16 %v1898, %v1894
  %v2555 = vpack.c.b16 %v1903, %v1899
  %v2556 = vpack.c.b16 %v1904, %v1900
  %v2557 = vpack.c.b16 %v1905, %v1901
  %v2558 = vpack.c.b16 %v1906, %v1902
  %v2559 = vpack.c.b16 %v1911, %v1907
  %v2560 = vpack.c.b16 %v1912, %v1908
  %v2561 = vpack.c.b16 %v1913, %v1909
  %v2562 = vpack.c.b16 %v1914, %v1910
  %v2563 = vpack.c.b16 %v1919, %v1915
  %v2564 = vpack.c.b16 %v1920, %v1916
  %v2565 = vpack.c.b16 %v1921, %v1917
  %v2566 = vpack.c.b16 %v1922, %v1918
  %v2567 = vpack.c.b16 %v1927, %v1923
  %v2568 = vpack.c.b16 %v1928, %v1924
  %v2569 = vpack.c.b16 %v1929, %v1925
  %v2570 = vpack.c.b16 %v1930, %v1926
  %v2571 = vpack.c.b16 %v1935, %v1931
  %v2572 = vpack.c.b16 %v1936, %v1932
  %v2573 = vpack.c.b16 %v1937, %v1933
  %v2574 = vpack.c.b16 %v1938, %v1934
  %v2575 = vpack.c.b16 %v1943, %v1939
  %v2576 = vpack.c.b16 %v1944, %v1940
  %v2577 = vpack.c.b16 %v1945, %v1941
  %v2578 = vpack.c.b16 %v1946, %v1942
  %v2579 = vpack.c.b16 %v1951, %v1947
  %v2580 = vpack.c.b16 %v1952, %v1948
  %v2581 = vpack.c.b16 %v1953, %v1949
  %v2582 = vpack.c.b16 %v1954, %v1950
  %v2583 = vpack.c.b16 %v1959, %v1955
  %v2584 = vpack.c.b16 %v1960, %v1956
  %v2585 = vpack.c.b16 %v1961, %v1957
  %v2586 = vpack.c.b16 %v1962, %v1958
  %v2587 = vpack.c.b16 %v1967, %v1963
  %v2588 = vpack.c.b16 %v1968, %v1964
  %v2589 = vpack.c.b16 %v1969, %v1965
  %v2590 = vpack.c.b16 %v1970, %v1966
  %v2591 = vpack.c.b16 %v1975, %v1971
  %v2592 = vpack.c.b16 %v1976, %v1972
  %v2593 = vpack.c.b16 %v1977, %v1973
  %v2594 = vpack.c.b16 %v1978, %v1974
  %v2595 = vpack.c.b16 %v1983, %v1979
  %v2596 = vpack.c.b16 %v1984, %v1980
  %v2597 = vpack.c.b16 %v1985, %v1981
  %v2598 = vpack.c.b16 %v1986, %v1982
  %v2599 = vpack.c.b16 %v1991, %v1987
  %v2600 = vpack.c.b16 %v1992, %v1988
  %v2601 = vpack.c.b16 %v1993, %v1989
  %v2602 = vpack.c.b16 %v1994, %v1990
  %v2603 = vpack.c.b16 %v1999, %v1995
  %v2604 = vpack.c.b16 %v2000, %v1996
  %v2605 = vpack.c.b16 %v2001, %v1997
  %v2606 = vpack.c.b16 %v2002, %v1998
  %v2607 = vpack.c.b16 %v2007, %v2003
  %v2608 = vpack.c.b16 %v2008, %v2004
  %v2609 = vpack.c.b16 %v2009, %v2005
  %v2610 = vpack.c.b16 %v2010, %v2006
  %v2611 = vpack.c.b16 %v2015, %v2011
  %v2612 = vpack.c.b16 %v2016, %v2012
  %v2613 = vpack.c.b16 %v2017, %v2013
  %v2614 = vpack.c.b16 %v2018, %v2014
  %v2615 = vpack.c.b16 %v2023, %v2019
  %v2616 = vpack.c.b16 %v2024, %v2020
  %v2617 = vpack.c.b16 %v2025, %v2021
  %v2618 = vpack.c.b16 %v2026, %v2022
  %v2619 = vpack.c.b16 %v2031, %v2027
  %v2620 = vpack.c.b16 %v2032, %v2028
  %v2621 = vpack.c.b16 %v2033, %v2029
  %v2622 = vpack.c.b16 %v2034, %v2030
  %v2623 = vpack.c.b16 %v2039, %v2035
  %v2624 = vpack.c.b16 %v2040, %v2036
  %v2625 = vpack.c.b16 %v2041, %v2037
  %v2626 = vpack.c.b16 %v2042, %v2038
  %v2627 = vpack.c.b16 %v2047, %v2043
  %v2628 = vpack.c.b16 %v2048, %v2044
  %v2629 = vpack.c.b16 %v2049, %v2045
  %v2630 = vpack.c.b16 %v2050, %v2046
  %v2631 = vpack.c.b16 %v2055, %v2051
  %v2632 = vpack.c.b16 %v2056, %v2052
  %v2633 = vpack.c.b16 %v2057, %v2053
  %v2634 = vpack.c.b16 %v2058, %v2054
  %v2635 = vpack.c.b16 %v2063, %v2059
  %v2636 = vpack.c.b16 %v2064, %v2060
  %v2637 = vpack.c.b16 %v2065, %v2061
  %v2638 = vpack.c.b16 %v2066, %v2062
  %v2639 = vpack.c.b16 %v2071, %v2067
  %v2640 = vpack.c.b16 %v2072, %v2068
  %v2641 = vpack.c.b16 %v2073, %v2069
  %v2642 = vpack.c.b16 %v2074, %v2070
  %v2643 = vpack.c.b16 %v2079, %v2075
  %v2644 = vpack.c.b16 %v2080, %v2076
  %v2645 = vpack.c.b16 %v2081, %v2077
  %v2646 = vpack.c.b16 %v2082, %v2078
  %v2647 = vpack.c.b16 %v2087, %v2083
  %v2648 = vpack.c.b16 %v2088, %v2084
  %v2649 = vpack.c.b16 %v2089, %v2085
  %v2650 = vpack.c.b16 %v2090, %v2086
  %v2651 = vpack.c.b16 %v2095, %v2091
  %v2652 = vpack.c.b16 %v2096, %v2092
  %v2653 = vpack.c.b16 %v2097, %v2093
  %v2654 = vpack.c.b16 %v2098, %v2094
  %v2655 = vpack.c.b16 %v2103, %v2099
  %v2656 = vpack.c.b16 %v2104, %v2100
  %v2657 = vpack.c.b16 %v2105, %v2101
  %v2658 = vpack.c.b16 %v2106, %v2102
  %v2659 = vpack.c.b16 %v2111, %v2107
  %v2660 = vpack.c.b16 %v2112, %v2108
  %v2661 = vpack.c.b16 %v2113, %v2109
  %v2662 = vpack.c.b16 %v2114, %v2110
  %v2663 = vpack.c.b16 %v2119, %v2115
  %v2664 = vpack.c.b16 %v2120, %v2116
  %v2665 = vpack.c.b16 %v2121, %v2117
  %v2666 = vpack.c.b16 %v2122, %v2118
  %v2667 = vpack.c.b16 %v2127, %v2123
  %v2668 = vpack.c.b16 %v2128, %v2124
  %v2669 = vpack.c.b16 %v2129, %v2125
  %v2670 = vpack.c.b16 %v2130, %v2126
  %v2671 = vpack.c.b16 %v2135, %v2131
  %v2672 = vpack.c.b16 %v2136, %v2132
  %v2673 = vpack.c.b16 %v2137, %v2133
  %v2674 = vpack.c.b16 %v2138, %v2134
  %v2675 = vpack.c.b16 %v2143, %v2139
  %v2676 = vpack.c.b16 %v2144, %v2140
  %v2677 = vpack.c.b16 %v2145, %v2141
  %v2678 = vpack.c.b16 %v2146, %v2142
  %v2679 = vpack.c.b16 %v2151, %v2147
  %v2680 = vpack.c.b16 %v2152, %v2148
  %v2681 = vpack.c.b16 %v2153, %v2149
  %v2682 = vpack.c.b16 %v2154, %v2150
  %v2683 = vpack.c.b16 %v2159, %v2155
  %v2684 = vpack.c.b16 %v2160, %v2156
  %v2685 = vpack.c.b16 %v2161, %v2157
  %v2686 = vpack.c.b16 %v2162, %v2158
  %v2687 = vpack.c.b16 %v2167, %v2163
  %v2688 = vpack.c.b16 %v2168, %v2164
  %v2689 = vpack.c.b16 %v2169, %v2165
  %v2690 = vpack.c.b16 %v2170, %v2166
  %v2691 = vpack.c.b16 %v2175, %v2171
  %v2692 = vpack.c.b16 %v2176, %v2172
  %v2693 = vpack.c.b16 %v2177, %v2173
  %v2694 = vpack.c.b16 %v2178, %v2174
  %v2695 = vpack.c.b16 %v2183, %v2179
  %v2696 = vpack.c.b16 %v2184, %v2180
  %v2697 = vpack.c.b16 %v2185, %v2181
  %v2698 = vpack.c.b16 %v2186, %v2182
  %3211 = vmatprep.subr.bf16.mxu0 %v2216
  %3212 = vmatpush1.bf16.msra.mxu0 %v2215
  %3213 = vmatprep.subr.bf16.mxu0 %v2212
  %3214 = vmatpush1.bf16.msra.mxu0 %v2211
  %3215 = vmatprep.subr.bf16.mxu0 %v2208
  %3216 = vmatpush1.bf16.msra.mxu0 %v2207
  %3217 = vmatprep.subr.bf16.mxu0 %v2204
  %3218 = vmatpush1.bf16.msra.mxu0 %v2203
  %3219 = vmatprep.subr.bf16.mxu0 %v2200
  %3220 = vmatpush1.bf16.msra.mxu0 %v2199
  %3221 = vmatprep.subr.bf16.mxu0 %v2196
  %3222 = vmatpush1.bf16.msra.mxu0 %v2195
  %3223 = vmatprep.subr.bf16.mxu0 %v2192
  %3224 = vmatpush1.bf16.msra.mxu0 %v2191
  %3225 = vmatprep.subr.bf16.mxu0 %v2188
  %3226 = vmatpush1.bf16.msra.mxu0 %v2187
  %3227 = vmatprep.subr.bf16.mxu0 %v2248
  %3228 = vmatpush2.bf16.msra.mxu0 %v2247
  %3229 = vmatprep.subr.bf16.mxu0 %v2244
  %3230 = vmatpush2.bf16.msra.mxu0 %v2243
  %3231 = vmatprep.subr.bf16.mxu0 %v2240
  %3232 = vmatpush2.bf16.msra.mxu0 %v2239
  %3233 = vmatprep.subr.bf16.mxu0 %v2236
  %3234 = vmatpush2.bf16.msra.mxu0 %v2235
  %3235 = vmatprep.subr.bf16.mxu0 %v2232
  %3236 = vmatpush2.bf16.msra.mxu0 %v2231
  %3237 = vmatprep.subr.bf16.mxu0 %v2228
  %3238 = vmatpush2.bf16.msra.mxu0 %v2227
  %3239 = vmatprep.subr.bf16.mxu0 %v2224
  %3240 = vmatpush2.bf16.msra.mxu0 %v2223
  %3241 = vmatprep.subr.bf16.mxu0 %v2220
  %3242 = vmatpush2.bf16.msra.mxu0 %v2219
  %3243 = vmatprep.mubr.bf16.mxu0 %v620
  %3244 = vmatmul.mubr.bf16.gmra.mxu0 %v619
  %v3245 = vpop.f32.mrf.mxu0
  %v3246 = vadd.f32 %v554, %v3245
  %v3247 = vpop.f32.mrf.mxu0
  %v3248 = vadd.f32 %v558, %v3247
  %v3249 = vpop.f32.mrf.mxu0
  %v3250 = vadd.f32 %v554, %v3249
  %v3251 = vpop.f32.mrf.mxu0
  %v3252 = vadd.f32 %v558, %v3251
  %3253 = vdwg.mxu0
  %3254 = vmatprep.subr.bf16.mxu0 %v2280
  %3255 = vmatpush1.bf16.msra.mxu0 %v2279
  %3256 = vmatprep.subr.bf16.mxu0 %v2276
  %3257 = vmatpush1.bf16.msra.mxu0 %v2275
  %3258 = vmatprep.subr.bf16.mxu0 %v2272
  %3259 = vmatpush1.bf16.msra.mxu0 %v2271
  %3260 = vmatprep.subr.bf16.mxu0 %v2268
  %3261 = vmatpush1.bf16.msra.mxu0 %v2267
  %3262 = vmatprep.subr.bf16.mxu0 %v2264
  %3263 = vmatpush1.bf16.msra.mxu0 %v2263
  %3264 = vmatprep.subr.bf16.mxu0 %v2260
  %3265 = vmatpush1.bf16.msra.mxu0 %v2259
  %3266 = vmatprep.subr.bf16.mxu0 %v2256
  %3267 = vmatpush1.bf16.msra.mxu0 %v2255
  %3268 = vmatprep.subr.bf16.mxu0 %v2252
  %3269 = vmatpush1.bf16.msra.mxu0 %v2251
  %3270 = vmatprep.subr.bf16.mxu0 %v2312
  %3271 = vmatpush2.bf16.msra.mxu0 %v2311
  %3272 = vmatprep.subr.bf16.mxu0 %v2308
  %3273 = vmatpush2.bf16.msra.mxu0 %v2307
  %3274 = vmatprep.subr.bf16.mxu0 %v2304
  %3275 = vmatpush2.bf16.msra.mxu0 %v2303
  %3276 = vmatprep.subr.bf16.mxu0 %v2300
  %3277 = vmatpush2.bf16.msra.mxu0 %v2299
  %3278 = vmatprep.subr.bf16.mxu0 %v2296
  %3279 = vmatpush2.bf16.msra.mxu0 %v2295
  %3280 = vmatprep.subr.bf16.mxu0 %v2292
  %3281 = vmatpush2.bf16.msra.mxu0 %v2291
  %3282 = vmatprep.subr.bf16.mxu0 %v2288
  %3283 = vmatpush2.bf16.msra.mxu0 %v2287
  %3284 = vmatprep.subr.bf16.mxu0 %v2284
  %3285 = vmatpush2.bf16.msra.mxu0 %v2283
  %3286 = vmatprep.mubr.bf16.mxu0 %v622
  %3287 = vmatmul.mubr.bf16.gmra.mxu0 %v621
  %v3288 = vpop.f32.mrf.mxu0
  %v3289 = vadd.f32 %v3246, %v3288
  %v3290 = vpop.f32.mrf.mxu0
  %v3291 = vadd.f32 %v3248, %v3290
  %v3292 = vpop.f32.mrf.mxu0
  %v3293 = vadd.f32 %v3250, %v3292
  %v3294 = vpop.f32.mrf.mxu0
  %v3295 = vadd.f32 %v3252, %v3294
  %3296 = vdwg.mxu0
  %3297 = vmatprep.subr.bf16.mxu0 %v2344
  %3298 = vmatpush1.bf16.msra.mxu0 %v2343
  %3299 = vmatprep.subr.bf16.mxu0 %v2340
  %3300 = vmatpush1.bf16.msra.mxu0 %v2339
  %3301 = vmatprep.subr.bf16.mxu0 %v2336
  %3302 = vmatpush1.bf16.msra.mxu0 %v2335
  %3303 = vmatprep.subr.bf16.mxu0 %v2332
  %3304 = vmatpush1.bf16.msra.mxu0 %v2331
  %3305 = vmatprep.subr.bf16.mxu0 %v2328
  %3306 = vmatpush1.bf16.msra.mxu0 %v2327
  %3307 = vmatprep.subr.bf16.mxu0 %v2324
  %3308 = vmatpush1.bf16.msra.mxu0 %v2323
  %3309 = vmatprep.subr.bf16.mxu0 %v2320
  %3310 = vmatpush1.bf16.msra.mxu0 %v2319
  %3311 = vmatprep.subr.bf16.mxu0 %v2316
  %3312 = vmatpush1.bf16.msra.mxu0 %v2315
  %3313 = vmatprep.subr.bf16.mxu0 %v2376
  %3314 = vmatpush2.bf16.msra.mxu0 %v2375
  %3315 = vmatprep.subr.bf16.mxu0 %v2372
  %3316 = vmatpush2.bf16.msra.mxu0 %v2371
  %3317 = vmatprep.subr.bf16.mxu0 %v2368
  %3318 = vmatpush2.bf16.msra.mxu0 %v2367
  %3319 = vmatprep.subr.bf16.mxu0 %v2364
  %3320 = vmatpush2.bf16.msra.mxu0 %v2363
  %3321 = vmatprep.subr.bf16.mxu0 %v2360
  %3322 = vmatpush2.bf16.msra.mxu0 %v2359
  %3323 = vmatprep.subr.bf16.mxu0 %v2356
  %3324 = vmatpush2.bf16.msra.mxu0 %v2355
  %3325 = vmatprep.subr.bf16.mxu0 %v2352
  %3326 = vmatpush2.bf16.msra.mxu0 %v2351
  %3327 = vmatprep.subr.bf16.mxu0 %v2348
  %3328 = vmatpush2.bf16.msra.mxu0 %v2347
  %3329 = vmatprep.mubr.bf16.mxu0 %v624
  %3330 = vmatmul.mubr.bf16.gmra.mxu0 %v623
  %v3331 = vpop.f32.mrf.mxu0
  %v3332 = vadd.f32 %v3289, %v3331
  %v3333 = vpop.f32.mrf.mxu0
  %v3334 = vadd.f32 %v3291, %v3333
  %v3335 = vpop.f32.mrf.mxu0
  %v3336 = vadd.f32 %v3293, %v3335
  %v3337 = vpop.f32.mrf.mxu0
  %v3338 = vadd.f32 %v3295, %v3337
  %3339 = vdwg.mxu0
  %3340 = vmatprep.subr.bf16.mxu0 %v2408
  %3341 = vmatpush1.bf16.msra.mxu0 %v2407
  %3342 = vmatprep.subr.bf16.mxu0 %v2404
  %3343 = vmatpush1.bf16.msra.mxu0 %v2403
  %3344 = vmatprep.subr.bf16.mxu0 %v2400
  %3345 = vmatpush1.bf16.msra.mxu0 %v2399
  %3346 = vmatprep.subr.bf16.mxu0 %v2396
  %3347 = vmatpush1.bf16.msra.mxu0 %v2395
  %3348 = vmatprep.subr.bf16.mxu0 %v2392
  %3349 = vmatpush1.bf16.msra.mxu0 %v2391
  %3350 = vmatprep.subr.bf16.mxu0 %v2388
  %3351 = vmatpush1.bf16.msra.mxu0 %v2387
  %3352 = vmatprep.subr.bf16.mxu0 %v2384
  %3353 = vmatpush1.bf16.msra.mxu0 %v2383
  %3354 = vmatprep.subr.bf16.mxu0 %v2380
  %3355 = vmatpush1.bf16.msra.mxu0 %v2379
  %3356 = vmatprep.subr.bf16.mxu0 %v2440
  %3357 = vmatpush2.bf16.msra.mxu0 %v2439
  %3358 = vmatprep.subr.bf16.mxu0 %v2436
  %3359 = vmatpush2.bf16.msra.mxu0 %v2435
  %3360 = vmatprep.subr.bf16.mxu0 %v2432
  %3361 = vmatpush2.bf16.msra.mxu0 %v2431
  %3362 = vmatprep.subr.bf16.mxu0 %v2428
  %3363 = vmatpush2.bf16.msra.mxu0 %v2427
  %3364 = vmatprep.subr.bf16.mxu0 %v2424
  %3365 = vmatpush2.bf16.msra.mxu0 %v2423
  %3366 = vmatprep.subr.bf16.mxu0 %v2420
  %3367 = vmatpush2.bf16.msra.mxu0 %v2419
  %3368 = vmatprep.subr.bf16.mxu0 %v2416
  %3369 = vmatpush2.bf16.msra.mxu0 %v2415
  %3370 = vmatprep.subr.bf16.mxu0 %v2412
  %3371 = vmatpush2.bf16.msra.mxu0 %v2411
  %3372 = vmatprep.mubr.bf16.mxu0 %v626
  %3373 = vmatmul.mubr.bf16.gmra.mxu0 %v625
  %v3374 = vpop.f32.mrf.mxu0
  %v3375 = vadd.f32 %v3332, %v3374
  %v3376 = vpop.f32.mrf.mxu0
  %v3377 = vadd.f32 %v3334, %v3376
  %v3378 = vpop.f32.mrf.mxu0
  %v3379 = vadd.f32 %v3336, %v3378
  %v3380 = vpop.f32.mrf.mxu0
  %v3381 = vadd.f32 %v3338, %v3380
  %3382 = vdwg.mxu0
  %3383 = vmatprep.subr.bf16.mxu0 %v2472
  %3384 = vmatpush1.bf16.msra.mxu0 %v2471
  %3385 = vmatprep.subr.bf16.mxu0 %v2468
  %3386 = vmatpush1.bf16.msra.mxu0 %v2467
  %3387 = vmatprep.subr.bf16.mxu0 %v2464
  %3388 = vmatpush1.bf16.msra.mxu0 %v2463
  %3389 = vmatprep.subr.bf16.mxu0 %v2460
  %3390 = vmatpush1.bf16.msra.mxu0 %v2459
  %3391 = vmatprep.subr.bf16.mxu0 %v2456
  %3392 = vmatpush1.bf16.msra.mxu0 %v2455
  %3393 = vmatprep.subr.bf16.mxu0 %v2452
  %3394 = vmatpush1.bf16.msra.mxu0 %v2451
  %3395 = vmatprep.subr.bf16.mxu0 %v2448
  %3396 = vmatpush1.bf16.msra.mxu0 %v2447
  %3397 = vmatprep.subr.bf16.mxu0 %v2444
  %3398 = vmatpush1.bf16.msra.mxu0 %v2443
  %3399 = vmatprep.subr.bf16.mxu0 %v2504
  %3400 = vmatpush2.bf16.msra.mxu0 %v2503
  %3401 = vmatprep.subr.bf16.mxu0 %v2500
  %3402 = vmatpush2.bf16.msra.mxu0 %v2499
  %3403 = vmatprep.subr.bf16.mxu0 %v2496
  %3404 = vmatpush2.bf16.msra.mxu0 %v2495
  %3405 = vmatprep.subr.bf16.mxu0 %v2492
  %3406 = vmatpush2.bf16.msra.mxu0 %v2491
  %3407 = vmatprep.subr.bf16.mxu0 %v2488
  %3408 = vmatpush2.bf16.msra.mxu0 %v2487
  %3409 = vmatprep.subr.bf16.mxu0 %v2484
  %3410 = vmatpush2.bf16.msra.mxu0 %v2483
  %3411 = vmatprep.subr.bf16.mxu0 %v2480
  %3412 = vmatpush2.bf16.msra.mxu0 %v2479
  %3413 = vmatprep.subr.bf16.mxu0 %v2476
  %3414 = vmatpush2.bf16.msra.mxu0 %v2475
  %3415 = vmatprep.mubr.bf16.mxu0 %v628
  %3416 = vmatmul.mubr.bf16.gmra.mxu0 %v627
  %v3417 = vpop.f32.mrf.mxu0
  %v3418 = vadd.f32 %v3375, %v3417
  %v3419 = vpop.f32.mrf.mxu0
  %v3420 = vadd.f32 %v3377, %v3419
  %v3421 = vpop.f32.mrf.mxu0
  %v3422 = vadd.f32 %v3379, %v3421
  %v3423 = vpop.f32.mrf.mxu0
  %v3424 = vadd.f32 %v3381, %v3423
  %3425 = vdwg.mxu0
  %3426 = vmatprep.subr.bf16.mxu0 %v2536
  %3427 = vmatpush1.bf16.msra.mxu0 %v2535
  %3428 = vmatprep.subr.bf16.mxu0 %v2532
  %3429 = vmatpush1.bf16.msra.mxu0 %v2531
  %3430 = vmatprep.subr.bf16.mxu0 %v2528
  %3431 = vmatpush1.bf16.msra.mxu0 %v2527
  %3432 = vmatprep.subr.bf16.mxu0 %v2524
  %3433 = vmatpush1.bf16.msra.mxu0 %v2523
  %3434 = vmatprep.subr.bf16.mxu0 %v2520
  %3435 = vmatpush1.bf16.msra.mxu0 %v2519
  %3436 = vmatprep.subr.bf16.mxu0 %v2516
  %3437 = vmatpush1.bf16.msra.mxu0 %v2515
  %3438 = vmatprep.subr.bf16.mxu0 %v2512
  %3439 = vmatpush1.bf16.msra.mxu0 %v2511
  %3440 = vmatprep.subr.bf16.mxu0 %v2508
  %3441 = vmatpush1.bf16.msra.mxu0 %v2507
  %3442 = vmatprep.subr.bf16.mxu0 %v2568
  %3443 = vmatpush2.bf16.msra.mxu0 %v2567
  %3444 = vmatprep.subr.bf16.mxu0 %v2564
  %3445 = vmatpush2.bf16.msra.mxu0 %v2563
  %3446 = vmatprep.subr.bf16.mxu0 %v2560
  %3447 = vmatpush2.bf16.msra.mxu0 %v2559
  %3448 = vmatprep.subr.bf16.mxu0 %v2556
  %3449 = vmatpush2.bf16.msra.mxu0 %v2555
  %3450 = vmatprep.subr.bf16.mxu0 %v2552
  %3451 = vmatpush2.bf16.msra.mxu0 %v2551
  %3452 = vmatprep.subr.bf16.mxu0 %v2548
  %3453 = vmatpush2.bf16.msra.mxu0 %v2547
  %3454 = vmatprep.subr.bf16.mxu0 %v2544
  %3455 = vmatpush2.bf16.msra.mxu0 %v2543
  %3456 = vmatprep.subr.bf16.mxu0 %v2540
  %3457 = vmatpush2.bf16.msra.mxu0 %v2539
  %3458 = vmatprep.mubr.bf16.mxu0 %v630
  %3459 = vmatmul.mubr.bf16.gmra.mxu0 %v629
  %v3460 = vpop.f32.mrf.mxu0
  %v3461 = vadd.f32 %v3418, %v3460
  %v3462 = vpop.f32.mrf.mxu0
  %v3463 = vadd.f32 %v3420, %v3462
  %v3464 = vpop.f32.mrf.mxu0
  %v3465 = vadd.f32 %v3422, %v3464
  %v3466 = vpop.f32.mrf.mxu0
  %v3467 = vadd.f32 %v3424, %v3466
  %3468 = vdwg.mxu0
  %3469 = vmatprep.subr.bf16.mxu0 %v2600
  %3470 = vmatpush1.bf16.msra.mxu0 %v2599
  %3471 = vmatprep.subr.bf16.mxu0 %v2596
  %3472 = vmatpush1.bf16.msra.mxu0 %v2595
  %3473 = vmatprep.subr.bf16.mxu0 %v2592
  %3474 = vmatpush1.bf16.msra.mxu0 %v2591
  %3475 = vmatprep.subr.bf16.mxu0 %v2588
  %3476 = vmatpush1.bf16.msra.mxu0 %v2587
  %3477 = vmatprep.subr.bf16.mxu0 %v2584
  %3478 = vmatpush1.bf16.msra.mxu0 %v2583
  %3479 = vmatprep.subr.bf16.mxu0 %v2580
  %3480 = vmatpush1.bf16.msra.mxu0 %v2579
  %3481 = vmatprep.subr.bf16.mxu0 %v2576
  %3482 = vmatpush1.bf16.msra.mxu0 %v2575
  %3483 = vmatprep.subr.bf16.mxu0 %v2572
  %3484 = vmatpush1.bf16.msra.mxu0 %v2571
  %3485 = vmatprep.subr.bf16.mxu0 %v2632
  %3486 = vmatpush2.bf16.msra.mxu0 %v2631
  %3487 = vmatprep.subr.bf16.mxu0 %v2628
  %3488 = vmatpush2.bf16.msra.mxu0 %v2627
  %3489 = vmatprep.subr.bf16.mxu0 %v2624
  %3490 = vmatpush2.bf16.msra.mxu0 %v2623
  %3491 = vmatprep.subr.bf16.mxu0 %v2620
  %3492 = vmatpush2.bf16.msra.mxu0 %v2619
  %3493 = vmatprep.subr.bf16.mxu0 %v2616
  %3494 = vmatpush2.bf16.msra.mxu0 %v2615
  %3495 = vmatprep.subr.bf16.mxu0 %v2612
  %3496 = vmatpush2.bf16.msra.mxu0 %v2611
  %3497 = vmatprep.subr.bf16.mxu0 %v2608
  %3498 = vmatpush2.bf16.msra.mxu0 %v2607
  %3499 = vmatprep.subr.bf16.mxu0 %v2604
  %3500 = vmatpush2.bf16.msra.mxu0 %v2603
  %3501 = vmatprep.mubr.bf16.mxu0 %v632
  %3502 = vmatmul.mubr.bf16.gmra.mxu0 %v631
  %v3503 = vpop.f32.mrf.mxu0
  %v3504 = vadd.f32 %v3461, %v3503
  %v3505 = vpop.f32.mrf.mxu0
  %v3506 = vadd.f32 %v3463, %v3505
  %v3507 = vpop.f32.mrf.mxu0
  %v3508 = vadd.f32 %v3465, %v3507
  %v3509 = vpop.f32.mrf.mxu0
  %v3510 = vadd.f32 %v3467, %v3509
  %3511 = vdwg.mxu0
  %3512 = vmatprep.subr.bf16.mxu0 %v2664
  %3513 = vmatpush1.bf16.msra.mxu0 %v2663
  %3514 = vmatprep.subr.bf16.mxu0 %v2660
  %3515 = vmatpush1.bf16.msra.mxu0 %v2659
  %3516 = vmatprep.subr.bf16.mxu0 %v2656
  %3517 = vmatpush1.bf16.msra.mxu0 %v2655
  %3518 = vmatprep.subr.bf16.mxu0 %v2652
  %3519 = vmatpush1.bf16.msra.mxu0 %v2651
  %3520 = vmatprep.subr.bf16.mxu0 %v2648
  %3521 = vmatpush1.bf16.msra.mxu0 %v2647
  %3522 = vmatprep.subr.bf16.mxu0 %v2644
  %3523 = vmatpush1.bf16.msra.mxu0 %v2643
  %3524 = vmatprep.subr.bf16.mxu0 %v2640
  %3525 = vmatpush1.bf16.msra.mxu0 %v2639
  %3526 = vmatprep.subr.bf16.mxu0 %v2636
  %3527 = vmatpush1.bf16.msra.mxu0 %v2635
  %3528 = vmatprep.subr.bf16.mxu0 %v2696
  %3529 = vmatpush2.bf16.msra.mxu0 %v2695
  %3530 = vmatprep.subr.bf16.mxu0 %v2692
  %3531 = vmatpush2.bf16.msra.mxu0 %v2691
  %3532 = vmatprep.subr.bf16.mxu0 %v2688
  %3533 = vmatpush2.bf16.msra.mxu0 %v2687
  %3534 = vmatprep.subr.bf16.mxu0 %v2684
  %3535 = vmatpush2.bf16.msra.mxu0 %v2683
  %3536 = vmatprep.subr.bf16.mxu0 %v2680
  %3537 = vmatpush2.bf16.msra.mxu0 %v2679
  %3538 = vmatprep.subr.bf16.mxu0 %v2676
  %3539 = vmatpush2.bf16.msra.mxu0 %v2675
  %3540 = vmatprep.subr.bf16.mxu0 %v2672
  %3541 = vmatpush2.bf16.msra.mxu0 %v2671
  %3542 = vmatprep.subr.bf16.mxu0 %v2668
  %3543 = vmatpush2.bf16.msra.mxu0 %v2667
  %3544 = vmatprep.mubr.bf16.mxu0 %v634
  %3545 = vmatmul.mubr.bf16.gmra.mxu0 %v633
  %v3546 = vpop.f32.mrf.mxu0
  %v3547 = vadd.f32 %v3504, %v3546
  %v3548 = vpop.f32.mrf.mxu0
  %v3549 = vadd.f32 %v3506, %v3548
  %v3550 = vpop.f32.mrf.mxu0
  %v3551 = vadd.f32 %v3508, %v3550
  %v3552 = vpop.f32.mrf.mxu0
  %v3553 = vadd.f32 %v3510, %v3552
  %3554 = vdwg.mxu0
  %3555 = vmatprep.subr.bf16.mxu0 %v2218
  %3556 = vmatpush1.bf16.msra.mxu0 %v2217
  %3557 = vmatprep.subr.bf16.mxu0 %v2214
  %3558 = vmatpush1.bf16.msra.mxu0 %v2213
  %3559 = vmatprep.subr.bf16.mxu0 %v2210
  %3560 = vmatpush1.bf16.msra.mxu0 %v2209
  %3561 = vmatprep.subr.bf16.mxu0 %v2206
  %3562 = vmatpush1.bf16.msra.mxu0 %v2205
  %3563 = vmatprep.subr.bf16.mxu0 %v2202
  %3564 = vmatpush1.bf16.msra.mxu0 %v2201
  %3565 = vmatprep.subr.bf16.mxu0 %v2198
  %3566 = vmatpush1.bf16.msra.mxu0 %v2197
  %3567 = vmatprep.subr.bf16.mxu0 %v2194
  %3568 = vmatpush1.bf16.msra.mxu0 %v2193
  %3569 = vmatprep.subr.bf16.mxu0 %v2190
  %3570 = vmatpush1.bf16.msra.mxu0 %v2189
  %3571 = vmatprep.subr.bf16.mxu0 %v2250
  %3572 = vmatpush2.bf16.msra.mxu0 %v2249
  %3573 = vmatprep.subr.bf16.mxu0 %v2246
  %3574 = vmatpush2.bf16.msra.mxu0 %v2245
  %3575 = vmatprep.subr.bf16.mxu0 %v2242
  %3576 = vmatpush2.bf16.msra.mxu0 %v2241
  %3577 = vmatprep.subr.bf16.mxu0 %v2238
  %3578 = vmatpush2.bf16.msra.mxu0 %v2237
  %3579 = vmatprep.subr.bf16.mxu0 %v2234
  %3580 = vmatpush2.bf16.msra.mxu0 %v2233
  %3581 = vmatprep.subr.bf16.mxu0 %v2230
  %3582 = vmatpush2.bf16.msra.mxu0 %v2229
  %3583 = vmatprep.subr.bf16.mxu0 %v2226
  %3584 = vmatpush2.bf16.msra.mxu0 %v2225
  %3585 = vmatprep.subr.bf16.mxu0 %v2222
  %3586 = vmatpush2.bf16.msra.mxu0 %v2221
  %3587 = vmatprep.mubr.bf16.mxu0 %v620
  %3588 = vmatmul.mubr.bf16.gmra.mxu0 %v619
  %v3589 = vpop.f32.mrf.mxu0
  %v3590 = vadd.f32 %v562, %v3589
  %v3591 = vpop.f32.mrf.mxu0
  %v3592 = vadd.f32 %v566, %v3591
  %v3593 = vpop.f32.mrf.mxu0
  %v3594 = vadd.f32 %v562, %v3593
  %v3595 = vpop.f32.mrf.mxu0
  %v3596 = vadd.f32 %v566, %v3595
  %3597 = vdwg.mxu0
  %3598 = vmatprep.subr.bf16.mxu0 %v2282
  %3599 = vmatpush1.bf16.msra.mxu0 %v2281
  %3600 = vmatprep.subr.bf16.mxu0 %v2278
  %3601 = vmatpush1.bf16.msra.mxu0 %v2277
  %3602 = vmatprep.subr.bf16.mxu0 %v2274
  %3603 = vmatpush1.bf16.msra.mxu0 %v2273
  %3604 = vmatprep.subr.bf16.mxu0 %v2270
  %3605 = vmatpush1.bf16.msra.mxu0 %v2269
  %3606 = vmatprep.subr.bf16.mxu0 %v2266
  %3607 = vmatpush1.bf16.msra.mxu0 %v2265
  %3608 = vmatprep.subr.bf16.mxu0 %v2262
  %3609 = vmatpush1.bf16.msra.mxu0 %v2261
  %3610 = vmatprep.subr.bf16.mxu0 %v2258
  %3611 = vmatpush1.bf16.msra.mxu0 %v2257
  %3612 = vmatprep.subr.bf16.mxu0 %v2254
  %3613 = vmatpush1.bf16.msra.mxu0 %v2253
  %3614 = vmatprep.subr.bf16.mxu0 %v2314
  %3615 = vmatpush2.bf16.msra.mxu0 %v2313
  %3616 = vmatprep.subr.bf16.mxu0 %v2310
  %3617 = vmatpush2.bf16.msra.mxu0 %v2309
  %3618 = vmatprep.subr.bf16.mxu0 %v2306
  %3619 = vmatpush2.bf16.msra.mxu0 %v2305
  %3620 = vmatprep.subr.bf16.mxu0 %v2302
  %3621 = vmatpush2.bf16.msra.mxu0 %v2301
  %3622 = vmatprep.subr.bf16.mxu0 %v2298
  %3623 = vmatpush2.bf16.msra.mxu0 %v2297
  %3624 = vmatprep.subr.bf16.mxu0 %v2294
  %3625 = vmatpush2.bf16.msra.mxu0 %v2293
  %3626 = vmatprep.subr.bf16.mxu0 %v2290
  %3627 = vmatpush2.bf16.msra.mxu0 %v2289
  %3628 = vmatprep.subr.bf16.mxu0 %v2286
  %3629 = vmatpush2.bf16.msra.mxu0 %v2285
  %3630 = vmatprep.mubr.bf16.mxu0 %v622
  %3631 = vmatmul.mubr.bf16.gmra.mxu0 %v621
  %v3632 = vpop.f32.mrf.mxu0
  %v3633 = vadd.f32 %v3590, %v3632
  %v3634 = vpop.f32.mrf.mxu0
  %v3635 = vadd.f32 %v3592, %v3634
  %v3636 = vpop.f32.mrf.mxu0
  %v3637 = vadd.f32 %v3594, %v3636
  %v3638 = vpop.f32.mrf.mxu0
  %v3639 = vadd.f32 %v3596, %v3638
  %3640 = vdwg.mxu0
  %3641 = vmatprep.subr.bf16.mxu0 %v2346
  %3642 = vmatpush1.bf16.msra.mxu0 %v2345
  %3643 = vmatprep.subr.bf16.mxu0 %v2342
  %3644 = vmatpush1.bf16.msra.mxu0 %v2341
  %3645 = vmatprep.subr.bf16.mxu0 %v2338
  %3646 = vmatpush1.bf16.msra.mxu0 %v2337
  %3647 = vmatprep.subr.bf16.mxu0 %v2334
  %3648 = vmatpush1.bf16.msra.mxu0 %v2333
  %3649 = vmatprep.subr.bf16.mxu0 %v2330
  %3650 = vmatpush1.bf16.msra.mxu0 %v2329
  %3651 = vmatprep.subr.bf16.mxu0 %v2326
  %3652 = vmatpush1.bf16.msra.mxu0 %v2325
  %3653 = vmatprep.subr.bf16.mxu0 %v2322
  %3654 = vmatpush1.bf16.msra.mxu0 %v2321
  %3655 = vmatprep.subr.bf16.mxu0 %v2318
  %3656 = vmatpush1.bf16.msra.mxu0 %v2317
  %3657 = vmatprep.subr.bf16.mxu0 %v2378
  %3658 = vmatpush2.bf16.msra.mxu0 %v2377
  %3659 = vmatprep.subr.bf16.mxu0 %v2374
  %3660 = vmatpush2.bf16.msra.mxu0 %v2373
  %3661 = vmatprep.subr.bf16.mxu0 %v2370
  %3662 = vmatpush2.bf16.msra.mxu0 %v2369
  %3663 = vmatprep.subr.bf16.mxu0 %v2366
  %3664 = vmatpush2.bf16.msra.mxu0 %v2365
  %3665 = vmatprep.subr.bf16.mxu0 %v2362
  %3666 = vmatpush2.bf16.msra.mxu0 %v2361
  %3667 = vmatprep.subr.bf16.mxu0 %v2358
  %3668 = vmatpush2.bf16.msra.mxu0 %v2357
  %3669 = vmatprep.subr.bf16.mxu0 %v2354
  %3670 = vmatpush2.bf16.msra.mxu0 %v2353
  %3671 = vmatprep.subr.bf16.mxu0 %v2350
  %3672 = vmatpush2.bf16.msra.mxu0 %v2349
  %3673 = vmatprep.mubr.bf16.mxu0 %v624
  %3674 = vmatmul.mubr.bf16.gmra.mxu0 %v623
  %v3675 = vpop.f32.mrf.mxu0
  %v3676 = vadd.f32 %v3633, %v3675
  %v3677 = vpop.f32.mrf.mxu0
  %v3678 = vadd.f32 %v3635, %v3677
  %v3679 = vpop.f32.mrf.mxu0
  %v3680 = vadd.f32 %v3637, %v3679
  %v3681 = vpop.f32.mrf.mxu0
  %v3682 = vadd.f32 %v3639, %v3681
  %3683 = vdwg.mxu0
  %3684 = vmatprep.subr.bf16.mxu0 %v2410
  %3685 = vmatpush1.bf16.msra.mxu0 %v2409
  %3686 = vmatprep.subr.bf16.mxu0 %v2406
  %3687 = vmatpush1.bf16.msra.mxu0 %v2405
  %3688 = vmatprep.subr.bf16.mxu0 %v2402
  %3689 = vmatpush1.bf16.msra.mxu0 %v2401
  %3690 = vmatprep.subr.bf16.mxu0 %v2398
  %3691 = vmatpush1.bf16.msra.mxu0 %v2397
  %3692 = vmatprep.subr.bf16.mxu0 %v2394
  %3693 = vmatpush1.bf16.msra.mxu0 %v2393
  %3694 = vmatprep.subr.bf16.mxu0 %v2390
  %3695 = vmatpush1.bf16.msra.mxu0 %v2389
  %3696 = vmatprep.subr.bf16.mxu0 %v2386
  %3697 = vmatpush1.bf16.msra.mxu0 %v2385
  %3698 = vmatprep.subr.bf16.mxu0 %v2382
  %3699 = vmatpush1.bf16.msra.mxu0 %v2381
  %3700 = vmatprep.subr.bf16.mxu0 %v2442
  %3701 = vmatpush2.bf16.msra.mxu0 %v2441
  %3702 = vmatprep.subr.bf16.mxu0 %v2438
  %3703 = vmatpush2.bf16.msra.mxu0 %v2437
  %3704 = vmatprep.subr.bf16.mxu0 %v2434
  %3705 = vmatpush2.bf16.msra.mxu0 %v2433
  %3706 = vmatprep.subr.bf16.mxu0 %v2430
  %3707 = vmatpush2.bf16.msra.mxu0 %v2429
  %3708 = vmatprep.subr.bf16.mxu0 %v2426
  %3709 = vmatpush2.bf16.msra.mxu0 %v2425
  %3710 = vmatprep.subr.bf16.mxu0 %v2422
  %3711 = vmatpush2.bf16.msra.mxu0 %v2421
  %3712 = vmatprep.subr.bf16.mxu0 %v2418
  %3713 = vmatpush2.bf16.msra.mxu0 %v2417
  %3714 = vmatprep.subr.bf16.mxu0 %v2414
  %3715 = vmatpush2.bf16.msra.mxu0 %v2413
  %3716 = vmatprep.mubr.bf16.mxu0 %v626
  %3717 = vmatmul.mubr.bf16.gmra.mxu0 %v625
  %v3718 = vpop.f32.mrf.mxu0
  %v3719 = vadd.f32 %v3676, %v3718
  %v3720 = vpop.f32.mrf.mxu0
  %v3721 = vadd.f32 %v3678, %v3720
  %v3722 = vpop.f32.mrf.mxu0
  %v3723 = vadd.f32 %v3680, %v3722
  %v3724 = vpop.f32.mrf.mxu0
  %v3725 = vadd.f32 %v3682, %v3724
  %3726 = vdwg.mxu0
  %3727 = vmatprep.subr.bf16.mxu0 %v2474
  %3728 = vmatpush1.bf16.msra.mxu0 %v2473
  %3729 = vmatprep.subr.bf16.mxu0 %v2470
  %3730 = vmatpush1.bf16.msra.mxu0 %v2469
  %3731 = vmatprep.subr.bf16.mxu0 %v2466
  %3732 = vmatpush1.bf16.msra.mxu0 %v2465
  %3733 = vmatprep.subr.bf16.mxu0 %v2462
  %3734 = vmatpush1.bf16.msra.mxu0 %v2461
  %3735 = vmatprep.subr.bf16.mxu0 %v2458
  %3736 = vmatpush1.bf16.msra.mxu0 %v2457
  %3737 = vmatprep.subr.bf16.mxu0 %v2454
  %3738 = vmatpush1.bf16.msra.mxu0 %v2453
  %3739 = vmatprep.subr.bf16.mxu0 %v2450
  %3740 = vmatpush1.bf16.msra.mxu0 %v2449
  %3741 = vmatprep.subr.bf16.mxu0 %v2446
  %3742 = vmatpush1.bf16.msra.mxu0 %v2445
  %3743 = vmatprep.subr.bf16.mxu0 %v2506
  %3744 = vmatpush2.bf16.msra.mxu0 %v2505
  %3745 = vmatprep.subr.bf16.mxu0 %v2502
  %3746 = vmatpush2.bf16.msra.mxu0 %v2501
  %3747 = vmatprep.subr.bf16.mxu0 %v2498
  %3748 = vmatpush2.bf16.msra.mxu0 %v2497
  %3749 = vmatprep.subr.bf16.mxu0 %v2494
  %3750 = vmatpush2.bf16.msra.mxu0 %v2493
  %3751 = vmatprep.subr.bf16.mxu0 %v2490
  %3752 = vmatpush2.bf16.msra.mxu0 %v2489
  %3753 = vmatprep.subr.bf16.mxu0 %v2486
  %3754 = vmatpush2.bf16.msra.mxu0 %v2485
  %3755 = vmatprep.subr.bf16.mxu0 %v2482
  %3756 = vmatpush2.bf16.msra.mxu0 %v2481
  %3757 = vmatprep.subr.bf16.mxu0 %v2478
  %3758 = vmatpush2.bf16.msra.mxu0 %v2477
  %3759 = vmatprep.mubr.bf16.mxu0 %v628
  %3760 = vmatmul.mubr.bf16.gmra.mxu0 %v627
  %v3761 = vpop.f32.mrf.mxu0
  %v3762 = vadd.f32 %v3719, %v3761
  %v3763 = vpop.f32.mrf.mxu0
  %v3764 = vadd.f32 %v3721, %v3763
  %v3765 = vpop.f32.mrf.mxu0
  %v3766 = vadd.f32 %v3723, %v3765
  %v3767 = vpop.f32.mrf.mxu0
  %v3768 = vadd.f32 %v3725, %v3767
  %3769 = vdwg.mxu0
  %3770 = vmatprep.subr.bf16.mxu0 %v2538
  %3771 = vmatpush1.bf16.msra.mxu0 %v2537
  %3772 = vmatprep.subr.bf16.mxu0 %v2534
  %3773 = vmatpush1.bf16.msra.mxu0 %v2533
  %3774 = vmatprep.subr.bf16.mxu0 %v2530
  %3775 = vmatpush1.bf16.msra.mxu0 %v2529
  %3776 = vmatprep.subr.bf16.mxu0 %v2526
  %3777 = vmatpush1.bf16.msra.mxu0 %v2525
  %3778 = vmatprep.subr.bf16.mxu0 %v2522
  %3779 = vmatpush1.bf16.msra.mxu0 %v2521
  %3780 = vmatprep.subr.bf16.mxu0 %v2518
  %3781 = vmatpush1.bf16.msra.mxu0 %v2517
  %3782 = vmatprep.subr.bf16.mxu0 %v2514
  %3783 = vmatpush1.bf16.msra.mxu0 %v2513
  %3784 = vmatprep.subr.bf16.mxu0 %v2510
  %3785 = vmatpush1.bf16.msra.mxu0 %v2509
  %3786 = vmatprep.subr.bf16.mxu0 %v2570
  %3787 = vmatpush2.bf16.msra.mxu0 %v2569
  %3788 = vmatprep.subr.bf16.mxu0 %v2566
  %3789 = vmatpush2.bf16.msra.mxu0 %v2565
  %3790 = vmatprep.subr.bf16.mxu0 %v2562
  %3791 = vmatpush2.bf16.msra.mxu0 %v2561
  %3792 = vmatprep.subr.bf16.mxu0 %v2558
  %3793 = vmatpush2.bf16.msra.mxu0 %v2557
  %3794 = vmatprep.subr.bf16.mxu0 %v2554
  %3795 = vmatpush2.bf16.msra.mxu0 %v2553
  %3796 = vmatprep.subr.bf16.mxu0 %v2550
  %3797 = vmatpush2.bf16.msra.mxu0 %v2549
  %3798 = vmatprep.subr.bf16.mxu0 %v2546
  %3799 = vmatpush2.bf16.msra.mxu0 %v2545
  %3800 = vmatprep.subr.bf16.mxu0 %v2542
  %3801 = vmatpush2.bf16.msra.mxu0 %v2541
  %3802 = vmatprep.mubr.bf16.mxu0 %v630
  %3803 = vmatmul.mubr.bf16.gmra.mxu0 %v629
  %v3804 = vpop.f32.mrf.mxu0
  %v3805 = vadd.f32 %v3762, %v3804
  %v3806 = vpop.f32.mrf.mxu0
  %v3807 = vadd.f32 %v3764, %v3806
  %v3808 = vpop.f32.mrf.mxu0
  %v3809 = vadd.f32 %v3766, %v3808
  %v3810 = vpop.f32.mrf.mxu0
  %v3811 = vadd.f32 %v3768, %v3810
  %3812 = vdwg.mxu0
  %3813 = vmatprep.subr.bf16.mxu0 %v2602
  %3814 = vmatpush1.bf16.msra.mxu0 %v2601
  %3815 = vmatprep.subr.bf16.mxu0 %v2598
  %3816 = vmatpush1.bf16.msra.mxu0 %v2597
  %3817 = vmatprep.subr.bf16.mxu0 %v2594
  %3818 = vmatpush1.bf16.msra.mxu0 %v2593
  %3819 = vmatprep.subr.bf16.mxu0 %v2590
  %3820 = vmatpush1.bf16.msra.mxu0 %v2589
  %3821 = vmatprep.subr.bf16.mxu0 %v2586
  %3822 = vmatpush1.bf16.msra.mxu0 %v2585
  %3823 = vmatprep.subr.bf16.mxu0 %v2582
  %3824 = vmatpush1.bf16.msra.mxu0 %v2581
  %3825 = vmatprep.subr.bf16.mxu0 %v2578
  %3826 = vmatpush1.bf16.msra.mxu0 %v2577
  %3827 = vmatprep.subr.bf16.mxu0 %v2574
  %3828 = vmatpush1.bf16.msra.mxu0 %v2573
  %3829 = vmatprep.subr.bf16.mxu0 %v2634
  %3830 = vmatpush2.bf16.msra.mxu0 %v2633
  %3831 = vmatprep.subr.bf16.mxu0 %v2630
  %3832 = vmatpush2.bf16.msra.mxu0 %v2629
  %3833 = vmatprep.subr.bf16.mxu0 %v2626
  %3834 = vmatpush2.bf16.msra.mxu0 %v2625
  %3835 = vmatprep.subr.bf16.mxu0 %v2622
  %3836 = vmatpush2.bf16.msra.mxu0 %v2621
  %3837 = vmatprep.subr.bf16.mxu0 %v2618
  %3838 = vmatpush2.bf16.msra.mxu0 %v2617
  %3839 = vmatprep.subr.bf16.mxu0 %v2614
  %3840 = vmatpush2.bf16.msra.mxu0 %v2613
  %3841 = vmatprep.subr.bf16.mxu0 %v2610
  %3842 = vmatpush2.bf16.msra.mxu0 %v2609
  %3843 = vmatprep.subr.bf16.mxu0 %v2606
  %3844 = vmatpush2.bf16.msra.mxu0 %v2605
  %3845 = vmatprep.mubr.bf16.mxu0 %v632
  %3846 = vmatmul.mubr.bf16.gmra.mxu0 %v631
  %v3847 = vpop.f32.mrf.mxu0
  %v3848 = vadd.f32 %v3805, %v3847
  %v3849 = vpop.f32.mrf.mxu0
  %v3850 = vadd.f32 %v3807, %v3849
  %v3851 = vpop.f32.mrf.mxu0
  %v3852 = vadd.f32 %v3809, %v3851
  %v3853 = vpop.f32.mrf.mxu0
  %v3854 = vadd.f32 %v3811, %v3853
  %3855 = vdwg.mxu0
  %3856 = vmatprep.subr.bf16.mxu0 %v2666
  %3857 = vmatpush1.bf16.msra.mxu0 %v2665
  %3858 = vmatprep.subr.bf16.mxu0 %v2662
  %3859 = vmatpush1.bf16.msra.mxu0 %v2661
  %3860 = vmatprep.subr.bf16.mxu0 %v2658
  %3861 = vmatpush1.bf16.msra.mxu0 %v2657
  %3862 = vmatprep.subr.bf16.mxu0 %v2654
  %3863 = vmatpush1.bf16.msra.mxu0 %v2653
  %3864 = vmatprep.subr.bf16.mxu0 %v2650
  %3865 = vmatpush1.bf16.msra.mxu0 %v2649
  %3866 = vmatprep.subr.bf16.mxu0 %v2646
  %3867 = vmatpush1.bf16.msra.mxu0 %v2645
  %3868 = vmatprep.subr.bf16.mxu0 %v2642
  %3869 = vmatpush1.bf16.msra.mxu0 %v2641
  %3870 = vmatprep.subr.bf16.mxu0 %v2638
  %3871 = vmatpush1.bf16.msra.mxu0 %v2637
  %3872 = vmatprep.subr.bf16.mxu0 %v2698
  %3873 = vmatpush2.bf16.msra.mxu0 %v2697
  %3874 = vmatprep.subr.bf16.mxu0 %v2694
  %3875 = vmatpush2.bf16.msra.mxu0 %v2693
  %3876 = vmatprep.subr.bf16.mxu0 %v2690
  %3877 = vmatpush2.bf16.msra.mxu0 %v2689
  %3878 = vmatprep.subr.bf16.mxu0 %v2686
  %3879 = vmatpush2.bf16.msra.mxu0 %v2685
  %3880 = vmatprep.subr.bf16.mxu0 %v2682
  %3881 = vmatpush2.bf16.msra.mxu0 %v2681
  %3882 = vmatprep.subr.bf16.mxu0 %v2678
  %3883 = vmatpush2.bf16.msra.mxu0 %v2677
  %3884 = vmatprep.subr.bf16.mxu0 %v2674
  %3885 = vmatpush2.bf16.msra.mxu0 %v2673
  %3886 = vmatprep.subr.bf16.mxu0 %v2670
  %3887 = vmatpush2.bf16.msra.mxu0 %v2669
  %3888 = vmatprep.mubr.bf16.mxu0 %v634
  %3889 = vmatmul.mubr.bf16.gmra.mxu0 %v633
  %v3890 = vpop.f32.mrf.mxu0
  %v3891 = vadd.f32 %v3848, %v3890
  %v3892 = vpop.f32.mrf.mxu0
  %v3893 = vadd.f32 %v3850, %v3892
  %v3894 = vpop.f32.mrf.mxu0
  %v3895 = vadd.f32 %v3852, %v3894
  %v3896 = vpop.f32.mrf.mxu0
  %v3897 = vadd.f32 %v3854, %v3896
  %3898 = vdwg.mxu0
  %v3899 = vmax.f32 %v3547, 0.0
  %v3900 = vmax.f32 %v3549, 0.0
  %v3901 = vmax.f32 %v3891, 0.0
  %v3902 = vmax.f32 %v3893, 0.0
  %v3903 = vmax.f32 %v3551, 0.0
  %v3904 = vmax.f32 %v3553, 0.0
  %v3905 = vmax.f32 %v3895, 0.0
  %v3906 = vmax.f32 %v3897, 0.0
  %v3907 = vpack.c.bf16 %v3903, %v3899
  %v3908 = vpack.c.bf16 %v3904, %v3900
  %v3909 = vpack.c.bf16 %v3905, %v3901
  %v3910 = vpack.c.bf16 %v3906, %v3902
  %v3911 = vld [vmem:[%s3] sm:$0xf]
  %v3912 = vld [vmem:[%s3 + $0x4] sm:$0xf]
  %v3913 = vld [vmem:[%s3 + $0x8] sm:$0xf]
  %v3914 = vld [vmem:[%s3 + $0xc] sm:$0xf]
  %v3915 = vld [vmem:[%s3 + $0x10] sm:$0xf]
  %v3916 = vld [vmem:[%s3 + $0x14] sm:$0xf]
  %v3917 = vld [vmem:[%s3 + $0x18] sm:$0xf]
  %v3918 = vld [vmem:[%s3 + $0x1c] sm:$0xf]
  %v3919 = vld [vmem:[%s3 + $0x20] sm:$0xf]
  %v3920 = vld [vmem:[%s3 + $0x24] sm:$0xf]
  %v3921 = vld [vmem:[%s3 + $0x28] sm:$0xf]
  %v3922 = vld [vmem:[%s3 + $0x2c] sm:$0xf]
  %v3923 = vld [vmem:[%s3 + $0x30] sm:$0xf]
  %v3924 = vld [vmem:[%s3 + $0x34] sm:$0xf]
  %v3925 = vld [vmem:[%s3 + $0x38] sm:$0xf]
  %v3926 = vld [vmem:[%s3 + $0x3c] sm:$0xf]
  %v3927 = vld [vmem:[%s3 + $0x40] sm:$0xf]
  %v3928 = vld [vmem:[%s3 + $0x44] sm:$0xf]
  %v3929 = vld [vmem:[%s3 + $0x48] sm:$0xf]
  %v3930 = vld [vmem:[%s3 + $0x4c] sm:$0xf]
  %v3931 = vld [vmem:[%s3 + $0x50] sm:$0xf]
  %v3932 = vld [vmem:[%s3 + $0x54] sm:$0xf]
  %v3933 = vld [vmem:[%s3 + $0x58] sm:$0xf]
  %v3934 = vld [vmem:[%s3 + $0x5c] sm:$0xf]
  %v3935 = vld [vmem:[%s3 + $0x60] sm:$0xf]
  %v3936 = vld [vmem:[%s3 + $0x64] sm:$0xf]
  %v3937 = vld [vmem:[%s3 + $0x68] sm:$0xf]
  %v3938 = vld [vmem:[%s3 + $0x6c] sm:$0xf]
  %v3939 = vld [vmem:[%s3 + $0x70] sm:$0xf]
  %v3940 = vld [vmem:[%s3 + $0x74] sm:$0xf]
  %v3941 = vld [vmem:[%s3 + $0x78] sm:$0xf]
  %v3942 = vld [vmem:[%s3 + $0x7c] sm:$0xf]
  %v3943 = vld [vmem:[%s3 + $0x80] sm:$0xf]
  %v3944 = vld [vmem:[%s3 + $0x84] sm:$0xf]
  %v3945 = vld [vmem:[%s3 + $0x88] sm:$0xf]
  %v3946 = vld [vmem:[%s3 + $0x8c] sm:$0xf]
  %v3947 = vld [vmem:[%s3 + $0x90] sm:$0xf]
  %v3948 = vld [vmem:[%s3 + $0x94] sm:$0xf]
  %v3949 = vld [vmem:[%s3 + $0x98] sm:$0xf]
  %v3950 = vld [vmem:[%s3 + $0x9c] sm:$0xf]
  %v3951 = vld [vmem:[%s3 + $0xa0] sm:$0xf]
  %v3952 = vld [vmem:[%s3 + $0xa4] sm:$0xf]
  %v3953 = vld [vmem:[%s3 + $0xa8] sm:$0xf]
  %v3954 = vld [vmem:[%s3 + $0xac] sm:$0xf]
  %v3955 = vld [vmem:[%s3 + $0xb0] sm:$0xf]
  %v3956 = vld [vmem:[%s3 + $0xb4] sm:$0xf]
  %v3957 = vld [vmem:[%s3 + $0xb8] sm:$0xf]
  %v3958 = vld [vmem:[%s3 + $0xbc] sm:$0xf]
  %v3959 = vld [vmem:[%s3 + $0xc0] sm:$0xf]
  %v3960 = vld [vmem:[%s3 + $0xc4] sm:$0xf]
  %v3961 = vld [vmem:[%s3 + $0xc8] sm:$0xf]
  %v3962 = vld [vmem:[%s3 + $0xcc] sm:$0xf]
  %v3963 = vld [vmem:[%s3 + $0xd0] sm:$0xf]
  %v3964 = vld [vmem:[%s3 + $0xd4] sm:$0xf]
  %v3965 = vld [vmem:[%s3 + $0xd8] sm:$0xf]
  %v3966 = vld [vmem:[%s3 + $0xdc] sm:$0xf]
  %v3967 = vld [vmem:[%s3 + $0xe0] sm:$0xf]
  %v3968 = vld [vmem:[%s3 + $0xe4] sm:$0xf]
  %v3969 = vld [vmem:[%s3 + $0xe8] sm:$0xf]
  %v3970 = vld [vmem:[%s3 + $0xec] sm:$0xf]
  %v3971 = vld [vmem:[%s3 + $0xf0] sm:$0xf]
  %v3972 = vld [vmem:[%s3 + $0xf4] sm:$0xf]
  %v3973 = vld [vmem:[%s3 + $0xf8] sm:$0xf]
  %v3974 = vld [vmem:[%s3 + $0xfc] sm:$0xf]
  %v3975 = vld [vmem:[%s4] sm:$0x1]
  %v3977 = vlaneseq
  %v3978 = vshrl.u32 %v3977, 7
  %v3979 = vsub.s32 0, %v3978
  %v3980 = vrot.slane %v3975, %v3979
  %v4046 = vunpack.c.l.b16 %v3911
  %v4047 = vunpack.c.l.b16 %v3912
  %v4048 = vunpack.c.l.b16 %v3913
  %v4049 = vunpack.c.l.b16 %v3914
  %v4050 = vunpack.c.l.b16 %v3915
  %v4051 = vunpack.c.l.b16 %v3916
  %v4052 = vunpack.c.l.b16 %v3917
  %v4053 = vunpack.c.l.b16 %v3918
  %v4054 = vunpack.c.l.b16 %v3919
  %v4055 = vunpack.c.l.b16 %v3920
  %v4056 = vunpack.c.l.b16 %v3921
  %v4057 = vunpack.c.l.b16 %v3922
  %v4058 = vunpack.c.l.b16 %v3923
  %v4059 = vunpack.c.l.b16 %v3924
  %v4060 = vunpack.c.l.b16 %v3925
  %v4061 = vunpack.c.l.b16 %v3926
  %v4062 = vunpack.c.l.b16 %v3927
  %v4063 = vunpack.c.l.b16 %v3928
  %v4064 = vunpack.c.l.b16 %v3929
  %v4065 = vunpack.c.l.b16 %v3930
  %v4066 = vunpack.c.l.b16 %v3931
  %v4067 = vunpack.c.l.b16 %v3932
  %v4068 = vunpack.c.l.b16 %v3933
  %v4069 = vunpack.c.l.b16 %v3934
  %v4070 = vunpack.c.l.b16 %v3935
  %v4071 = vunpack.c.l.b16 %v3936
  %v4072 = vunpack.c.l.b16 %v3937
  %v4073 = vunpack.c.l.b16 %v3938
  %v4074 = vunpack.c.l.b16 %v3939
  %v4075 = vunpack.c.l.b16 %v3940
  %v4076 = vunpack.c.l.b16 %v3941
  %v4077 = vunpack.c.l.b16 %v3942
  %v4078 = vunpack.c.l.b16 %v3943
  %v4079 = vunpack.c.l.b16 %v3944
  %v4080 = vunpack.c.l.b16 %v3945
  %v4081 = vunpack.c.l.b16 %v3946
  %v4082 = vunpack.c.l.b16 %v3947
  %v4083 = vunpack.c.l.b16 %v3948
  %v4084 = vunpack.c.l.b16 %v3949
  %v4085 = vunpack.c.l.b16 %v3950
  %v4086 = vunpack.c.l.b16 %v3951
  %v4087 = vunpack.c.l.b16 %v3952
  %v4088 = vunpack.c.l.b16 %v3953
  %v4089 = vunpack.c.l.b16 %v3954
  %v4090 = vunpack.c.l.b16 %v3955
  %v4091 = vunpack.c.l.b16 %v3956
  %v4092 = vunpack.c.l.b16 %v3957
  %v4093 = vunpack.c.l.b16 %v3958
  %v4094 = vunpack.c.l.b16 %v3959
  %v4095 = vunpack.c.l.b16 %v3960
  %v4096 = vunpack.c.l.b16 %v3961
  %v4097 = vunpack.c.l.b16 %v3962
  %v4098 = vunpack.c.l.b16 %v3963
  %v4099 = vunpack.c.l.b16 %v3964
  %v4100 = vunpack.c.l.b16 %v3965
  %v4101 = vunpack.c.l.b16 %v3966
  %v4102 = vunpack.c.l.b16 %v3967
  %v4103 = vunpack.c.l.b16 %v3968
  %v4104 = vunpack.c.l.b16 %v3969
  %v4105 = vunpack.c.l.b16 %v3970
  %v4106 = vunpack.c.l.b16 %v3971
  %v4107 = vunpack.c.l.b16 %v3972
  %v4108 = vunpack.c.l.b16 %v3973
  %v4109 = vunpack.c.l.b16 %v3974
  %v4110 = vpack.c.b16 %v4047, %v4046
  %v4111 = vpack.c.b16 %v4049, %v4048
  %v4112 = vpack.c.b16 %v4051, %v4050
  %v4113 = vpack.c.b16 %v4053, %v4052
  %v4114 = vpack.c.b16 %v4055, %v4054
  %v4115 = vpack.c.b16 %v4057, %v4056
  %v4116 = vpack.c.b16 %v4059, %v4058
  %v4117 = vpack.c.b16 %v4061, %v4060
  %v4118 = vpack.c.b16 %v4063, %v4062
  %v4119 = vpack.c.b16 %v4065, %v4064
  %v4120 = vpack.c.b16 %v4067, %v4066
  %v4121 = vpack.c.b16 %v4069, %v4068
  %v4122 = vpack.c.b16 %v4071, %v4070
  %v4123 = vpack.c.b16 %v4073, %v4072
  %v4124 = vpack.c.b16 %v4075, %v4074
  %v4125 = vpack.c.b16 %v4077, %v4076
  %v4126 = vpack.c.b16 %v4079, %v4078
  %v4127 = vpack.c.b16 %v4081, %v4080
  %v4128 = vpack.c.b16 %v4083, %v4082
  %v4129 = vpack.c.b16 %v4085, %v4084
  %v4130 = vpack.c.b16 %v4087, %v4086
  %v4131 = vpack.c.b16 %v4089, %v4088
  %v4132 = vpack.c.b16 %v4091, %v4090
  %v4133 = vpack.c.b16 %v4093, %v4092
  %v4134 = vpack.c.b16 %v4095, %v4094
  %v4135 = vpack.c.b16 %v4097, %v4096
  %v4136 = vpack.c.b16 %v4099, %v4098
  %v4137 = vpack.c.b16 %v4101, %v4100
  %v4138 = vpack.c.b16 %v4103, %v4102
  %v4139 = vpack.c.b16 %v4105, %v4104
  %v4140 = vpack.c.b16 %v4107, %v4106
  %v4141 = vpack.c.b16 %v4109, %v4108
  %4174 = vmatprep.subr.bf16.mxu0 0
  %4175 = vmatpush1.bf16.msra.mxu0 %v4117
  %4176 = vmatprep.subr.bf16.mxu0 0
  %4177 = vmatpush1.bf16.msra.mxu0 %v4116
  %4178 = vmatprep.subr.bf16.mxu0 0
  %4179 = vmatpush1.bf16.msra.mxu0 %v4115
  %4180 = vmatprep.subr.bf16.mxu0 0
  %4181 = vmatpush1.bf16.msra.mxu0 %v4114
  %4182 = vmatprep.subr.bf16.mxu0 0
  %4183 = vmatpush1.bf16.msra.mxu0 %v4113
  %4184 = vmatprep.subr.bf16.mxu0 0
  %4185 = vmatpush1.bf16.msra.mxu0 %v4112
  %4186 = vmatprep.subr.bf16.mxu0 0
  %4187 = vmatpush1.bf16.msra.mxu0 %v4111
  %4188 = vmatprep.subr.bf16.mxu0 0
  %4189 = vmatpush1.bf16.msra.mxu0 %v4110
  %4190 = vmatprep.subr.bf16.mxu0 0
  %4191 = vmatpush2.bf16.msra.mxu0 %v4125
  %4192 = vmatprep.subr.bf16.mxu0 0
  %4193 = vmatpush2.bf16.msra.mxu0 %v4124
  %4194 = vmatprep.subr.bf16.mxu0 0
  %4195 = vmatpush2.bf16.msra.mxu0 %v4123
  %4196 = vmatprep.subr.bf16.mxu0 0
  %4197 = vmatpush2.bf16.msra.mxu0 %v4122
  %4198 = vmatprep.subr.bf16.mxu0 0
  %4199 = vmatpush2.bf16.msra.mxu0 %v4121
  %4200 = vmatprep.subr.bf16.mxu0 0
  %4201 = vmatpush2.bf16.msra.mxu0 %v4120
  %4202 = vmatprep.subr.bf16.mxu0 0
  %4203 = vmatpush2.bf16.msra.mxu0 %v4119
  %4204 = vmatprep.subr.bf16.mxu0 0
  %4205 = vmatpush2.bf16.msra.mxu0 %v4118
  %4206 = vmatprep.mubr.bf16.mxu0 %v3908
  %4207 = vmatmul.mubr.bf16.gmra.mxu0 %v3907
  %v4208 = vpop.f32.mrf.mxu0
  %v4209 = vadd.f32 %v3980, %v4208
  %v4210 = vpop.f32.mrf.mxu0
  %v4211 = vpop.f32.mrf.mxu0
  %v4212 = vadd.f32 %v3980, %v4211
  %v4213 = vpop.f32.mrf.mxu0
  %4214 = vdwg.mxu0
  %4215 = vmatprep.subr.bf16.mxu0 0
  %4216 = vmatpush1.bf16.msra.mxu0 %v4133
  %4217 = vmatprep.subr.bf16.mxu0 0
  %4218 = vmatpush1.bf16.msra.mxu0 %v4132
  %4219 = vmatprep.subr.bf16.mxu0 0
  %4220 = vmatpush1.bf16.msra.mxu0 %v4131
  %4221 = vmatprep.subr.bf16.mxu0 0
  %4222 = vmatpush1.bf16.msra.mxu0 %v4130
  %4223 = vmatprep.subr.bf16.mxu0 0
  %4224 = vmatpush1.bf16.msra.mxu0 %v4129
  %4225 = vmatprep.subr.bf16.mxu0 0
  %4226 = vmatpush1.bf16.msra.mxu0 %v4128
  %4227 = vmatprep.subr.bf16.mxu0 0
  %4228 = vmatpush1.bf16.msra.mxu0 %v4127
  %4229 = vmatprep.subr.bf16.mxu0 0
  %4230 = vmatpush1.bf16.msra.mxu0 %v4126
  %4231 = vmatprep.subr.bf16.mxu0 0
  %4232 = vmatpush2.bf16.msra.mxu0 %v4141
  %4233 = vmatprep.subr.bf16.mxu0 0
  %4234 = vmatpush2.bf16.msra.mxu0 %v4140
  %4235 = vmatprep.subr.bf16.mxu0 0
  %4236 = vmatpush2.bf16.msra.mxu0 %v4139
  %4237 = vmatprep.subr.bf16.mxu0 0
  %4238 = vmatpush2.bf16.msra.mxu0 %v4138
  %4239 = vmatprep.subr.bf16.mxu0 0
  %4240 = vmatpush2.bf16.msra.mxu0 %v4137
  %4241 = vmatprep.subr.bf16.mxu0 0
  %4242 = vmatpush2.bf16.msra.mxu0 %v4136
  %4243 = vmatprep.subr.bf16.mxu0 0
  %4244 = vmatpush2.bf16.msra.mxu0 %v4135
  %4245 = vmatprep.subr.bf16.mxu0 0
  %4246 = vmatpush2.bf16.msra.mxu0 %v4134
  %4247 = vmatprep.mubr.bf16.mxu0 %v3910
  %4248 = vmatmul.mubr.bf16.gmra.mxu0 %v3909
  %v4249 = vpop.f32.mrf.mxu0
  %v4250 = vadd.f32 %v4209, %v4249
  %v4251 = vpop.f32.mrf.mxu0
  %v4252 = vpop.f32.mrf.mxu0
  %v4253 = vadd.f32 %v4212, %v4252
  %v4254 = vpop.f32.mrf.mxu0
  %4255 = vdwg.mxu0
  %4256 = vmax.xlane.f32.xlu0 %v4250
  %v4257 = vpop.xlane.xlu0 %4256
  %4258 = vmax.xlane.f32.xlu0 %v4253
  %v4259 = vpop.xlane.xlu0 %4258
  %v4260 = vsub.f32 %v4250, %v4257
  %v4261 = vsub.f32 %v4253, %v4259
  %v4262 = vmul.f32 %v4260, 1.442695
  %v4263 = vpow.pop %v4262
  %v4264 = vmul.f32 %v4261, 1.442695
  %v4265 = vpow.pop %v4264
  %4266 = vadd.xlane.f32.xlu0 %v4263
  %v4267 = vpop.xlane.xlu0 %4266
  %4268 = vadd.xlane.f32.xlu0 %v4265
  %v4269 = vpop.xlane.xlu0 %4268
  %v4270 = vlog2.pop %v4267
  %v4271 = vmul.f32 %v4270, 0.6931472
  %v4272 = vlog2.pop %v4269
  %v4273 = vmul.f32 %v4272, 0.6931472
  %v4274 = vsub.f32 %v4260, %v4271
  %v4275 = vsub.f32 %v4261, %v4273
  %4276 = vst [vmem:[%s5] sm:$0xff] %v4274
  %4277 = vst [vmem:[%s5 + $0x8] sm:$0xff] %v4275
  // Predicated region
  $region22: #{net_forward.5} parent=0 // pred_check
    _
  $region23: #{net_forward.5} parent=0 // pred_check_branch
    %4279 = sbr.rel (0) target = $region25
  $region24: #{net_forward.5} parent=0 // pred_region
    _
  $region25: #{net_forward.5} parent=0 // pred_fallthru
    _
  // Predicated region
  $region26: #{net_forward.5} parent=0 // pred_check
    _
  $region27: #{net_forward.5} parent=0 // pred_check_branch
    %4281 = sbr.rel (0) target = $region29
  $region28: #{net_forward.5} parent=0 // pred_region
    _
  $region29: #{net_forward.5} parent=0 // pred_fallthru
    _

</llo_original>
